<compile_context>
chip_gen: v7x
topology: tpu7x:2x2x1
jax: 0.10.0
libtpu: 0.0.40
codegen_flags: <defaults>
</compile_context>

<pallas_src>
import functools

import numpy as np
import jax
import jax.numpy as jnp
from jax.experimental import pallas as pl
from jax.experimental.pallas import tpu as pltpu

_NEG_BIAS = -1e30   # finite mask sentinel; h + (-1e30) stays finite (no -inf/NaN)


def _round_up(v, m):
    return -(-v // m) * m


def _edge_channels(c_x):
    """Edge-feature channel layout: [x_j | pos_j - pos_m | mask-bias | zero pad]."""
    mask_ch = c_x + 3
    c_in_pad = _round_up(c_x + 4, 16)   # multiple of 16 -> clean bf16 sublane packing
    return c_in_pad, mask_ch


# ----------------------------------------------------------------------------- kernel
def _pointconv_max_kernel(e_ref, w1_ref, b1_ref, w2_ref, b2_ref, w3_ref, b3_ref,
                          out_ref, *, mask_ch):
    """One center tile of PointNetConv with max aggregation.

    e_ref: [TILE_M, K, C_in] bf16 edge block (x_j | rel_pos | mask-bias | pad).
    The K neighbor slots are folded into the MXU M dimension; the per-slot validity
    bias (0 valid / -1e30 invalid) is applied after the MLP and max-reduced away.
    """
    tm, k, c_in = e_ref.shape
    e = e_ref[...]                                                  # [TM, K, C_in] bf16
    bias = e[:, :, mask_ch:mask_ch + 1].astype(jnp.float32)         # [TM, K, 1]

    rows = e.reshape(tm * k, c_in)                                  # fold K into M
    h = jnp.dot(rows, w1_ref[...], preferred_element_type=jnp.float32) + b1_ref[...]
    h = jnp.maximum(h, 0.0)
    h = jnp.dot(h.astype(jnp.bfloat16), w2_ref[...],
                preferred_element_type=jnp.float32) + b2_ref[...]
    h = jnp.maximum(h, 0.0)
    h = jnp.dot(h.astype(jnp.bfloat16), w3_ref[...],
                preferred_element_type=jnp.float32) + b3_ref[...]
    h = jnp.maximum(h, 0.0)                                         # [TM*K, C_out] f32

    h = h.reshape(tm, k, -1) + bias                                 # mask invalid slots
    out_ref[...] = jnp.max(h, axis=1)                               # max over neighbors


def _branch_pallas(edges, params, tile_m, mask_ch):
    """edges: [M_pad, K, C_in_pad] bf16 (center-major).  Returns [M_pad, C_out] f32."""
    w1, b1, w2, b2, w3, b3 = params
    m_pad, k_pad, c_in_pad = edges.shape
    h1, h2, c_out = w1.shape[1], w2.shape[1], w3.shape[1]
    n_tiles = m_pad // tile_m

    edge_spec = pl.BlockSpec((tile_m, k_pad, c_in_pad), lambda i: (i, 0, 0))
    const2 = lambda i: (0, 0)   # weights/biases: DMA'd once, VMEM-resident

    rows = m_pad * k_pad
    flops = 2 * rows * (c_in_pad * h1 + h1 * h2 + h2 * c_out)
    weight_bytes = sum(int(np.prod(p.shape)) * p.dtype.itemsize for p in params)
    bytes_accessed = int(edges.size) * 2 + weight_bytes + m_pad * c_out * 4

    # VMEM budget: double-buffered edge/output blocks + resident weights + live f32
    # intermediates of the fused MLP, with headroom (fits v7x's 64 MiB per-TC VMEM).
    edge_block = tile_m * k_pad * c_in_pad * 2
    out_block = tile_m * c_out * 4
    interm = tile_m * k_pad * (c_in_pad + h1 + h2 + c_out) * 4
    vmem_limit = int(min(max(2 * edge_block + 2 * out_block + weight_bytes
                             + interm + (2 << 20), 16 << 20), 96 << 20))

    kernel = functools.partial(_pointconv_max_kernel, mask_ch=mask_ch)
    return pl.pallas_call(
        kernel,
        out_shape=jax.ShapeDtypeStruct((m_pad, c_out), jnp.float32),
        grid_spec=pltpu.PrefetchScalarGridSpec(
            num_scalar_prefetch=0,
            grid=(n_tiles,),
            in_specs=[
                edge_spec,                          # merged edge stream (one DMA/step)
                pl.BlockSpec(w1.shape, const2),
                pl.BlockSpec(b1.shape, const2),
                pl.BlockSpec(w2.shape, const2),
                pl.BlockSpec(b2.shape, const2),
                pl.BlockSpec(w3.shape, const2),
                pl.BlockSpec(b3.shape, const2),
            ],
            out_specs=pl.BlockSpec((tile_m, c_out), lambda i: (i, 0)),
        ),
        compiler_params=pltpu.CompilerParams(
            dimension_semantics=("parallel",),      # shard center tiles across TCs (v7x)
            vmem_limit_bytes=vmem_limit,
        ),
        cost_estimate=pl.CostEstimate(flops=flops, transcendentals=0,
                                      bytes_accessed=bytes_accessed),
    )(edges, w1, b1, w2, b2, w3, b3)


def _branch_reference(edges, params, mask_ch):
    """Pure-JAX mirror of the kernel math (same bf16 inputs, f32 accumulate)."""
    w1, b1, w2, b2, w3, b3 = params
    m_pad, k, c_in = edges.shape
    bias = edges[:, :, mask_ch:mask_ch + 1].astype(jnp.float32)
    rows = edges.reshape(m_pad * k, c_in)
    h = jnp.dot(rows, w1, preferred_element_type=jnp.float32) + b1
    h = jnp.maximum(h, 0.0)
    h = jnp.dot(h.astype(jnp.bfloat16), w2, preferred_element_type=jnp.float32) + b2
    h = jnp.maximum(h, 0.0)
    h = jnp.dot(h.astype(jnp.bfloat16), w3, preferred_element_type=jnp.float32) + b3
    h = jnp.maximum(h, 0.0)
    h = h.reshape(m_pad, k, -1) + bias
    return jnp.max(h, axis=1)


# ------------------------------------------------------- host-side graph construction
def _fps(pos, batch, ratio):
    """Deterministic farthest-point sampling per batch element (host side)."""
    sel_all = []
    for b in np.unique(batch):
        ids = np.nonzero(batch == b)[0]
        p = pos[ids]
        n_s = max(1, int(np.ceil(ratio * len(ids))))
        sel = np.empty(n_s, np.int64)
        sel[0] = 0
        dist = np.full(len(ids), np.inf)
        last = 0
        for i in range(1, n_s):
            dist = np.minimum(dist, ((p - p[last]) ** 2).sum(-1))
            last = int(np.argmax(dist))
            sel[i] = last
        sel_all.append(ids[sel])
    return np.concatenate(sel_all)


def _radius_neighbors(pos, batch, idx, r, max_k):
    """Dense ball query: K nearest same-batch points within radius r (center incl.)."""
    c_pos, c_batch = pos[idx], batch[idx]
    d2 = ((c_pos[:, None, :] - pos[None, :, :]) ** 2).sum(-1)            # [M, N]
    in_ball = (c_batch[:, None] == batch[None, :]) & (d2 <= r * r)
    d2 = np.where(in_ball, d2, np.inf)
    order = np.argsort(d2, axis=1, kind="stable")[:, :max_k]             # [M, K]
    valid = np.take_along_axis(in_ball, order, axis=1)
    return order, valid


def _prepare_branch_inputs(x_np, pos_np, batch_np, idx, r, max_k, tile_m):
    """Build one merged, center-major [M_pad, K_pad, C_in_pad] bf16 edge tensor."""
    c_x = x_np.shape[1]
    c_in_pad, mask_ch = _edge_channels(c_x)
    c_pos = pos_np[idx]
    nbr, valid = _radius_neighbors(pos_np, batch_np, idx, r, max_k)
    m, k_raw = nbr.shape
    k_pad = _round_up(k_raw, 8)
    m_pad = _round_up(m, tile_m)

    edges = np.zeros((m_pad, k_pad, c_in_pad), np.float32)
    edges[:m, :k_raw, :c_x] = x_np[nbr]                                  # x_j
    edges[:m, :k_raw, c_x:c_x + 3] = pos_np[nbr] - c_pos[:, None, :]     # pos_j - pos_m
    bias = np.full((m_pad, k_pad), _NEG_BIAS, np.float32)                # padded slots
    bias[:m, :k_raw] = np.where(valid, 0.0, _NEG_BIAS)                   # invalid edges
    edges[:, :, mask_ch] = bias                                          # zero W1 row
    return jnp.asarray(edges, jnp.bfloat16), m


def _pick_tile_m(m, k_pad, tile_m_max):
    """Center tile: ~8K fused MXU rows/step (K*TILE_M), >= 2 tiles for v7x megacore."""
    by_rows = max(8, (8192 // k_pad) // 8 * 8)
    two_tiles = max(8, _round_up(-(-m // 2), 8))
    return max(8, (min(tile_m_max, by_rows, two_tiles) // 8) * 8)


# ----------------------------------------------------------------------------- module
def sa_module_msg(x, pos, batch, *, radius_list, ratio, params_list,
                  max_num_neighbors=64, tile_m=512, use_reference=False):
    """Forward of SAModuleMSG. Returns (new_x_concat, pos[idx], batch[idx])."""
    x_np = np.asarray(x, np.float32)
    pos_np = np.asarray(pos, np.float32)
    batch_np = np.asarray(batch, np.int64)
    c_x = x_np.shape[1]
    _, mask_ch = _edge_channels(c_x)

    idx = _fps(pos_np, batch_np, ratio)            # host side (see TODOs at top)
    m = len(idx)
    k_pad = _round_up(min(max_num_neighbors, len(pos_np)), 8)
    eff_tile = _pick_tile_m(m, k_pad, tile_m)

    outs = []
    for r, params in zip(radius_list, params_list):
        edges, m_real = _prepare_branch_inputs(
            x_np, pos_np, batch_np, idx, r, max_num_neighbors, eff_tile)
        if use_reference:
            out = _branch_reference(edges, params, mask_ch)
        else:
            out = _branch_pallas(edges, params, eff_tile, mask_ch)
        outs.append(out[:m_real])

    new_x = jnp.concatenate(outs, axis=1)          # torch.cat(new_x_list, dim=1)
    return (new_x,
            jnp.asarray(pos_np[idx], jnp.float32),
            jnp.asarray(batch_np[idx].astype(np.int32)))


def _make_mlp_params(key, channels, c_x):
    """MLP([c_in, h1, h2, c_out]); W1 is stacked for [x | rel_pos | mask | pad] rows."""
    c_in, h1, h2, c_out = channels
    assert c_in == c_x + 3
    c_in_pad, _ = _edge_channels(c_x)
    ks = jax.random.split(key, 6)
    lin = lambda k, fi, fo: jax.random.normal(k, (fi, fo), jnp.float32) / np.sqrt(fi)
    # Rows [0:c_x] act on x_j, rows [c_x:c_x+3] on (pos_j - pos_m); the mask-bias and
    # zero-pad channels get all-zero rows so they never affect the MLP output.
    w1 = jnp.zeros((c_in_pad, h1), jnp.float32).at[:c_in].set(lin(ks[0], c_in, h1))
    b1 = 0.1 * jax.random.normal(ks[1], (1, h1), jnp.float32)
    w2 = lin(ks[2], h1, h2)
    b2 = 0.1 * jax.random.normal(ks[3], (1, h2), jnp.float32)
    w3 = lin(ks[4], h2, c_out)
    b3 = 0.1 * jax.random.normal(ks[5], (1, c_out), jnp.float32)
    return (w1.astype(jnp.bfloat16), b1, w2.astype(jnp.bfloat16), b2,
            w3.astype(jnp.bfloat16), b3)


if __name__ == "__main__":
    key = jax.random.PRNGKey(0)
    k_x, k_pos, k_p0, k_p1 = jax.random.split(key, 4)

    # Small but representative shapes: 2 point clouds x 32 points, 16 feature channels,
    # 2 radius branches, 3-layer MLPs with lane-dense 128-wide outputs.
    B, N_PER, C_X = 2, 32, 16
    N = B * N_PER
    RADIUS_LIST = [0.5, 1.0]
    RATIO = 0.5
    MAX_NEIGHBORS = 64                       # matches torch radius(..., max_num_neighbors=64)
    MLP_LIST = [[C_X + 3, 32, 32, 128], [C_X + 3, 32, 64, 128]]

    x = jax.random.normal(k_x, (N, C_X), jnp.float32)
    pos = jax.random.normal(k_pos, (N, 3), jnp.float32)
    batch = jnp.repeat(jnp.arange(B, dtype=jnp.int32), N_PER)

    params_list = [_make_mlp_params(k_p0, MLP_LIST[0], C_X),
                   _make_mlp_params(k_p1, MLP_LIST[1], C_X)]

    new_x, pos_c, batch_c = sa_module_msg(
        x, pos, batch, radius_list=RADIUS_LIST, ratio=RATIO,
        params_list=params_list, max_num_neighbors=MAX_NEIGHBORS)
    new_x = jax.block_until_ready(new_x)

    ref_x, ref_pos, ref_batch = sa_module_msg(
        x, pos, batch, radius_list=RADIUS_LIST, ratio=RATIO,
        params_list=params_list, max_num_neighbors=MAX_NEIGHBORS,
        use_reference=True)

    M = B * int(np.ceil(RATIO * N_PER))
    assert new_x.shape == (M, 256), new_x.shape
    assert pos_c.shape == (M, 3) and batch_c.shape == (M,)
    assert bool(jnp.all(jnp.isfinite(new_x))), "non-finite output rows"
    assert jnp.allclose(new_x, ref_x, atol=1e-2, rtol=1e-2), "mismatch vs reference"
    assert jnp.allclose(pos_c, ref_pos) and jnp.array_equal(batch_c, ref_batch)

    print("KERNEL_OK")
</pallas_src>

<mosaic_0001>
module attributes {stable_mosaic.version = 11 : i64} {
  func.func @_pointconv_max_kernel(%arg0: i32, %arg1: memref<16x64x32xbf16, #tpu.memory_space<vmem>>, %arg2: memref<32x32xbf16, #tpu.memory_space<vmem>>, %arg3: memref<1x32xf32, #tpu.memory_space<vmem>>, %arg4: memref<32x32xbf16, #tpu.memory_space<vmem>>, %arg5: memref<1x32xf32, #tpu.memory_space<vmem>>, %arg6: memref<32x128xbf16, #tpu.memory_space<vmem>>, %arg7: memref<1x128xf32, #tpu.memory_space<vmem>>, %arg8: memref<16x128xf32, #tpu.memory_space<vmem>>) attributes {dimension_semantics = [#tpu.dimension_semantics<parallel>], iteration_bounds = array<i64: 2>, scalar_prefetch = 0 : i64, scratch_operands = 0 : i64, tpu.core_type = #tpu.core_type<tc>, window_params = [{transform_indices = @transform_0, window_bounds = array<i64: 16, 64, 32>}, {pipeline_mode = #tpu.pipeline_mode<synchronous>, transform_indices = @transform_1, window_bounds = array<i64: 32, 32>}, {pipeline_mode = #tpu.pipeline_mode<synchronous>, transform_indices = @transform_2, window_bounds = array<i64: 1, 32>}, {pipeline_mode = #tpu.pipeline_mode<synchronous>, transform_indices = @transform_3, window_bounds = array<i64: 32, 32>}, {pipeline_mode = #tpu.pipeline_mode<synchronous>, transform_indices = @transform_4, window_bounds = array<i64: 1, 32>}, {pipeline_mode = #tpu.pipeline_mode<synchronous>, transform_indices = @transform_5, window_bounds = array<i64: 32, 128>}, {pipeline_mode = #tpu.pipeline_mode<synchronous>, transform_indices = @transform_6, window_bounds = array<i64: 1, 128>}, {transform_indices = @transform_7, window_bounds = array<i64: 16, 128>}]} {
    %c0 = arith.constant 0 : index
    %c0_0 = arith.constant 0 : index
    %c0_1 = arith.constant 0 : index
    %0 = vector.load %arg1[%c0, %c0_0, %c0_1] : memref<16x64x32xbf16, #tpu.memory_space<vmem>>, vector<16x64x32xbf16>
    %1 = vector.extract_strided_slice %0 {offsets = [0, 0, 19], sizes = [16, 64, 1], strides = [1, 1, 1]} : vector<16x64x32xbf16> to vector<16x64x1xbf16>
    %2 = arith.extf %1 : vector<16x64x1xbf16> to vector<16x64x1xf32>
    %3 = vector.shape_cast %0 : vector<16x64x32xbf16> to vector<1024x32xbf16>
    %c0_2 = arith.constant 0 : index
    %c0_3 = arith.constant 0 : index
    %4 = vector.load %arg2[%c0_2, %c0_3] : memref<32x32xbf16, #tpu.memory_space<vmem>>, vector<32x32xbf16>
    %cst = arith.constant dense<0.000000e+00> : vector<1024x32xf32>
    %5 = tpu.matmul %3, %4, %cst {dimension_numbers = #tpu.dot_dimension_numbers<[1], [0], [0], [1], [0, 0, 1, 1], [], []>} : vector<1024x32xbf16>, vector<32x32xbf16>, vector<1024x32xf32> -> vector<1024x32xf32>
    %c0_4 = arith.constant 0 : index
    %c0_5 = arith.constant 0 : index
    %6 = vector.load %arg3[%c0_4, %c0_5] : memref<1x32xf32, #tpu.memory_space<vmem>>, vector<1x32xf32>
    %7 = vector.broadcast %6 : vector<1x32xf32> to vector<1024x32xf32>
    %8 = arith.addf %5, %7 : vector<1024x32xf32>
    %cst_6 = arith.constant 0.000000e+00 : f32
    %9 = vector.broadcast %cst_6 : f32 to vector<1024x32xf32>
    %10 = arith.maximumf %8, %9 : vector<1024x32xf32>
    %11 = arith.truncf %10 : vector<1024x32xf32> to vector<1024x32xbf16>
    %c0_7 = arith.constant 0 : index
    %c0_8 = arith.constant 0 : index
    %12 = vector.load %arg4[%c0_7, %c0_8] : memref<32x32xbf16, #tpu.memory_space<vmem>>, vector<32x32xbf16>
    %cst_9 = arith.constant dense<0.000000e+00> : vector<1024x32xf32>
    %13 = tpu.matmul %11, %12, %cst_9 {dimension_numbers = #tpu.dot_dimension_numbers<[1], [0], [0], [1], [0, 0, 1, 1], [], []>} : vector<1024x32xbf16>, vector<32x32xbf16>, vector<1024x32xf32> -> vector<1024x32xf32>
    %c0_10 = arith.constant 0 : index
    %c0_11 = arith.constant 0 : index
    %14 = vector.load %arg5[%c0_10, %c0_11] : memref<1x32xf32, #tpu.memory_space<vmem>>, vector<1x32xf32>
    %15 = vector.broadcast %14 : vector<1x32xf32> to vector<1024x32xf32>
    %16 = arith.addf %13, %15 : vector<1024x32xf32>
    %cst_12 = arith.constant 0.000000e+00 : f32
    %17 = vector.broadcast %cst_12 : f32 to vector<1024x32xf32>
    %18 = arith.maximumf %16, %17 : vector<1024x32xf32>
    %19 = arith.truncf %18 : vector<1024x32xf32> to vector<1024x32xbf16>
    %c0_13 = arith.constant 0 : index
    %c0_14 = arith.constant 0 : index
    %20 = vector.load %arg6[%c0_13, %c0_14] : memref<32x128xbf16, #tpu.memory_space<vmem>>, vector<32x128xbf16>
    %cst_15 = arith.constant dense<0.000000e+00> : vector<1024x128xf32>
    %21 = tpu.matmul %19, %20, %cst_15 {dimension_numbers = #tpu.dot_dimension_numbers<[1], [0], [0], [1], [0, 0, 1, 1], [], []>} : vector<1024x32xbf16>, vector<32x128xbf16>, vector<1024x128xf32> -> vector<1024x128xf32>
    %c0_16 = arith.constant 0 : index
    %c0_17 = arith.constant 0 : index
    %22 = vector.load %arg7[%c0_16, %c0_17] : memref<1x128xf32, #tpu.memory_space<vmem>>, vector<1x128xf32>
    %23 = vector.broadcast %22 : vector<1x128xf32> to vector<1024x128xf32>
    %24 = arith.addf %21, %23 : vector<1024x128xf32>
    %cst_18 = arith.constant 0.000000e+00 : f32
    %25 = vector.broadcast %cst_18 : f32 to vector<1024x128xf32>
    %26 = arith.maximumf %24, %25 : vector<1024x128xf32>
    %27 = vector.shape_cast %26 : vector<1024x128xf32> to vector<16x64x128xf32>
    %28 = vector.broadcast %2 : vector<16x64x1xf32> to vector<16x64x128xf32>
    %29 = arith.addf %27, %28 : vector<16x64x128xf32>
    %cst_19 = arith.constant dense<0xFF800000> : vector<16x128xf32>
    %30 = vector.multi_reduction <maximumf>, %29, %cst_19 [1] : vector<16x64x128xf32> to vector<16x128xf32>
    %c0_20 = arith.constant 0 : index
    %c0_21 = arith.constant 0 : index
    %31 = vector.load %arg8[%c0_20, %c0_21] : memref<16x128xf32, #tpu.memory_space<vmem>>, vector<16x128xf32>
    tpu.vector_store %arg8[%c0_20, %c0_21], %30 {strides = array<i32>} : memref<16x128xf32, #tpu.memory_space<vmem>>, vector<16x128xf32>,
    return
  }
  func.func @transform_0(%arg0: i32) -> (i32, i32, i32) {
    %c0_i32 = arith.constant 0 : i32
    %c0_i32_0 = arith.constant 0 : i32
    %c0_i32_1 = arith.constant 0 : i32
    return %arg0, %c0_i32, %c0_i32_0 : i32, i32, i32
  }
  func.func @transform_1(%arg0: i32) -> (i32, i32) {
    %c0_i32 = arith.constant 0 : i32
    %c0_i32_0 = arith.constant 0 : i32
    %c0_i32_1 = arith.constant 0 : i32
    return %c0_i32, %c0_i32_0 : i32, i32
  }
  func.func @transform_2(%arg0: i32) -> (i32, i32) {
    %c0_i32 = arith.constant 0 : i32
    %c0_i32_0 = arith.constant 0 : i32
    %c0_i32_1 = arith.constant 0 : i32
    return %c0_i32, %c0_i32_0 : i32, i32
  }
  func.func @transform_3(%arg0: i32) -> (i32, i32) {
    %c0_i32 = arith.constant 0 : i32
    %c0_i32_0 = arith.constant 0 : i32
    %c0_i32_1 = arith.constant 0 : i32
    return %c0_i32, %c0_i32_0 : i32, i32
  }
  func.func @transform_4(%arg0: i32) -> (i32, i32) {
    %c0_i32 = arith.constant 0 : i32
    %c0_i32_0 = arith.constant 0 : i32
    %c0_i32_1 = arith.constant 0 : i32
    return %c0_i32, %c0_i32_0 : i32, i32
  }
  func.func @transform_5(%arg0: i32) -> (i32, i32) {
    %c0_i32 = arith.constant 0 : i32
    %c0_i32_0 = arith.constant 0 : i32
    %c0_i32_1 = arith.constant 0 : i32
    return %c0_i32, %c0_i32_0 : i32, i32
  }
  func.func @transform_6(%arg0: i32) -> (i32, i32) {
    %c0_i32 = arith.constant 0 : i32
    %c0_i32_0 = arith.constant 0 : i32
    %c0_i32_1 = arith.constant 0 : i32
    return %c0_i32, %c0_i32_0 : i32, i32
  }
  func.func @transform_7(%arg0: i32) -> (i32, i32) {
    %c0_i32 = arith.constant 0 : i32
    %c0_i32_0 = arith.constant 0 : i32
    return %arg0, %c0_i32 : i32, i32
  }
}

</mosaic_0001>

<llo_original>
// kernel: tpu_custom_call.1
$region0: #{tpu_custom_call.1}
  #allocation0 [shape = 'u32[]', space=smem, size = 0x4, offset = 0x4, fixed_abs, tag = 'smem constant byte address 0x4 - core index']
  #allocation1 [shape = 'u32[144,128]{1,0:T(1,128)}', space=vmem, size = 0x12000, scoped, tag = 'internal scratch']
  %s0 = inlined_call_operand.vmem [shape: bf16[32,64,32], index: 0, kind: input, shape index: {}]
  %s1 = inlined_call_operand.vmem [shape: bf16[32,32], index: 1, kind: input, shape index: {}]
  %s2 = inlined_call_operand.vmem [shape: f32[1,32], index: 2, kind: input, shape index: {}]
  %s3 = inlined_call_operand.vmem [shape: bf16[32,32], index: 3, kind: input, shape index: {}]
  %s4 = inlined_call_operand.vmem [shape: f32[1,32], index: 4, kind: input, shape index: {}]
  %s5 = inlined_call_operand.vmem [shape: bf16[32,128], index: 5, kind: input, shape index: {}]
  %s6 = inlined_call_operand.vmem [shape: f32[1,128], index: 6, kind: input, shape index: {}]
  %s7 = inlined_call_operand.hbm [shape: f32[32,128], index: 7, kind: output, shape index: {}]
  %s8 = sld [smem:[#allocation0]]
  $region61: #{tpu_custom_call.1} parent=0
    _
  %s10 = ssub.s32 1, %s8
  %s11 = scalar_select 0, %s10, %s8
  $region1: #{tpu_custom_call.1} parent=0
    #allocation2 [shape = 'u8[16384]{0}', space=vmem, size = 0x4000, scoped, tag = 'output window, operand 0']
    #allocation3 [shape = 's32[2]{0}', space=sflag, size = 0x8, scoped, tag = 'scoped memory for tpu_custom_call.1']
    %12 = vsyncpa [#allocation3], 0
    %s13 = scalar_lea.sflag [#allocation3], 1
    %14 = vsyncpa %s13, 0
    loop: start=0, step=1, limit=4
    $region2: #{tpu_custom_call.1} parent=1 // loop_pre_header
      _
    $region3: #{tpu_custom_call.1} parent=1 // loop_header
      %s16 = sphi 0, %s20
      %p17 = scmp.ge.s32.totalorder %s16, 4
      %s26 = sphi 0, %s28
      %s29 = sphi 0, %s26
      %s30 = sphi 0, %s29
      %s46 = sphi 0, %s30
      %s50 = sphi 0, %s50
      %s52 = sphi 0, %s50
      %s53 = sphi 0, %s52
      %s67 = sphi 0, %s53
      %s71 = sphi 0, %s71
      %s73 = sphi 0, %s71
      %s74 = sphi 0, %s73
      %s88 = sphi 0, %s74
      %s92 = sphi 0, %s92
      %s94 = sphi 0, %s92
      %s95 = sphi 0, %s94
      %s109 = sphi 0, %s95
      %s113 = sphi 0, %s113
      %s115 = sphi 0, %s113
      %s116 = sphi 0, %s115
      %s130 = sphi 0, %s116
      %s134 = sphi 0, %s134
      %s136 = sphi 0, %s134
      %s137 = sphi 0, %s136
      %s151 = sphi 0, %s137
      %s155 = sphi 0, %s155
      %s157 = sphi 0, %s155
      %s158 = sphi 0, %s157
      %s172 = sphi 0, %s158
      %s178 = sphi 0, %s180
      %s181 = sphi 0, %s178
      %s182 = sphi 0, %s181
      %s198 = sphi 0, %s182
    $region4: #{tpu_custom_call.1} parent=1 // loop_header_branch
      %19 = sbr.rel (%p17) target = $region8
    $region5: #{tpu_custom_call.1} parent=1 // loop_body
      %s21 = ssub.s32 %s16, 1
      %s22 = ssub.s32 %s16, 2
      %s23 = sadd.s32 %s16, 1
      %s24 = ssub.s32 %s16, %s23
      %p25 = scmp.eq.s32.totalorder %s24, 0
      %s27 = sadd.s32 %s26, 1
      %s28 = scalar_select %p25, %s26, %s27
      %p31 = pneg %p25
      %p32 = scmp.eq.s32.totalorder %s16, 1
      %p33 = por %p31, %p32
      %p34 = scmp.ne.s32.totalorder %s26, %s29
      %p35 = scmp.eq.s32.totalorder %s16, 0
      %p36 = por %p34, %p35
      %p37 = scmp.ne.s32.totalorder %s26, %s29
      %p38 = scmp.eq.s32.totalorder %s21, 1
      %p39 = por %p37, %p38
      %p40 = scmp.ne.s32.totalorder %s29, %s30
      %p41 = scmp.eq.s32.totalorder %s21, 0
      %p42 = por %p40, %p41
      %p43 = scmp.ne.s32.totalorder %s29, %s30
      %p44 = scmp.eq.s32.totalorder %s22, 1
      %p45 = por %p43, %p44
      %p47 = scmp.ne.s32.totalorder %s30, %s46
      %p48 = scmp.eq.s32.totalorder %s22, 0
      %p49 = por %p47, %p48
      %s51 = sadd.s32 %s50, 1
      %p54 = scmp.eq.s32.totalorder %s16, 1
      %p55 = scmp.ne.s32.totalorder %s50, %s52
      %p56 = scmp.eq.s32.totalorder %s16, 0
      %p57 = por %p55, %p56
      %p58 = scmp.ne.s32.totalorder %s50, %s52
      %p59 = scmp.eq.s32.totalorder %s21, 1
      %p60 = por %p58, %p59
      %p61 = scmp.ne.s32.totalorder %s52, %s53
      %p62 = scmp.eq.s32.totalorder %s21, 0
      %p63 = por %p61, %p62
      %p64 = scmp.ne.s32.totalorder %s52, %s53
      %p65 = scmp.eq.s32.totalorder %s22, 1
      %p66 = por %p64, %p65
      %p68 = scmp.ne.s32.totalorder %s53, %s67
      %p69 = scmp.eq.s32.totalorder %s22, 0
      %p70 = por %p68, %p69
      %s72 = sadd.s32 %s71, 1
      %p75 = scmp.eq.s32.totalorder %s16, 1
      %p76 = scmp.ne.s32.totalorder %s71, %s73
      %p77 = scmp.eq.s32.totalorder %s16, 0
      %p78 = por %p76, %p77
      %p79 = scmp.ne.s32.totalorder %s71, %s73
      %p80 = scmp.eq.s32.totalorder %s21, 1
      %p81 = por %p79, %p80
      %p82 = scmp.ne.s32.totalorder %s73, %s74
      %p83 = scmp.eq.s32.totalorder %s21, 0
      %p84 = por %p82, %p83
      %p85 = scmp.ne.s32.totalorder %s73, %s74
      %p86 = scmp.eq.s32.totalorder %s22, 1
      %p87 = por %p85, %p86
      %p89 = scmp.ne.s32.totalorder %s74, %s88
      %p90 = scmp.eq.s32.totalorder %s22, 0
      %p91 = por %p89, %p90
      %s93 = sadd.s32 %s92, 1
      %p96 = scmp.eq.s32.totalorder %s16, 1
      %p97 = scmp.ne.s32.totalorder %s92, %s94
      %p98 = scmp.eq.s32.totalorder %s16, 0
      %p99 = por %p97, %p98
      %p100 = scmp.ne.s32.totalorder %s92, %s94
      %p101 = scmp.eq.s32.totalorder %s21, 1
      %p102 = por %p100, %p101
      %p103 = scmp.ne.s32.totalorder %s94, %s95
      %p104 = scmp.eq.s32.totalorder %s21, 0
      %p105 = por %p103, %p104
      %p106 = scmp.ne.s32.totalorder %s94, %s95
      %p107 = scmp.eq.s32.totalorder %s22, 1
      %p108 = por %p106, %p107
      %p110 = scmp.ne.s32.totalorder %s95, %s109
      %p111 = scmp.eq.s32.totalorder %s22, 0
      %p112 = por %p110, %p111
      %s114 = sadd.s32 %s113, 1
      %p117 = scmp.eq.s32.totalorder %s16, 1
      %p118 = scmp.ne.s32.totalorder %s113, %s115
      %p119 = scmp.eq.s32.totalorder %s16, 0
      %p120 = por %p118, %p119
      %p121 = scmp.ne.s32.totalorder %s113, %s115
      %p122 = scmp.eq.s32.totalorder %s21, 1
      %p123 = por %p121, %p122
      %p124 = scmp.ne.s32.totalorder %s115, %s116
      %p125 = scmp.eq.s32.totalorder %s21, 0
      %p126 = por %p124, %p125
      %p127 = scmp.ne.s32.totalorder %s115, %s116
      %p128 = scmp.eq.s32.totalorder %s22, 1
      %p129 = por %p127, %p128
      %p131 = scmp.ne.s32.totalorder %s116, %s130
      %p132 = scmp.eq.s32.totalorder %s22, 0
      %p133 = por %p131, %p132
      %s135 = sadd.s32 %s134, 1
      %p138 = scmp.eq.s32.totalorder %s16, 1
      %p139 = scmp.ne.s32.totalorder %s134, %s136
      %p140 = scmp.eq.s32.totalorder %s16, 0
      %p141 = por %p139, %p140
      %p142 = scmp.ne.s32.totalorder %s134, %s136
      %p143 = scmp.eq.s32.totalorder %s21, 1
      %p144 = por %p142, %p143
      %p145 = scmp.ne.s32.totalorder %s136, %s137
      %p146 = scmp.eq.s32.totalorder %s21, 0
      %p147 = por %p145, %p146
      %p148 = scmp.ne.s32.totalorder %s136, %s137
      %p149 = scmp.eq.s32.totalorder %s22, 1
      %p150 = por %p148, %p149
      %p152 = scmp.ne.s32.totalorder %s137, %s151
      %p153 = scmp.eq.s32.totalorder %s22, 0
      %p154 = por %p152, %p153
      %s156 = sadd.s32 %s155, 1
      %p159 = scmp.eq.s32.totalorder %s16, 1
      %p160 = scmp.ne.s32.totalorder %s155, %s157
      %p161 = scmp.eq.s32.totalorder %s16, 0
      %p162 = por %p160, %p161
      %p163 = scmp.ne.s32.totalorder %s155, %s157
      %p164 = scmp.eq.s32.totalorder %s21, 1
      %p165 = por %p163, %p164
      %p166 = scmp.ne.s32.totalorder %s157, %s158
      %p167 = scmp.eq.s32.totalorder %s21, 0
      %p168 = por %p166, %p167
      %p169 = scmp.ne.s32.totalorder %s157, %s158
      %p170 = scmp.eq.s32.totalorder %s22, 1
      %p171 = por %p169, %p170
      %p173 = scmp.ne.s32.totalorder %s158, %s172
      %p174 = scmp.eq.s32.totalorder %s22, 0
      %p175 = por %p173, %p174
      %s176 = ssub.s32 %s16, %s23
      %p177 = scmp.eq.s32.totalorder %s176, 0
      %s179 = sadd.s32 %s178, 1
      %s180 = scalar_select %p177, %s178, %s179
      %p183 = pneg %p177
      %p184 = scmp.eq.s32.totalorder %s16, 1
      %p185 = por %p183, %p184
      %p186 = scmp.ne.s32.totalorder %s178, %s181
      %p187 = scmp.eq.s32.totalorder %s16, 0
      %p188 = por %p186, %p187
      %p189 = scmp.ne.s32.totalorder %s178, %s181
      %p190 = scmp.eq.s32.totalorder %s21, 1
      %p191 = por %p189, %p190
      %p192 = scmp.ne.s32.totalorder %s181, %s182
      %p193 = scmp.eq.s32.totalorder %s21, 0
      %p194 = por %p192, %p193
      %p195 = scmp.ne.s32.totalorder %s181, %s182
      %p196 = scmp.eq.s32.totalorder %s22, 1
      %p197 = por %p195, %p196
      %p199 = scmp.ne.s32.totalorder %s182, %s198
      %p200 = scmp.eq.s32.totalorder %s22, 0
      %p201 = por %p199, %p200
      %p202 = scmp.le.s32.totalorder 1, %s16
      %p203 = scmp.lt.s32.totalorder %s16, 3
      %p204 = pnand %p202, %p203
      %p205 = pneg %p204
      // Predicated region
      $region9: #{tpu_custom_call.1} parent=5 // pred_check
        _
      $region10: #{tpu_custom_call.1} parent=5 // pred_check_branch
        %207 = sbr.rel (%p204) target = $region12
      $region11: #{tpu_custom_call.1} parent=5 // pred_region
        %s208 = ssub.s32 %s16, 1
        // Predicated region
        $region13: #{tpu_custom_call.1} parent=11 // pred_check
          %p209 = pneg %p63
        $region14: #{tpu_custom_call.1} parent=11 // pred_check_branch
          %211 = sbr.rel (%p209) target = $region16
        $region15: #{tpu_custom_call.1} parent=11 // pred_region
          _
        $region16: #{tpu_custom_call.1} parent=11 // pred_fallthru
          _
        // Predicated region
        $region17: #{tpu_custom_call.1} parent=11 // pred_check
          %p212 = pneg %p84
        $region18: #{tpu_custom_call.1} parent=11 // pred_check_branch
          %214 = sbr.rel (%p212) target = $region20
        $region19: #{tpu_custom_call.1} parent=11 // pred_region
          _
        $region20: #{tpu_custom_call.1} parent=11 // pred_fallthru
          _
        // Predicated region
        $region21: #{tpu_custom_call.1} parent=11 // pred_check
          %p215 = pneg %p105
        $region22: #{tpu_custom_call.1} parent=11 // pred_check_branch
          %217 = sbr.rel (%p215) target = $region24
        $region23: #{tpu_custom_call.1} parent=11 // pred_region
          _
        $region24: #{tpu_custom_call.1} parent=11 // pred_fallthru
          _
        // Predicated region
        $region25: #{tpu_custom_call.1} parent=11 // pred_check
          %p218 = pneg %p126
        $region26: #{tpu_custom_call.1} parent=11 // pred_check_branch
          %220 = sbr.rel (%p218) target = $region28
        $region27: #{tpu_custom_call.1} parent=11 // pred_region
          _
        $region28: #{tpu_custom_call.1} parent=11 // pred_fallthru
          _
        // Predicated region
        $region29: #{tpu_custom_call.1} parent=11 // pred_check
          %p221 = pneg %p147
        $region30: #{tpu_custom_call.1} parent=11 // pred_check_branch
          %223 = sbr.rel (%p221) target = $region32
        $region31: #{tpu_custom_call.1} parent=11 // pred_region
          _
        $region32: #{tpu_custom_call.1} parent=11 // pred_fallthru
          _
        // Predicated region
        $region33: #{tpu_custom_call.1} parent=11 // pred_check
          %p224 = pneg %p168
        $region34: #{tpu_custom_call.1} parent=11 // pred_check_branch
          %226 = sbr.rel (%p224) target = $region36
        $region35: #{tpu_custom_call.1} parent=11 // pred_region
          _
        $region36: #{tpu_custom_call.1} parent=11 // pred_fallthru
          _
      $region12: #{tpu_custom_call.1} parent=5 // pred_fallthru
        _
      %p227 = scmp.lt.s32.totalorder %s16, 2
      // Predicated region
      $region37: #{tpu_custom_call.1} parent=5 // pred_check
        %p228 = pneg %p227
      $region38: #{tpu_custom_call.1} parent=5 // pred_check_branch
        %230 = sbr.rel (%p228) target = $region40
      $region39: #{tpu_custom_call.1} parent=5 // pred_region
        // Predicated region
        $region41: #{tpu_custom_call.1} parent=39 // pred_check
          %p231 = pneg %p36
        $region42: #{tpu_custom_call.1} parent=39 // pred_check_branch
          %233 = sbr.rel (%p231) target = $region44
        $region43: #{tpu_custom_call.1} parent=39 // pred_region
          %s234 = smul.u32 16, %s16
          %p235 = scmp.lt.s32.totalorder %s234, 31
          %s236 = scalar_select %p235, %s234, 31
          %s237 = smul.addr %s236, 8
          %s238 = smul.addr %s237, 4
          %s239 = scalar_lea.vmem %s0, %s238
          %s240 = smul.u32 16, %s16
        $region44: #{tpu_custom_call.1} parent=39 // pred_fallthru
          _
      $region40: #{tpu_custom_call.1} parent=5 // pred_fallthru
        _
      %p241 = scmp.le.s32.totalorder 1, %s16
      %p242 = scmp.lt.s32.totalorder %s16, 3
      %p243 = pnand %p241, %p242
      %p244 = pneg %p243
      // Predicated region
      $region45: #{tpu_custom_call.1} parent=5 // pred_check
        _
      $region46: #{tpu_custom_call.1} parent=5 // pred_check_branch
        %246 = sbr.rel (%p243) target = $region48
      $region47: #{tpu_custom_call.1} parent=5 // pred_region
        %s247 = ssub.s32 %s16, 1
        %s248 = smul.u32 16, %s21
        %p249 = scmp.lt.s32.totalorder %s248, 31
        %s250 = scalar_select %p249, %s248, 31
        %s251 = smul.addr %s250, 8
        %s252 = smul.addr %s251, 4
        %s253 = scalar_lea.vmem %s0, %s252
        %p254 = pneg %p42
        %p255 = pneg %p39
        %p256 = pneg %p63
        %p257 = pneg %p60
        %p258 = pneg %p84
        %p259 = pneg %p81
        %p260 = pneg %p105
        %p261 = pneg %p102
        %p262 = pneg %p126
        %p263 = pneg %p123
        %p264 = pneg %p147
        %p265 = pneg %p144
        %p266 = pneg %p168
        %p267 = pneg %p165
        %p268 = pneg %p194
        %p269 = pneg %p191
        %s270 = sand.u32 %s181, 1
        %s271 = scalar_lea.sflag [#allocation3], %s270
        %s272 = sand.u32 %s181, 1
        %s273 = smul.addr %s272, 16
        %s274 = scalar_lea.vmem [#allocation2], %s273
        %s275 = smul.u32 16, %s21
        %p276 = scmp.lt.s32.totalorder %s275, 31
        %s277 = scalar_select %p276, %s275, 31
        %s278 = smul.addr %s277, 8
        %s279 = smul.addr %s278, 4
        %s280 = scalar_lea.vmem %s0, %s279
        %s281 = smul.u32 16, %s21
        %s282 = smul.u32 2, %s21
        %v284 = vld [vmem:[%s280] sm:$0xf]
        %v285 = vld [vmem:[%s280 + $0x4] sm:$0xf]
        %v286 = vld [vmem:[%s280 + $0x8] sm:$0xf]
        %v287 = vld [vmem:[%s280 + $0xc] sm:$0xf]
        %v288 = vld [vmem:[%s280 + $0x10] sm:$0xf]
        %v289 = vld [vmem:[%s280 + $0x14] sm:$0xf]
        %v290 = vld [vmem:[%s280 + $0x18] sm:$0xf]
        %v291 = vld [vmem:[%s280 + $0x1c] sm:$0xf]
        %v292 = vld [vmem:[%s280 + $0x20] sm:$0xf]
        %v293 = vld [vmem:[%s280 + $0x24] sm:$0xf]
        %v294 = vld [vmem:[%s280 + $0x28] sm:$0xf]
        %v295 = vld [vmem:[%s280 + $0x2c] sm:$0xf]
        %v296 = vld [vmem:[%s280 + $0x30] sm:$0xf]
        %v297 = vld [vmem:[%s280 + $0x34] sm:$0xf]
        %v298 = vld [vmem:[%s280 + $0x38] sm:$0xf]
        %v299 = vld [vmem:[%s280 + $0x3c] sm:$0xf]
        %v300 = vld [vmem:[%s280 + $0x40] sm:$0xf]
        %v301 = vld [vmem:[%s280 + $0x44] sm:$0xf]
        %v302 = vld [vmem:[%s280 + $0x48] sm:$0xf]
        %v303 = vld [vmem:[%s280 + $0x4c] sm:$0xf]
        %v304 = vld [vmem:[%s280 + $0x50] sm:$0xf]
        %v305 = vld [vmem:[%s280 + $0x54] sm:$0xf]
        %v306 = vld [vmem:[%s280 + $0x58] sm:$0xf]
        %v307 = vld [vmem:[%s280 + $0x5c] sm:$0xf]
        %v308 = vld [vmem:[%s280 + $0x60] sm:$0xf]
        %v309 = vld [vmem:[%s280 + $0x64] sm:$0xf]
        %v310 = vld [vmem:[%s280 + $0x68] sm:$0xf]
        %v311 = vld [vmem:[%s280 + $0x6c] sm:$0xf]
        %v312 = vld [vmem:[%s280 + $0x70] sm:$0xf]
        %v313 = vld [vmem:[%s280 + $0x74] sm:$0xf]
        %v314 = vld [vmem:[%s280 + $0x78] sm:$0xf]
        %v315 = vld [vmem:[%s280 + $0x7c] sm:$0xf]
        %v316 = vld [vmem:[%s280 + $0x80] sm:$0xf]
        %v317 = vld [vmem:[%s280 + $0x84] sm:$0xf]
        %v318 = vld [vmem:[%s280 + $0x88] sm:$0xf]
        %v319 = vld [vmem:[%s280 + $0x8c] sm:$0xf]
        %v320 = vld [vmem:[%s280 + $0x90] sm:$0xf]
        %v321 = vld [vmem:[%s280 + $0x94] sm:$0xf]
        %v322 = vld [vmem:[%s280 + $0x98] sm:$0xf]
        %v323 = vld [vmem:[%s280 + $0x9c] sm:$0xf]
        %v324 = vld [vmem:[%s280 + $0xa0] sm:$0xf]
        %v325 = vld [vmem:[%s280 + $0xa4] sm:$0xf]
        %v326 = vld [vmem:[%s280 + $0xa8] sm:$0xf]
        %v327 = vld [vmem:[%s280 + $0xac] sm:$0xf]
        %v328 = vld [vmem:[%s280 + $0xb0] sm:$0xf]
        %v329 = vld [vmem:[%s280 + $0xb4] sm:$0xf]
        %v330 = vld [vmem:[%s280 + $0xb8] sm:$0xf]
        %v331 = vld [vmem:[%s280 + $0xbc] sm:$0xf]
        %v332 = vld [vmem:[%s280 + $0xc0] sm:$0xf]
        %v333 = vld [vmem:[%s280 + $0xc4] sm:$0xf]
        %v334 = vld [vmem:[%s280 + $0xc8] sm:$0xf]
        %v335 = vld [vmem:[%s280 + $0xcc] sm:$0xf]
        %v336 = vld [vmem:[%s280 + $0xd0] sm:$0xf]
        %v337 = vld [vmem:[%s280 + $0xd4] sm:$0xf]
        %v338 = vld [vmem:[%s280 + $0xd8] sm:$0xf]
        %v339 = vld [vmem:[%s280 + $0xdc] sm:$0xf]
        %v340 = vld [vmem:[%s280 + $0xe0] sm:$0xf]
        %v341 = vld [vmem:[%s280 + $0xe4] sm:$0xf]
        %v342 = vld [vmem:[%s280 + $0xe8] sm:$0xf]
        %v343 = vld [vmem:[%s280 + $0xec] sm:$0xf]
        %v344 = vld [vmem:[%s280 + $0xf0] sm:$0xf]
        %v345 = vld [vmem:[%s280 + $0xf4] sm:$0xf]
        %v346 = vld [vmem:[%s280 + $0xf8] sm:$0xf]
        %v347 = vld [vmem:[%s280 + $0xfc] sm:$0xf]
        %v348 = vld [vmem:[%s280 + $0x100] sm:$0xf]
        %v349 = vld [vmem:[%s280 + $0x104] sm:$0xf]
        %v350 = vld [vmem:[%s280 + $0x108] sm:$0xf]
        %v351 = vld [vmem:[%s280 + $0x10c] sm:$0xf]
        %v352 = vld [vmem:[%s280 + $0x110] sm:$0xf]
        %v353 = vld [vmem:[%s280 + $0x114] sm:$0xf]
        %v354 = vld [vmem:[%s280 + $0x118] sm:$0xf]
        %v355 = vld [vmem:[%s280 + $0x11c] sm:$0xf]
        %v356 = vld [vmem:[%s280 + $0x120] sm:$0xf]
        %v357 = vld [vmem:[%s280 + $0x124] sm:$0xf]
        %v358 = vld [vmem:[%s280 + $0x128] sm:$0xf]
        %v359 = vld [vmem:[%s280 + $0x12c] sm:$0xf]
        %v360 = vld [vmem:[%s280 + $0x130] sm:$0xf]
        %v361 = vld [vmem:[%s280 + $0x134] sm:$0xf]
        %v362 = vld [vmem:[%s280 + $0x138] sm:$0xf]
        %v363 = vld [vmem:[%s280 + $0x13c] sm:$0xf]
        %v364 = vld [vmem:[%s280 + $0x140] sm:$0xf]
        %v365 = vld [vmem:[%s280 + $0x144] sm:$0xf]
        %v366 = vld [vmem:[%s280 + $0x148] sm:$0xf]
        %v367 = vld [vmem:[%s280 + $0x14c] sm:$0xf]
        %v368 = vld [vmem:[%s280 + $0x150] sm:$0xf]
        %v369 = vld [vmem:[%s280 + $0x154] sm:$0xf]
        %v370 = vld [vmem:[%s280 + $0x158] sm:$0xf]
        %v371 = vld [vmem:[%s280 + $0x15c] sm:$0xf]
        %v372 = vld [vmem:[%s280 + $0x160] sm:$0xf]
        %v373 = vld [vmem:[%s280 + $0x164] sm:$0xf]
        %v374 = vld [vmem:[%s280 + $0x168] sm:$0xf]
        %v375 = vld [vmem:[%s280 + $0x16c] sm:$0xf]
        %v376 = vld [vmem:[%s280 + $0x170] sm:$0xf]
        %v377 = vld [vmem:[%s280 + $0x174] sm:$0xf]
        %v378 = vld [vmem:[%s280 + $0x178] sm:$0xf]
        %v379 = vld [vmem:[%s280 + $0x17c] sm:$0xf]
        %v380 = vld [vmem:[%s280 + $0x180] sm:$0xf]
        %v381 = vld [vmem:[%s280 + $0x184] sm:$0xf]
        %v382 = vld [vmem:[%s280 + $0x188] sm:$0xf]
        %v383 = vld [vmem:[%s280 + $0x18c] sm:$0xf]
        %v384 = vld [vmem:[%s280 + $0x190] sm:$0xf]
        %v385 = vld [vmem:[%s280 + $0x194] sm:$0xf]
        %v386 = vld [vmem:[%s280 + $0x198] sm:$0xf]
        %v387 = vld [vmem:[%s280 + $0x19c] sm:$0xf]
        %v388 = vld [vmem:[%s280 + $0x1a0] sm:$0xf]
        %v389 = vld [vmem:[%s280 + $0x1a4] sm:$0xf]
        %v390 = vld [vmem:[%s280 + $0x1a8] sm:$0xf]
        %v391 = vld [vmem:[%s280 + $0x1ac] sm:$0xf]
        %v392 = vld [vmem:[%s280 + $0x1b0] sm:$0xf]
        %v393 = vld [vmem:[%s280 + $0x1b4] sm:$0xf]
        %v394 = vld [vmem:[%s280 + $0x1b8] sm:$0xf]
        %v395 = vld [vmem:[%s280 + $0x1bc] sm:$0xf]
        %v396 = vld [vmem:[%s280 + $0x1c0] sm:$0xf]
        %v397 = vld [vmem:[%s280 + $0x1c4] sm:$0xf]
        %v398 = vld [vmem:[%s280 + $0x1c8] sm:$0xf]
        %v399 = vld [vmem:[%s280 + $0x1cc] sm:$0xf]
        %v400 = vld [vmem:[%s280 + $0x1d0] sm:$0xf]
        %v401 = vld [vmem:[%s280 + $0x1d4] sm:$0xf]
        %v402 = vld [vmem:[%s280 + $0x1d8] sm:$0xf]
        %v403 = vld [vmem:[%s280 + $0x1dc] sm:$0xf]
        %v404 = vld [vmem:[%s280 + $0x1e0] sm:$0xf]
        %v405 = vld [vmem:[%s280 + $0x1e4] sm:$0xf]
        %v406 = vld [vmem:[%s280 + $0x1e8] sm:$0xf]
        %v407 = vld [vmem:[%s280 + $0x1ec] sm:$0xf]
        %v408 = vld [vmem:[%s280 + $0x1f0] sm:$0xf]
        %v409 = vld [vmem:[%s280 + $0x1f4] sm:$0xf]
        %v410 = vld [vmem:[%s280 + $0x1f8] sm:$0xf]
        %v411 = vld [vmem:[%s280 + $0x1fc] sm:$0xf]
        %v412 = vunpack.c.l.bf16 %v284
        %v413 = vunpack.c.l.bf16 %v285
        %v414 = vunpack.c.l.bf16 %v286
        %v415 = vunpack.c.l.bf16 %v287
        %v416 = vunpack.c.l.bf16 %v288
        %v417 = vunpack.c.l.bf16 %v289
        %v418 = vunpack.c.l.bf16 %v290
        %v419 = vunpack.c.l.bf16 %v291
        %v420 = vunpack.c.l.bf16 %v292
        %v421 = vunpack.c.l.bf16 %v293
        %v422 = vunpack.c.l.bf16 %v294
        %v423 = vunpack.c.l.bf16 %v295
        %v424 = vunpack.c.l.bf16 %v296
        %v425 = vunpack.c.l.bf16 %v297
        %v426 = vunpack.c.l.bf16 %v298
        %v427 = vunpack.c.l.bf16 %v299
        %v428 = vunpack.c.l.bf16 %v300
        %v429 = vunpack.c.l.bf16 %v301
        %v430 = vunpack.c.l.bf16 %v302
        %v431 = vunpack.c.l.bf16 %v303
        %v432 = vunpack.c.l.bf16 %v304
        %v433 = vunpack.c.l.bf16 %v305
        %v434 = vunpack.c.l.bf16 %v306
        %v435 = vunpack.c.l.bf16 %v307
        %v436 = vunpack.c.l.bf16 %v308
        %v437 = vunpack.c.l.bf16 %v309
        %v438 = vunpack.c.l.bf16 %v310
        %v439 = vunpack.c.l.bf16 %v311
        %v440 = vunpack.c.l.bf16 %v312
        %v441 = vunpack.c.l.bf16 %v313
        %v442 = vunpack.c.l.bf16 %v314
        %v443 = vunpack.c.l.bf16 %v315
        %v444 = vunpack.c.l.bf16 %v316
        %v445 = vunpack.c.l.bf16 %v317
        %v446 = vunpack.c.l.bf16 %v318
        %v447 = vunpack.c.l.bf16 %v319
        %v448 = vunpack.c.l.bf16 %v320
        %v449 = vunpack.c.l.bf16 %v321
        %v450 = vunpack.c.l.bf16 %v322
        %v451 = vunpack.c.l.bf16 %v323
        %v452 = vunpack.c.l.bf16 %v324
        %v453 = vunpack.c.l.bf16 %v325
        %v454 = vunpack.c.l.bf16 %v326
        %v455 = vunpack.c.l.bf16 %v327
        %v456 = vunpack.c.l.bf16 %v328
        %v457 = vunpack.c.l.bf16 %v329
        %v458 = vunpack.c.l.bf16 %v330
        %v459 = vunpack.c.l.bf16 %v331
        %v460 = vunpack.c.l.bf16 %v332
        %v461 = vunpack.c.l.bf16 %v333
        %v462 = vunpack.c.l.bf16 %v334
        %v463 = vunpack.c.l.bf16 %v335
        %v464 = vunpack.c.l.bf16 %v336
        %v465 = vunpack.c.l.bf16 %v337
        %v466 = vunpack.c.l.bf16 %v338
        %v467 = vunpack.c.l.bf16 %v339
        %v468 = vunpack.c.l.bf16 %v340
        %v469 = vunpack.c.l.bf16 %v341
        %v470 = vunpack.c.l.bf16 %v342
        %v471 = vunpack.c.l.bf16 %v343
        %v472 = vunpack.c.l.bf16 %v344
        %v473 = vunpack.c.l.bf16 %v345
        %v474 = vunpack.c.l.bf16 %v346
        %v475 = vunpack.c.l.bf16 %v347
        %v476 = vunpack.c.l.bf16 %v348
        %v477 = vunpack.c.l.bf16 %v349
        %v478 = vunpack.c.l.bf16 %v350
        %v479 = vunpack.c.l.bf16 %v351
        %v480 = vunpack.c.l.bf16 %v352
        %v481 = vunpack.c.l.bf16 %v353
        %v482 = vunpack.c.l.bf16 %v354
        %v483 = vunpack.c.l.bf16 %v355
        %v484 = vunpack.c.l.bf16 %v356
        %v485 = vunpack.c.l.bf16 %v357
        %v486 = vunpack.c.l.bf16 %v358
        %v487 = vunpack.c.l.bf16 %v359
        %v488 = vunpack.c.l.bf16 %v360
        %v489 = vunpack.c.l.bf16 %v361
        %v490 = vunpack.c.l.bf16 %v362
        %v491 = vunpack.c.l.bf16 %v363
        %v492 = vunpack.c.l.bf16 %v364
        %v493 = vunpack.c.l.bf16 %v365
        %v494 = vunpack.c.l.bf16 %v366
        %v495 = vunpack.c.l.bf16 %v367
        %v496 = vunpack.c.l.bf16 %v368
        %v497 = vunpack.c.l.bf16 %v369
        %v498 = vunpack.c.l.bf16 %v370
        %v499 = vunpack.c.l.bf16 %v371
        %v500 = vunpack.c.l.bf16 %v372
        %v501 = vunpack.c.l.bf16 %v373
        %v502 = vunpack.c.l.bf16 %v374
        %v503 = vunpack.c.l.bf16 %v375
        %v504 = vunpack.c.l.bf16 %v376
        %v505 = vunpack.c.l.bf16 %v377
        %v506 = vunpack.c.l.bf16 %v378
        %v507 = vunpack.c.l.bf16 %v379
        %v508 = vunpack.c.l.bf16 %v380
        %v509 = vunpack.c.l.bf16 %v381
        %v510 = vunpack.c.l.bf16 %v382
        %v511 = vunpack.c.l.bf16 %v383
        %v512 = vunpack.c.l.bf16 %v384
        %v513 = vunpack.c.l.bf16 %v385
        %v514 = vunpack.c.l.bf16 %v386
        %v515 = vunpack.c.l.bf16 %v387
        %v516 = vunpack.c.l.bf16 %v388
        %v517 = vunpack.c.l.bf16 %v389
        %v518 = vunpack.c.l.bf16 %v390
        %v519 = vunpack.c.l.bf16 %v391
        %v520 = vunpack.c.l.bf16 %v392
        %v521 = vunpack.c.l.bf16 %v393
        %v522 = vunpack.c.l.bf16 %v394
        %v523 = vunpack.c.l.bf16 %v395
        %v524 = vunpack.c.l.bf16 %v396
        %v525 = vunpack.c.l.bf16 %v397
        %v526 = vunpack.c.l.bf16 %v398
        %v527 = vunpack.c.l.bf16 %v399
        %v528 = vunpack.c.l.bf16 %v400
        %v529 = vunpack.c.l.bf16 %v401
        %v530 = vunpack.c.l.bf16 %v402
        %v531 = vunpack.c.l.bf16 %v403
        %v532 = vunpack.c.l.bf16 %v404
        %v533 = vunpack.c.l.bf16 %v405
        %v534 = vunpack.c.l.bf16 %v406
        %v535 = vunpack.c.l.bf16 %v407
        %v536 = vunpack.c.l.bf16 %v408
        %v537 = vunpack.c.l.bf16 %v409
        %v538 = vunpack.c.l.bf16 %v410
        %v539 = vunpack.c.l.bf16 %v411
        %v540 = vld [vmem:[%s1] sm:$0xf]
        %v541 = vld [vmem:[%s1 + $0x4] sm:$0xf]
        %v542 = vld [vmem:[%s1 + $0x8] sm:$0xf]
        %v543 = vld [vmem:[%s1 + $0xc] sm:$0xf]
        %v544 = vld [vmem:[%s2] sm:$0x1]
        %v546 = vlaneseq
        %v547 = vshrl.u32 %v546, 7
        %v548 = vsub.s32 0, %v547
        %v549 = vrot.slane %v544, %v548
        %v679 = vunpack.c.l.b16 %v284
        %v680 = vunpack.c.l.b16 %v285
        %v681 = vunpack.c.l.b16 %v286
        %v682 = vunpack.c.l.b16 %v287
        %v683 = vunpack.c.l.b16 %v288
        %v684 = vunpack.c.l.b16 %v289
        %v685 = vunpack.c.l.b16 %v290
        %v686 = vunpack.c.l.b16 %v291
        %v687 = vunpack.c.l.b16 %v292
        %v688 = vunpack.c.l.b16 %v293
        %v689 = vunpack.c.l.b16 %v294
        %v690 = vunpack.c.l.b16 %v295
        %v691 = vunpack.c.l.b16 %v296
        %v692 = vunpack.c.l.b16 %v297
        %v693 = vunpack.c.l.b16 %v298
        %v694 = vunpack.c.l.b16 %v299
        %v695 = vunpack.c.l.b16 %v300
        %v696 = vunpack.c.l.b16 %v301
        %v697 = vunpack.c.l.b16 %v302
        %v698 = vunpack.c.l.b16 %v303
        %v699 = vunpack.c.l.b16 %v304
        %v700 = vunpack.c.l.b16 %v305
        %v701 = vunpack.c.l.b16 %v306
        %v702 = vunpack.c.l.b16 %v307
        %v703 = vunpack.c.l.b16 %v308
        %v704 = vunpack.c.l.b16 %v309
        %v705 = vunpack.c.l.b16 %v310
        %v706 = vunpack.c.l.b16 %v311
        %v707 = vunpack.c.l.b16 %v312
        %v708 = vunpack.c.l.b16 %v313
        %v709 = vunpack.c.l.b16 %v314
        %v710 = vunpack.c.l.b16 %v315
        %v711 = vunpack.c.l.b16 %v316
        %v712 = vunpack.c.l.b16 %v317
        %v713 = vunpack.c.l.b16 %v318
        %v714 = vunpack.c.l.b16 %v319
        %v715 = vunpack.c.l.b16 %v320
        %v716 = vunpack.c.l.b16 %v321
        %v717 = vunpack.c.l.b16 %v322
        %v718 = vunpack.c.l.b16 %v323
        %v719 = vunpack.c.l.b16 %v324
        %v720 = vunpack.c.l.b16 %v325
        %v721 = vunpack.c.l.b16 %v326
        %v722 = vunpack.c.l.b16 %v327
        %v723 = vunpack.c.l.b16 %v328
        %v724 = vunpack.c.l.b16 %v329
        %v725 = vunpack.c.l.b16 %v330
        %v726 = vunpack.c.l.b16 %v331
        %v727 = vunpack.c.l.b16 %v332
        %v728 = vunpack.c.l.b16 %v333
        %v729 = vunpack.c.l.b16 %v334
        %v730 = vunpack.c.l.b16 %v335
        %v731 = vunpack.c.l.b16 %v336
        %v732 = vunpack.c.l.b16 %v337
        %v733 = vunpack.c.l.b16 %v338
        %v734 = vunpack.c.l.b16 %v339
        %v735 = vunpack.c.l.b16 %v340
        %v736 = vunpack.c.l.b16 %v341
        %v737 = vunpack.c.l.b16 %v342
        %v738 = vunpack.c.l.b16 %v343
        %v739 = vunpack.c.l.b16 %v344
        %v740 = vunpack.c.l.b16 %v345
        %v741 = vunpack.c.l.b16 %v346
        %v742 = vunpack.c.l.b16 %v347
        %v743 = vunpack.c.l.b16 %v348
        %v744 = vunpack.c.l.b16 %v349
        %v745 = vunpack.c.l.b16 %v350
        %v746 = vunpack.c.l.b16 %v351
        %v747 = vunpack.c.l.b16 %v352
        %v748 = vunpack.c.l.b16 %v353
        %v749 = vunpack.c.l.b16 %v354
        %v750 = vunpack.c.l.b16 %v355
        %v751 = vunpack.c.l.b16 %v356
        %v752 = vunpack.c.l.b16 %v357
        %v753 = vunpack.c.l.b16 %v358
        %v754 = vunpack.c.l.b16 %v359
        %v755 = vunpack.c.l.b16 %v360
        %v756 = vunpack.c.l.b16 %v361
        %v757 = vunpack.c.l.b16 %v362
        %v758 = vunpack.c.l.b16 %v363
        %v759 = vunpack.c.l.b16 %v364
        %v760 = vunpack.c.l.b16 %v365
        %v761 = vunpack.c.l.b16 %v366
        %v762 = vunpack.c.l.b16 %v367
        %v763 = vunpack.c.l.b16 %v368
        %v764 = vunpack.c.l.b16 %v369
        %v765 = vunpack.c.l.b16 %v370
        %v766 = vunpack.c.l.b16 %v371
        %v767 = vunpack.c.l.b16 %v372
        %v768 = vunpack.c.l.b16 %v373
        %v769 = vunpack.c.l.b16 %v374
        %v770 = vunpack.c.l.b16 %v375
        %v771 = vunpack.c.l.b16 %v376
        %v772 = vunpack.c.l.b16 %v377
        %v773 = vunpack.c.l.b16 %v378
        %v774 = vunpack.c.l.b16 %v379
        %v775 = vunpack.c.l.b16 %v380
        %v776 = vunpack.c.l.b16 %v381
        %v777 = vunpack.c.l.b16 %v382
        %v778 = vunpack.c.l.b16 %v383
        %v779 = vunpack.c.l.b16 %v384
        %v780 = vunpack.c.l.b16 %v385
        %v781 = vunpack.c.l.b16 %v386
        %v782 = vunpack.c.l.b16 %v387
        %v783 = vunpack.c.l.b16 %v388
        %v784 = vunpack.c.l.b16 %v389
        %v785 = vunpack.c.l.b16 %v390
        %v786 = vunpack.c.l.b16 %v391
        %v787 = vunpack.c.l.b16 %v392
        %v788 = vunpack.c.l.b16 %v393
        %v789 = vunpack.c.l.b16 %v394
        %v790 = vunpack.c.l.b16 %v395
        %v791 = vunpack.c.l.b16 %v396
        %v792 = vunpack.c.l.b16 %v397
        %v793 = vunpack.c.l.b16 %v398
        %v794 = vunpack.c.l.b16 %v399
        %v795 = vunpack.c.l.b16 %v400
        %v796 = vunpack.c.l.b16 %v401
        %v797 = vunpack.c.l.b16 %v402
        %v798 = vunpack.c.l.b16 %v403
        %v799 = vunpack.c.l.b16 %v404
        %v800 = vunpack.c.l.b16 %v405
        %v801 = vunpack.c.l.b16 %v406
        %v802 = vunpack.c.l.b16 %v407
        %v803 = vunpack.c.l.b16 %v408
        %v804 = vunpack.c.l.b16 %v409
        %v805 = vunpack.c.l.b16 %v410
        %v806 = vunpack.c.l.b16 %v411
        %v807 = vpack.c.b16 %v680, %v679
        %v808 = vpack.c.b16 %v682, %v681
        %v809 = vpack.c.b16 %v684, %v683
        %v810 = vpack.c.b16 %v686, %v685
        %v811 = vpack.c.b16 %v688, %v687
        %v812 = vpack.c.b16 %v690, %v689
        %v813 = vpack.c.b16 %v692, %v691
        %v814 = vpack.c.b16 %v694, %v693
        %v815 = vpack.c.b16 %v696, %v695
        %v816 = vpack.c.b16 %v698, %v697
        %v817 = vpack.c.b16 %v700, %v699
        %v818 = vpack.c.b16 %v702, %v701
        %v819 = vpack.c.b16 %v704, %v703
        %v820 = vpack.c.b16 %v706, %v705
        %v821 = vpack.c.b16 %v708, %v707
        %v822 = vpack.c.b16 %v710, %v709
        %v823 = vpack.c.b16 %v712, %v711
        %v824 = vpack.c.b16 %v714, %v713
        %v825 = vpack.c.b16 %v716, %v715
        %v826 = vpack.c.b16 %v718, %v717
        %v827 = vpack.c.b16 %v720, %v719
        %v828 = vpack.c.b16 %v722, %v721
        %v829 = vpack.c.b16 %v724, %v723
        %v830 = vpack.c.b16 %v726, %v725
        %v831 = vpack.c.b16 %v728, %v727
        %v832 = vpack.c.b16 %v730, %v729
        %v833 = vpack.c.b16 %v732, %v731
        %v834 = vpack.c.b16 %v734, %v733
        %v835 = vpack.c.b16 %v736, %v735
        %v836 = vpack.c.b16 %v738, %v737
        %v837 = vpack.c.b16 %v740, %v739
        %v838 = vpack.c.b16 %v742, %v741
        %v839 = vpack.c.b16 %v744, %v743
        %v840 = vpack.c.b16 %v746, %v745
        %v841 = vpack.c.b16 %v748, %v747
        %v842 = vpack.c.b16 %v750, %v749
        %v843 = vpack.c.b16 %v752, %v751
        %v844 = vpack.c.b16 %v754, %v753
        %v845 = vpack.c.b16 %v756, %v755
        %v846 = vpack.c.b16 %v758, %v757
        %v847 = vpack.c.b16 %v760, %v759
        %v848 = vpack.c.b16 %v762, %v761
        %v849 = vpack.c.b16 %v764, %v763
        %v850 = vpack.c.b16 %v766, %v765
        %v851 = vpack.c.b16 %v768, %v767
        %v852 = vpack.c.b16 %v770, %v769
        %v853 = vpack.c.b16 %v772, %v771
        %v854 = vpack.c.b16 %v774, %v773
        %v855 = vpack.c.b16 %v776, %v775
        %v856 = vpack.c.b16 %v778, %v777
        %v857 = vpack.c.b16 %v780, %v779
        %v858 = vpack.c.b16 %v782, %v781
        %v859 = vpack.c.b16 %v784, %v783
        %v860 = vpack.c.b16 %v786, %v785
        %v861 = vpack.c.b16 %v788, %v787
        %v862 = vpack.c.b16 %v790, %v789
        %v863 = vpack.c.b16 %v792, %v791
        %v864 = vpack.c.b16 %v794, %v793
        %v865 = vpack.c.b16 %v796, %v795
        %v866 = vpack.c.b16 %v798, %v797
        %v867 = vpack.c.b16 %v800, %v799
        %v868 = vpack.c.b16 %v802, %v801
        %v869 = vpack.c.b16 %v804, %v803
        %v870 = vpack.c.b16 %v806, %v805
        %v875 = vunpack.c.l.b16 %v540
        %v876 = vunpack.c.l.b16 %v541
        %v877 = vunpack.c.l.b16 %v542
        %v878 = vunpack.c.l.b16 %v543
        %v879 = vpack.c.b16 %v876, %v875
        %v880 = vpack.c.b16 %v878, %v877
        %vm883 = vcmask 261120
        %v885 = vsel %vm883, %v807, 0
        %v888 = vsel %vm883, %v808, 0
        %v891 = vsel %vm883, %v809, 0
        %v894 = vsel %vm883, %v810, 0
        %v897 = vsel %vm883, %v811, 0
        %v900 = vsel %vm883, %v812, 0
        %v903 = vsel %vm883, %v813, 0
        %v906 = vsel %vm883, %v814, 0
        %v909 = vsel %vm883, %v815, 0
        %v912 = vsel %vm883, %v816, 0
        %v915 = vsel %vm883, %v817, 0
        %v918 = vsel %vm883, %v818, 0
        %v921 = vsel %vm883, %v819, 0
        %v924 = vsel %vm883, %v820, 0
        %v927 = vsel %vm883, %v821, 0
        %v930 = vsel %vm883, %v822, 0
        %v933 = vsel %vm883, %v823, 0
        %v936 = vsel %vm883, %v824, 0
        %v939 = vsel %vm883, %v825, 0
        %v942 = vsel %vm883, %v826, 0
        %v945 = vsel %vm883, %v827, 0
        %v948 = vsel %vm883, %v828, 0
        %v951 = vsel %vm883, %v829, 0
        %v954 = vsel %vm883, %v830, 0
        %v957 = vsel %vm883, %v831, 0
        %v960 = vsel %vm883, %v832, 0
        %v963 = vsel %vm883, %v833, 0
        %v966 = vsel %vm883, %v834, 0
        %v969 = vsel %vm883, %v835, 0
        %v972 = vsel %vm883, %v836, 0
        %v975 = vsel %vm883, %v837, 0
        %v978 = vsel %vm883, %v838, 0
        %v981 = vsel %vm883, %v839, 0
        %v984 = vsel %vm883, %v840, 0
        %v987 = vsel %vm883, %v841, 0
        %v990 = vsel %vm883, %v842, 0
        %v993 = vsel %vm883, %v843, 0
        %v996 = vsel %vm883, %v844, 0
        %v999 = vsel %vm883, %v845, 0
        %v1002 = vsel %vm883, %v846, 0
        %v1005 = vsel %vm883, %v847, 0
        %v1008 = vsel %vm883, %v848, 0
        %v1011 = vsel %vm883, %v849, 0
        %v1014 = vsel %vm883, %v850, 0
        %v1017 = vsel %vm883, %v851, 0
        %v1020 = vsel %vm883, %v852, 0
        %v1023 = vsel %vm883, %v853, 0
        %v1026 = vsel %vm883, %v854, 0
        %v1029 = vsel %vm883, %v855, 0
        %v1032 = vsel %vm883, %v856, 0
        %v1035 = vsel %vm883, %v857, 0
        %v1038 = vsel %vm883, %v858, 0
        %v1041 = vsel %vm883, %v859, 0
        %v1044 = vsel %vm883, %v860, 0
        %v1047 = vsel %vm883, %v861, 0
        %v1050 = vsel %vm883, %v862, 0
        %v1053 = vsel %vm883, %v863, 0
        %v1056 = vsel %vm883, %v864, 0
        %v1059 = vsel %vm883, %v865, 0
        %v1062 = vsel %vm883, %v866, 0
        %v1065 = vsel %vm883, %v867, 0
        %v1068 = vsel %vm883, %v868, 0
        %v1071 = vsel %vm883, %v869, 0
        %v1074 = vsel %vm883, %v870, 0
        %1076 = vmatprep.subr.bf16.mxu0 0
        %1077 = vmatpush1.bf16.msra.mxu0 %v879
        %1078 = vmatprep.subr.bf16.mxu0 0
        %1079 = vmatpush1.bf16.msra.mxu0 %v880
        %1080 = vmatprep.subr.bf16.mxu0 0
        %1081 = vmatpush1.bf16.msra.mxu0 0
        %1082 = vmatprep.subr.bf16.mxu0 0
        %1083 = vmatpush1.bf16.msra.mxu0 0
        %1084 = vmatprep.subr.bf16.mxu0 0
        %1085 = vmatpush1.bf16.msra.mxu0 0
        %1086 = vmatprep.subr.bf16.mxu0 0
        %1087 = vmatpush1.bf16.msra.mxu0 0
        %1088 = vmatprep.subr.bf16.mxu0 0
        %1089 = vmatpush1.bf16.msra.mxu0 0
        %1090 = vmatprep.subr.bf16.mxu0 0
        %1091 = vmatpush1.bf16.msra.mxu0 0
        %1092 = vmatprep.subr.bf16.mxu0 0
        %1093 = vmatpush1.bf16.msra.mxu0 0
        %1094 = vmatprep.subr.bf16.mxu0 0
        %1095 = vmatpush1.bf16.msra.mxu0 0
        %1096 = vmatprep.subr.bf16.mxu0 0
        %1097 = vmatpush1.bf16.msra.mxu0 0
        %1098 = vmatprep.subr.bf16.mxu0 0
        %1099 = vmatpush1.bf16.msra.mxu0 0
        %1100 = vmatprep.subr.bf16.mxu0 0
        %1101 = vmatpush1.bf16.msra.mxu0 0
        %1102 = vmatprep.subr.bf16.mxu0 0
        %1103 = vmatpush1.bf16.msra.mxu0 0
        %1104 = vmatprep.subr.bf16.mxu0 0
        %1105 = vmatpush1.bf16.msra.mxu0 0
        %1106 = vmatprep.subr.bf16.mxu0 0
        %1107 = vmatpush1.bf16.msra.mxu0 0
        %1108 = vmatprep.mubr.bf16.mxu0 0
        %1109 = vmatmul.mubr.bf16.gmra.mrb[0].mxu0 %v885
        %v1110 = vpop.f32.mrb[0].mxu0
        %v1111 = vadd.f32 %v549, %v1110
        %v1112 = vpop.f32.mrb[0].mxu0
        %v1113 = vpop.f32.mrb[0].mxu0
        %v1114 = vadd.f32 %v549, %v1113
        %v1115 = vpop.f32.mrb[0].mxu0
        %1116 = vmatprep.mubr.bf16.mxu0 0
        %1117 = vmatmul.mubr.bf16.gmra.mrb[0].mxu0 %v888
        %v1118 = vpop.f32.mrb[0].mxu0
        %v1119 = vadd.f32 %v549, %v1118
        %v1120 = vpop.f32.mrb[0].mxu0
        %v1121 = vpop.f32.mrb[0].mxu0
        %v1122 = vadd.f32 %v549, %v1121
        %v1123 = vpop.f32.mrb[0].mxu0
        %1124 = vmatprep.mubr.bf16.mxu0 0
        %1125 = vmatmul.mubr.bf16.gmra.mrb[0].mxu0 %v891
        %v1126 = vpop.f32.mrb[0].mxu0
        %v1127 = vadd.f32 %v549, %v1126
        %v1128 = vpop.f32.mrb[0].mxu0
        %v1129 = vpop.f32.mrb[0].mxu0
        %v1130 = vadd.f32 %v549, %v1129
        %v1131 = vpop.f32.mrb[0].mxu0
        %1132 = vmatprep.mubr.bf16.mxu0 0
        %1133 = vmatmul.mubr.bf16.gmra.mrb[0].mxu0 %v894
        %v1134 = vpop.f32.mrb[0].mxu0
        %v1135 = vadd.f32 %v549, %v1134
        %v1136 = vpop.f32.mrb[0].mxu0
        %v1137 = vpop.f32.mrb[0].mxu0
        %v1138 = vadd.f32 %v549, %v1137
        %v1139 = vpop.f32.mrb[0].mxu0
        %1140 = vmatprep.mubr.bf16.mxu0 0
        %1141 = vmatmul.mubr.bf16.gmra.mrb[0].mxu0 %v897
        %v1142 = vpop.f32.mrb[0].mxu0
        %v1143 = vadd.f32 %v549, %v1142
        %v1144 = vpop.f32.mrb[0].mxu0
        %v1145 = vpop.f32.mrb[0].mxu0
        %v1146 = vadd.f32 %v549, %v1145
        %v1147 = vpop.f32.mrb[0].mxu0
        %1148 = vmatprep.mubr.bf16.mxu0 0
        %1149 = vmatmul.mubr.bf16.gmra.mrb[0].mxu0 %v900
        %v1150 = vpop.f32.mrb[0].mxu0
        %v1151 = vadd.f32 %v549, %v1150
        %v1152 = vpop.f32.mrb[0].mxu0
        %v1153 = vpop.f32.mrb[0].mxu0
        %v1154 = vadd.f32 %v549, %v1153
        %v1155 = vpop.f32.mrb[0].mxu0
        %1156 = vmatprep.mubr.bf16.mxu0 0
        %1157 = vmatmul.mubr.bf16.gmra.mrb[0].mxu0 %v903
        %v1158 = vpop.f32.mrb[0].mxu0
        %v1159 = vadd.f32 %v549, %v1158
        %v1160 = vpop.f32.mrb[0].mxu0
        %v1161 = vpop.f32.mrb[0].mxu0
        %v1162 = vadd.f32 %v549, %v1161
        %v1163 = vpop.f32.mrb[0].mxu0
        %1164 = vmatprep.mubr.bf16.mxu0 0
        %1165 = vmatmul.mubr.bf16.gmra.mrb[0].mxu0 %v906
        %v1166 = vpop.f32.mrb[0].mxu0
        %v1167 = vadd.f32 %v549, %v1166
        %v1168 = vpop.f32.mrb[0].mxu0
        %v1169 = vpop.f32.mrb[0].mxu0
        %v1170 = vadd.f32 %v549, %v1169
        %v1171 = vpop.f32.mrb[0].mxu0
        %1172 = vmatprep.mubr.bf16.mxu0 0
        %1173 = vmatmul.mubr.bf16.gmra.mrb[0].mxu0 %v909
        %v1174 = vpop.f32.mrb[0].mxu0
        %v1175 = vadd.f32 %v549, %v1174
        %v1176 = vpop.f32.mrb[0].mxu0
        %v1177 = vpop.f32.mrb[0].mxu0
        %v1178 = vadd.f32 %v549, %v1177
        %v1179 = vpop.f32.mrb[0].mxu0
        %1180 = vmatprep.mubr.bf16.mxu0 0
        %1181 = vmatmul.mubr.bf16.gmra.mrb[0].mxu0 %v912
        %v1182 = vpop.f32.mrb[0].mxu0
        %v1183 = vadd.f32 %v549, %v1182
        %v1184 = vpop.f32.mrb[0].mxu0
        %v1185 = vpop.f32.mrb[0].mxu0
        %v1186 = vadd.f32 %v549, %v1185
        %v1187 = vpop.f32.mrb[0].mxu0
        %1188 = vmatprep.mubr.bf16.mxu0 0
        %1189 = vmatmul.mubr.bf16.gmra.mrb[0].mxu0 %v915
        %v1190 = vpop.f32.mrb[0].mxu0
        %v1191 = vadd.f32 %v549, %v1190
        %v1192 = vpop.f32.mrb[0].mxu0
        %v1193 = vpop.f32.mrb[0].mxu0
        %v1194 = vadd.f32 %v549, %v1193
        %v1195 = vpop.f32.mrb[0].mxu0
        %1196 = vmatprep.mubr.bf16.mxu0 0
        %1197 = vmatmul.mubr.bf16.gmra.mrb[0].mxu0 %v918
        %v1198 = vpop.f32.mrb[0].mxu0
        %v1199 = vadd.f32 %v549, %v1198
        %v1200 = vpop.f32.mrb[0].mxu0
        %v1201 = vpop.f32.mrb[0].mxu0
        %v1202 = vadd.f32 %v549, %v1201
        %v1203 = vpop.f32.mrb[0].mxu0
        %1204 = vmatprep.mubr.bf16.mxu0 0
        %1205 = vmatmul.mubr.bf16.gmra.mrb[0].mxu0 %v921
        %v1206 = vpop.f32.mrb[0].mxu0
        %v1207 = vadd.f32 %v549, %v1206
        %v1208 = vpop.f32.mrb[0].mxu0
        %v1209 = vpop.f32.mrb[0].mxu0
        %v1210 = vadd.f32 %v549, %v1209
        %v1211 = vpop.f32.mrb[0].mxu0
        %1212 = vmatprep.mubr.bf16.mxu0 0
        %1213 = vmatmul.mubr.bf16.gmra.mrb[0].mxu0 %v924
        %v1214 = vpop.f32.mrb[0].mxu0
        %v1215 = vadd.f32 %v549, %v1214
        %v1216 = vpop.f32.mrb[0].mxu0
        %v1217 = vpop.f32.mrb[0].mxu0
        %v1218 = vadd.f32 %v549, %v1217
        %v1219 = vpop.f32.mrb[0].mxu0
        %1220 = vmatprep.mubr.bf16.mxu0 0
        %1221 = vmatmul.mubr.bf16.gmra.mrb[0].mxu0 %v927
        %v1222 = vpop.f32.mrb[0].mxu0
        %v1223 = vadd.f32 %v549, %v1222
        %v1224 = vpop.f32.mrb[0].mxu0
        %v1225 = vpop.f32.mrb[0].mxu0
        %v1226 = vadd.f32 %v549, %v1225
        %v1227 = vpop.f32.mrb[0].mxu0
        %1228 = vmatprep.mubr.bf16.mxu0 0
        %1229 = vmatmul.mubr.bf16.gmra.mrb[0].mxu0 %v930
        %v1230 = vpop.f32.mrb[0].mxu0
        %v1231 = vadd.f32 %v549, %v1230
        %v1232 = vpop.f32.mrb[0].mxu0
        %v1233 = vpop.f32.mrb[0].mxu0
        %v1234 = vadd.f32 %v549, %v1233
        %v1235 = vpop.f32.mrb[0].mxu0
        %1236 = vmatprep.mubr.bf16.mxu0 0
        %1237 = vmatmul.mubr.bf16.gmra.mrb[0].mxu0 %v933
        %v1238 = vpop.f32.mrb[0].mxu0
        %v1239 = vadd.f32 %v549, %v1238
        %v1240 = vpop.f32.mrb[0].mxu0
        %v1241 = vpop.f32.mrb[0].mxu0
        %v1242 = vadd.f32 %v549, %v1241
        %v1243 = vpop.f32.mrb[0].mxu0
        %1244 = vmatprep.mubr.bf16.mxu0 0
        %1245 = vmatmul.mubr.bf16.gmra.mrb[0].mxu0 %v936
        %v1246 = vpop.f32.mrb[0].mxu0
        %v1247 = vadd.f32 %v549, %v1246
        %v1248 = vpop.f32.mrb[0].mxu0
        %v1249 = vpop.f32.mrb[0].mxu0
        %v1250 = vadd.f32 %v549, %v1249
        %v1251 = vpop.f32.mrb[0].mxu0
        %1252 = vmatprep.mubr.bf16.mxu0 0
        %1253 = vmatmul.mubr.bf16.gmra.mrb[0].mxu0 %v939
        %v1254 = vpop.f32.mrb[0].mxu0
        %v1255 = vadd.f32 %v549, %v1254
        %v1256 = vpop.f32.mrb[0].mxu0
        %v1257 = vpop.f32.mrb[0].mxu0
        %v1258 = vadd.f32 %v549, %v1257
        %v1259 = vpop.f32.mrb[0].mxu0
        %1260 = vmatprep.mubr.bf16.mxu0 0
        %1261 = vmatmul.mubr.bf16.gmra.mrb[0].mxu0 %v942
        %v1262 = vpop.f32.mrb[0].mxu0
        %v1263 = vadd.f32 %v549, %v1262
        %v1264 = vpop.f32.mrb[0].mxu0
        %v1265 = vpop.f32.mrb[0].mxu0
        %v1266 = vadd.f32 %v549, %v1265
        %v1267 = vpop.f32.mrb[0].mxu0
        %1268 = vmatprep.mubr.bf16.mxu0 0
        %1269 = vmatmul.mubr.bf16.gmra.mrb[0].mxu0 %v945
        %v1270 = vpop.f32.mrb[0].mxu0
        %v1271 = vadd.f32 %v549, %v1270
        %v1272 = vpop.f32.mrb[0].mxu0
        %v1273 = vpop.f32.mrb[0].mxu0
        %v1274 = vadd.f32 %v549, %v1273
        %v1275 = vpop.f32.mrb[0].mxu0
        %1276 = vmatprep.mubr.bf16.mxu0 0
        %1277 = vmatmul.mubr.bf16.gmra.mrb[0].mxu0 %v948
        %v1278 = vpop.f32.mrb[0].mxu0
        %v1279 = vadd.f32 %v549, %v1278
        %v1280 = vpop.f32.mrb[0].mxu0
        %v1281 = vpop.f32.mrb[0].mxu0
        %v1282 = vadd.f32 %v549, %v1281
        %v1283 = vpop.f32.mrb[0].mxu0
        %1284 = vmatprep.mubr.bf16.mxu0 0
        %1285 = vmatmul.mubr.bf16.gmra.mrb[0].mxu0 %v951
        %v1286 = vpop.f32.mrb[0].mxu0
        %v1287 = vadd.f32 %v549, %v1286
        %v1288 = vpop.f32.mrb[0].mxu0
        %v1289 = vpop.f32.mrb[0].mxu0
        %v1290 = vadd.f32 %v549, %v1289
        %v1291 = vpop.f32.mrb[0].mxu0
        %1292 = vmatprep.mubr.bf16.mxu0 0
        %1293 = vmatmul.mubr.bf16.gmra.mrb[0].mxu0 %v954
        %v1294 = vpop.f32.mrb[0].mxu0
        %v1295 = vadd.f32 %v549, %v1294
        %v1296 = vpop.f32.mrb[0].mxu0
        %v1297 = vpop.f32.mrb[0].mxu0
        %v1298 = vadd.f32 %v549, %v1297
        %v1299 = vpop.f32.mrb[0].mxu0
        %1300 = vmatprep.mubr.bf16.mxu0 0
        %1301 = vmatmul.mubr.bf16.gmra.mrb[0].mxu0 %v957
        %v1302 = vpop.f32.mrb[0].mxu0
        %v1303 = vadd.f32 %v549, %v1302
        %v1304 = vpop.f32.mrb[0].mxu0
        %v1305 = vpop.f32.mrb[0].mxu0
        %v1306 = vadd.f32 %v549, %v1305
        %v1307 = vpop.f32.mrb[0].mxu0
        %1308 = vmatprep.mubr.bf16.mxu0 0
        %1309 = vmatmul.mubr.bf16.gmra.mrb[0].mxu0 %v960
        %v1310 = vpop.f32.mrb[0].mxu0
        %v1311 = vadd.f32 %v549, %v1310
        %v1312 = vpop.f32.mrb[0].mxu0
        %v1313 = vpop.f32.mrb[0].mxu0
        %v1314 = vadd.f32 %v549, %v1313
        %v1315 = vpop.f32.mrb[0].mxu0
        %1316 = vmatprep.mubr.bf16.mxu0 0
        %1317 = vmatmul.mubr.bf16.gmra.mrb[0].mxu0 %v963
        %v1318 = vpop.f32.mrb[0].mxu0
        %v1319 = vadd.f32 %v549, %v1318
        %v1320 = vpop.f32.mrb[0].mxu0
        %v1321 = vpop.f32.mrb[0].mxu0
        %v1322 = vadd.f32 %v549, %v1321
        %v1323 = vpop.f32.mrb[0].mxu0
        %1324 = vmatprep.mubr.bf16.mxu0 0
        %1325 = vmatmul.mubr.bf16.gmra.mrb[0].mxu0 %v966
        %v1326 = vpop.f32.mrb[0].mxu0
        %v1327 = vadd.f32 %v549, %v1326
        %v1328 = vpop.f32.mrb[0].mxu0
        %v1329 = vpop.f32.mrb[0].mxu0
        %v1330 = vadd.f32 %v549, %v1329
        %v1331 = vpop.f32.mrb[0].mxu0
        %1332 = vmatprep.mubr.bf16.mxu0 0
        %1333 = vmatmul.mubr.bf16.gmra.mrb[0].mxu0 %v969
        %v1334 = vpop.f32.mrb[0].mxu0
        %v1335 = vadd.f32 %v549, %v1334
        %v1336 = vpop.f32.mrb[0].mxu0
        %v1337 = vpop.f32.mrb[0].mxu0
        %v1338 = vadd.f32 %v549, %v1337
        %v1339 = vpop.f32.mrb[0].mxu0
        %1340 = vmatprep.mubr.bf16.mxu0 0
        %1341 = vmatmul.mubr.bf16.gmra.mrb[0].mxu0 %v972
        %v1342 = vpop.f32.mrb[0].mxu0
        %v1343 = vadd.f32 %v549, %v1342
        %v1344 = vpop.f32.mrb[0].mxu0
        %v1345 = vpop.f32.mrb[0].mxu0
        %v1346 = vadd.f32 %v549, %v1345
        %v1347 = vpop.f32.mrb[0].mxu0
        %1348 = vmatprep.mubr.bf16.mxu0 0
        %1349 = vmatmul.mubr.bf16.gmra.mrb[0].mxu0 %v975
        %v1350 = vpop.f32.mrb[0].mxu0
        %v1351 = vadd.f32 %v549, %v1350
        %v1352 = vpop.f32.mrb[0].mxu0
        %v1353 = vpop.f32.mrb[0].mxu0
        %v1354 = vadd.f32 %v549, %v1353
        %v1355 = vpop.f32.mrb[0].mxu0
        %1356 = vmatprep.mubr.bf16.mxu0 0
        %1357 = vmatmul.mubr.bf16.gmra.mrb[0].mxu0 %v978
        %v1358 = vpop.f32.mrb[0].mxu0
        %v1359 = vadd.f32 %v549, %v1358
        %v1360 = vpop.f32.mrb[0].mxu0
        %v1361 = vpop.f32.mrb[0].mxu0
        %v1362 = vadd.f32 %v549, %v1361
        %v1363 = vpop.f32.mrb[0].mxu0
        %1364 = vmatprep.mubr.bf16.mxu0 0
        %1365 = vmatmul.mubr.bf16.gmra.mrb[0].mxu0 %v981
        %v1366 = vpop.f32.mrb[0].mxu0
        %v1367 = vadd.f32 %v549, %v1366
        %v1368 = vpop.f32.mrb[0].mxu0
        %v1369 = vpop.f32.mrb[0].mxu0
        %v1370 = vadd.f32 %v549, %v1369
        %v1371 = vpop.f32.mrb[0].mxu0
        %1372 = vmatprep.mubr.bf16.mxu0 0
        %1373 = vmatmul.mubr.bf16.gmra.mrb[0].mxu0 %v984
        %v1374 = vpop.f32.mrb[0].mxu0
        %v1375 = vadd.f32 %v549, %v1374
        %v1376 = vpop.f32.mrb[0].mxu0
        %v1377 = vpop.f32.mrb[0].mxu0
        %v1378 = vadd.f32 %v549, %v1377
        %v1379 = vpop.f32.mrb[0].mxu0
        %1380 = vmatprep.mubr.bf16.mxu0 0
        %1381 = vmatmul.mubr.bf16.gmra.mrb[0].mxu0 %v987
        %v1382 = vpop.f32.mrb[0].mxu0
        %v1383 = vadd.f32 %v549, %v1382
        %v1384 = vpop.f32.mrb[0].mxu0
        %v1385 = vpop.f32.mrb[0].mxu0
        %v1386 = vadd.f32 %v549, %v1385
        %v1387 = vpop.f32.mrb[0].mxu0
        %1388 = vmatprep.mubr.bf16.mxu0 0
        %1389 = vmatmul.mubr.bf16.gmra.mrb[0].mxu0 %v990
        %v1390 = vpop.f32.mrb[0].mxu0
        %v1391 = vadd.f32 %v549, %v1390
        %v1392 = vpop.f32.mrb[0].mxu0
        %v1393 = vpop.f32.mrb[0].mxu0
        %v1394 = vadd.f32 %v549, %v1393
        %v1395 = vpop.f32.mrb[0].mxu0
        %1396 = vmatprep.mubr.bf16.mxu0 0
        %1397 = vmatmul.mubr.bf16.gmra.mrb[0].mxu0 %v993
        %v1398 = vpop.f32.mrb[0].mxu0
        %v1399 = vadd.f32 %v549, %v1398
        %v1400 = vpop.f32.mrb[0].mxu0
        %v1401 = vpop.f32.mrb[0].mxu0
        %v1402 = vadd.f32 %v549, %v1401
        %v1403 = vpop.f32.mrb[0].mxu0
        %1404 = vmatprep.mubr.bf16.mxu0 0
        %1405 = vmatmul.mubr.bf16.gmra.mrb[0].mxu0 %v996
        %v1406 = vpop.f32.mrb[0].mxu0
        %v1407 = vadd.f32 %v549, %v1406
        %v1408 = vpop.f32.mrb[0].mxu0
        %v1409 = vpop.f32.mrb[0].mxu0
        %v1410 = vadd.f32 %v549, %v1409
        %v1411 = vpop.f32.mrb[0].mxu0
        %1412 = vmatprep.mubr.bf16.mxu0 0
        %1413 = vmatmul.mubr.bf16.gmra.mrb[0].mxu0 %v999
        %v1414 = vpop.f32.mrb[0].mxu0
        %v1415 = vadd.f32 %v549, %v1414
        %v1416 = vpop.f32.mrb[0].mxu0
        %v1417 = vpop.f32.mrb[0].mxu0
        %v1418 = vadd.f32 %v549, %v1417
        %v1419 = vpop.f32.mrb[0].mxu0
        %1420 = vmatprep.mubr.bf16.mxu0 0
        %1421 = vmatmul.mubr.bf16.gmra.mrb[0].mxu0 %v1002
        %v1422 = vpop.f32.mrb[0].mxu0
        %v1423 = vadd.f32 %v549, %v1422
        %v1424 = vpop.f32.mrb[0].mxu0
        %v1425 = vpop.f32.mrb[0].mxu0
        %v1426 = vadd.f32 %v549, %v1425
        %v1427 = vpop.f32.mrb[0].mxu0
        %1428 = vmatprep.mubr.bf16.mxu0 0
        %1429 = vmatmul.mubr.bf16.gmra.mrb[0].mxu0 %v1005
        %v1430 = vpop.f32.mrb[0].mxu0
        %v1431 = vadd.f32 %v549, %v1430
        %v1432 = vpop.f32.mrb[0].mxu0
        %v1433 = vpop.f32.mrb[0].mxu0
        %v1434 = vadd.f32 %v549, %v1433
        %v1435 = vpop.f32.mrb[0].mxu0
        %1436 = vmatprep.mubr.bf16.mxu0 0
        %1437 = vmatmul.mubr.bf16.gmra.mrb[0].mxu0 %v1008
        %v1438 = vpop.f32.mrb[0].mxu0
        %v1439 = vadd.f32 %v549, %v1438
        %v1440 = vpop.f32.mrb[0].mxu0
        %v1441 = vpop.f32.mrb[0].mxu0
        %v1442 = vadd.f32 %v549, %v1441
        %v1443 = vpop.f32.mrb[0].mxu0
        %1444 = vmatprep.mubr.bf16.mxu0 0
        %1445 = vmatmul.mubr.bf16.gmra.mrb[0].mxu0 %v1011
        %v1446 = vpop.f32.mrb[0].mxu0
        %v1447 = vadd.f32 %v549, %v1446
        %v1448 = vpop.f32.mrb[0].mxu0
        %v1449 = vpop.f32.mrb[0].mxu0
        %v1450 = vadd.f32 %v549, %v1449
        %v1451 = vpop.f32.mrb[0].mxu0
        %1452 = vmatprep.mubr.bf16.mxu0 0
        %1453 = vmatmul.mubr.bf16.gmra.mrb[0].mxu0 %v1014
        %v1454 = vpop.f32.mrb[0].mxu0
        %v1455 = vadd.f32 %v549, %v1454
        %v1456 = vpop.f32.mrb[0].mxu0
        %v1457 = vpop.f32.mrb[0].mxu0
        %v1458 = vadd.f32 %v549, %v1457
        %v1459 = vpop.f32.mrb[0].mxu0
        %1460 = vmatprep.mubr.bf16.mxu0 0
        %1461 = vmatmul.mubr.bf16.gmra.mrb[0].mxu0 %v1017
        %v1462 = vpop.f32.mrb[0].mxu0
        %v1463 = vadd.f32 %v549, %v1462
        %v1464 = vpop.f32.mrb[0].mxu0
        %v1465 = vpop.f32.mrb[0].mxu0
        %v1466 = vadd.f32 %v549, %v1465
        %v1467 = vpop.f32.mrb[0].mxu0
        %1468 = vmatprep.mubr.bf16.mxu0 0
        %1469 = vmatmul.mubr.bf16.gmra.mrb[0].mxu0 %v1020
        %v1470 = vpop.f32.mrb[0].mxu0
        %v1471 = vadd.f32 %v549, %v1470
        %v1472 = vpop.f32.mrb[0].mxu0
        %v1473 = vpop.f32.mrb[0].mxu0
        %v1474 = vadd.f32 %v549, %v1473
        %v1475 = vpop.f32.mrb[0].mxu0
        %1476 = vmatprep.mubr.bf16.mxu0 0
        %1477 = vmatmul.mubr.bf16.gmra.mrb[0].mxu0 %v1023
        %v1478 = vpop.f32.mrb[0].mxu0
        %v1479 = vadd.f32 %v549, %v1478
        %v1480 = vpop.f32.mrb[0].mxu0
        %v1481 = vpop.f32.mrb[0].mxu0
        %v1482 = vadd.f32 %v549, %v1481
        %v1483 = vpop.f32.mrb[0].mxu0
        %1484 = vmatprep.mubr.bf16.mxu0 0
        %1485 = vmatmul.mubr.bf16.gmra.mrb[0].mxu0 %v1026
        %v1486 = vpop.f32.mrb[0].mxu0
        %v1487 = vadd.f32 %v549, %v1486
        %v1488 = vpop.f32.mrb[0].mxu0
        %v1489 = vpop.f32.mrb[0].mxu0
        %v1490 = vadd.f32 %v549, %v1489
        %v1491 = vpop.f32.mrb[0].mxu0
        %1492 = vmatprep.mubr.bf16.mxu0 0
        %1493 = vmatmul.mubr.bf16.gmra.mrb[0].mxu0 %v1029
        %v1494 = vpop.f32.mrb[0].mxu0
        %v1495 = vadd.f32 %v549, %v1494
        %v1496 = vpop.f32.mrb[0].mxu0
        %v1497 = vpop.f32.mrb[0].mxu0
        %v1498 = vadd.f32 %v549, %v1497
        %v1499 = vpop.f32.mrb[0].mxu0
        %1500 = vmatprep.mubr.bf16.mxu0 0
        %1501 = vmatmul.mubr.bf16.gmra.mrb[0].mxu0 %v1032
        %v1502 = vpop.f32.mrb[0].mxu0
        %v1503 = vadd.f32 %v549, %v1502
        %v1504 = vpop.f32.mrb[0].mxu0
        %v1505 = vpop.f32.mrb[0].mxu0
        %v1506 = vadd.f32 %v549, %v1505
        %v1507 = vpop.f32.mrb[0].mxu0
        %1508 = vmatprep.mubr.bf16.mxu0 0
        %1509 = vmatmul.mubr.bf16.gmra.mrb[0].mxu0 %v1035
        %v1510 = vpop.f32.mrb[0].mxu0
        %v1511 = vadd.f32 %v549, %v1510
        %v1512 = vpop.f32.mrb[0].mxu0
        %v1513 = vpop.f32.mrb[0].mxu0
        %v1514 = vadd.f32 %v549, %v1513
        %v1515 = vpop.f32.mrb[0].mxu0
        %1516 = vmatprep.mubr.bf16.mxu0 0
        %1517 = vmatmul.mubr.bf16.gmra.mrb[0].mxu0 %v1038
        %v1518 = vpop.f32.mrb[0].mxu0
        %v1519 = vadd.f32 %v549, %v1518
        %v1520 = vpop.f32.mrb[0].mxu0
        %v1521 = vpop.f32.mrb[0].mxu0
        %v1522 = vadd.f32 %v549, %v1521
        %v1523 = vpop.f32.mrb[0].mxu0
        %1524 = vmatprep.mubr.bf16.mxu0 0
        %1525 = vmatmul.mubr.bf16.gmra.mrb[0].mxu0 %v1041
        %v1526 = vpop.f32.mrb[0].mxu0
        %v1527 = vadd.f32 %v549, %v1526
        %v1528 = vpop.f32.mrb[0].mxu0
        %v1529 = vpop.f32.mrb[0].mxu0
        %v1530 = vadd.f32 %v549, %v1529
        %v1531 = vpop.f32.mrb[0].mxu0
        %1532 = vmatprep.mubr.bf16.mxu0 0
        %1533 = vmatmul.mubr.bf16.gmra.mrb[0].mxu0 %v1044
        %v1534 = vpop.f32.mrb[0].mxu0
        %v1535 = vadd.f32 %v549, %v1534
        %v1536 = vpop.f32.mrb[0].mxu0
        %v1537 = vpop.f32.mrb[0].mxu0
        %v1538 = vadd.f32 %v549, %v1537
        %v1539 = vpop.f32.mrb[0].mxu0
        %1540 = vmatprep.mubr.bf16.mxu0 0
        %1541 = vmatmul.mubr.bf16.gmra.mrb[0].mxu0 %v1047
        %v1542 = vpop.f32.mrb[0].mxu0
        %v1543 = vadd.f32 %v549, %v1542
        %v1544 = vpop.f32.mrb[0].mxu0
        %v1545 = vpop.f32.mrb[0].mxu0
        %v1546 = vadd.f32 %v549, %v1545
        %v1547 = vpop.f32.mrb[0].mxu0
        %1548 = vmatprep.mubr.bf16.mxu0 0
        %1549 = vmatmul.mubr.bf16.gmra.mrb[0].mxu0 %v1050
        %v1550 = vpop.f32.mrb[0].mxu0
        %v1551 = vadd.f32 %v549, %v1550
        %v1552 = vpop.f32.mrb[0].mxu0
        %v1553 = vpop.f32.mrb[0].mxu0
        %v1554 = vadd.f32 %v549, %v1553
        %v1555 = vpop.f32.mrb[0].mxu0
        %1556 = vmatprep.mubr.bf16.mxu0 0
        %1557 = vmatmul.mubr.bf16.gmra.mrb[0].mxu0 %v1053
        %v1558 = vpop.f32.mrb[0].mxu0
        %v1559 = vadd.f32 %v549, %v1558
        %v1560 = vpop.f32.mrb[0].mxu0
        %v1561 = vpop.f32.mrb[0].mxu0
        %v1562 = vadd.f32 %v549, %v1561
        %v1563 = vpop.f32.mrb[0].mxu0
        %1564 = vmatprep.mubr.bf16.mxu0 0
        %1565 = vmatmul.mubr.bf16.gmra.mrb[0].mxu0 %v1056
        %v1566 = vpop.f32.mrb[0].mxu0
        %v1567 = vadd.f32 %v549, %v1566
        %v1568 = vpop.f32.mrb[0].mxu0
        %v1569 = vpop.f32.mrb[0].mxu0
        %v1570 = vadd.f32 %v549, %v1569
        %v1571 = vpop.f32.mrb[0].mxu0
        %1572 = vmatprep.mubr.bf16.mxu0 0
        %1573 = vmatmul.mubr.bf16.gmra.mrb[0].mxu0 %v1059
        %v1574 = vpop.f32.mrb[0].mxu0
        %v1575 = vadd.f32 %v549, %v1574
        %v1576 = vpop.f32.mrb[0].mxu0
        %v1577 = vpop.f32.mrb[0].mxu0
        %v1578 = vadd.f32 %v549, %v1577
        %v1579 = vpop.f32.mrb[0].mxu0
        %1580 = vmatprep.mubr.bf16.mxu0 0
        %1581 = vmatmul.mubr.bf16.gmra.mrb[0].mxu0 %v1062
        %v1582 = vpop.f32.mrb[0].mxu0
        %v1583 = vadd.f32 %v549, %v1582
        %v1584 = vpop.f32.mrb[0].mxu0
        %v1585 = vpop.f32.mrb[0].mxu0
        %v1586 = vadd.f32 %v549, %v1585
        %v1587 = vpop.f32.mrb[0].mxu0
        %1588 = vmatprep.mubr.bf16.mxu0 0
        %1589 = vmatmul.mubr.bf16.gmra.mrb[0].mxu0 %v1065
        %v1590 = vpop.f32.mrb[0].mxu0
        %v1591 = vadd.f32 %v549, %v1590
        %v1592 = vpop.f32.mrb[0].mxu0
        %v1593 = vpop.f32.mrb[0].mxu0
        %v1594 = vadd.f32 %v549, %v1593
        %v1595 = vpop.f32.mrb[0].mxu0
        %1596 = vmatprep.mubr.bf16.mxu0 0
        %1597 = vmatmul.mubr.bf16.gmra.mrb[0].mxu0 %v1068
        %v1598 = vpop.f32.mrb[0].mxu0
        %v1599 = vadd.f32 %v549, %v1598
        %v1600 = vpop.f32.mrb[0].mxu0
        %v1601 = vpop.f32.mrb[0].mxu0
        %v1602 = vadd.f32 %v549, %v1601
        %v1603 = vpop.f32.mrb[0].mxu0
        %1604 = vmatprep.mubr.bf16.mxu0 0
        %1605 = vmatmul.mubr.bf16.gmra.mrb[0].mxu0 %v1071
        %v1606 = vpop.f32.mrb[0].mxu0
        %v1607 = vadd.f32 %v549, %v1606
        %v1608 = vpop.f32.mrb[0].mxu0
        %v1609 = vpop.f32.mrb[0].mxu0
        %v1610 = vadd.f32 %v549, %v1609
        %v1611 = vpop.f32.mrb[0].mxu0
        %1612 = vmatprep.mubr.bf16.mxu0 0
        %1613 = vmatmul.mubr.bf16.gmra.mrb[0].mxu0 %v1074
        %v1614 = vpop.f32.mrb[0].mxu0
        %v1615 = vadd.f32 %v549, %v1614
        %v1616 = vpop.f32.mrb[0].mxu0
        %v1617 = vpop.f32.mrb[0].mxu0
        %v1618 = vadd.f32 %v549, %v1617
        %v1619 = vpop.f32.mrb[0].mxu0
        %1620 = vdwg.mxu0
        %v1621 = vmax.f32 %v1111, 0.0
        %v1622 = vmax.f32 %v1114, 0.0
        %v1623 = vmax.f32 %v1119, 0.0
        %v1624 = vmax.f32 %v1122, 0.0
        %v1625 = vmax.f32 %v1127, 0.0
        %v1626 = vmax.f32 %v1130, 0.0
        %v1627 = vmax.f32 %v1135, 0.0
        %v1628 = vmax.f32 %v1138, 0.0
        %v1629 = vmax.f32 %v1143, 0.0
        %v1630 = vmax.f32 %v1146, 0.0
        %v1631 = vmax.f32 %v1151, 0.0
        %v1632 = vmax.f32 %v1154, 0.0
        %v1633 = vmax.f32 %v1159, 0.0
        %v1634 = vmax.f32 %v1162, 0.0
        %v1635 = vmax.f32 %v1167, 0.0
        %v1636 = vmax.f32 %v1170, 0.0
        %v1637 = vmax.f32 %v1175, 0.0
        %v1638 = vmax.f32 %v1178, 0.0
        %v1639 = vmax.f32 %v1183, 0.0
        %v1640 = vmax.f32 %v1186, 0.0
        %v1641 = vmax.f32 %v1191, 0.0
        %v1642 = vmax.f32 %v1194, 0.0
        %v1643 = vmax.f32 %v1199, 0.0
        %v1644 = vmax.f32 %v1202, 0.0
        %v1645 = vmax.f32 %v1207, 0.0
        %v1646 = vmax.f32 %v1210, 0.0
        %v1647 = vmax.f32 %v1215, 0.0
        %v1648 = vmax.f32 %v1218, 0.0
        %v1649 = vmax.f32 %v1223, 0.0
        %v1650 = vmax.f32 %v1226, 0.0
        %v1651 = vmax.f32 %v1231, 0.0
        %v1652 = vmax.f32 %v1234, 0.0
        %v1653 = vmax.f32 %v1239, 0.0
        %v1654 = vmax.f32 %v1242, 0.0
        %v1655 = vmax.f32 %v1247, 0.0
        %v1656 = vmax.f32 %v1250, 0.0
        %v1657 = vmax.f32 %v1255, 0.0
        %v1658 = vmax.f32 %v1258, 0.0
        %v1659 = vmax.f32 %v1263, 0.0
        %v1660 = vmax.f32 %v1266, 0.0
        %v1661 = vmax.f32 %v1271, 0.0
        %v1662 = vmax.f32 %v1274, 0.0
        %v1663 = vmax.f32 %v1279, 0.0
        %v1664 = vmax.f32 %v1282, 0.0
        %v1665 = vmax.f32 %v1287, 0.0
        %v1666 = vmax.f32 %v1290, 0.0
        %v1667 = vmax.f32 %v1295, 0.0
        %v1668 = vmax.f32 %v1298, 0.0
        %v1669 = vmax.f32 %v1303, 0.0
        %v1670 = vmax.f32 %v1306, 0.0
        %v1671 = vmax.f32 %v1311, 0.0
        %v1672 = vmax.f32 %v1314, 0.0
        %v1673 = vmax.f32 %v1319, 0.0
        %v1674 = vmax.f32 %v1322, 0.0
        %v1675 = vmax.f32 %v1327, 0.0
        %v1676 = vmax.f32 %v1330, 0.0
        %v1677 = vmax.f32 %v1335, 0.0
        %v1678 = vmax.f32 %v1338, 0.0
        %v1679 = vmax.f32 %v1343, 0.0
        %v1680 = vmax.f32 %v1346, 0.0
        %v1681 = vmax.f32 %v1351, 0.0
        %v1682 = vmax.f32 %v1354, 0.0
        %v1683 = vmax.f32 %v1359, 0.0
        %v1684 = vmax.f32 %v1362, 0.0
        %v1685 = vmax.f32 %v1367, 0.0
        %v1686 = vmax.f32 %v1370, 0.0
        %v1687 = vmax.f32 %v1375, 0.0
        %v1688 = vmax.f32 %v1378, 0.0
        %v1689 = vmax.f32 %v1383, 0.0
        %v1690 = vmax.f32 %v1386, 0.0
        %v1691 = vmax.f32 %v1391, 0.0
        %v1692 = vmax.f32 %v1394, 0.0
        %v1693 = vmax.f32 %v1399, 0.0
        %v1694 = vmax.f32 %v1402, 0.0
        %v1695 = vmax.f32 %v1407, 0.0
        %v1696 = vmax.f32 %v1410, 0.0
        %v1697 = vmax.f32 %v1415, 0.0
        %v1698 = vmax.f32 %v1418, 0.0
        %v1699 = vmax.f32 %v1423, 0.0
        %v1700 = vmax.f32 %v1426, 0.0
        %v1701 = vmax.f32 %v1431, 0.0
        %v1702 = vmax.f32 %v1434, 0.0
        %v1703 = vmax.f32 %v1439, 0.0
        %v1704 = vmax.f32 %v1442, 0.0
        %v1705 = vmax.f32 %v1447, 0.0
        %v1706 = vmax.f32 %v1450, 0.0
        %v1707 = vmax.f32 %v1455, 0.0
        %v1708 = vmax.f32 %v1458, 0.0
        %v1709 = vmax.f32 %v1463, 0.0
        %v1710 = vmax.f32 %v1466, 0.0
        %v1711 = vmax.f32 %v1471, 0.0
        %v1712 = vmax.f32 %v1474, 0.0
        %v1713 = vmax.f32 %v1479, 0.0
        %v1714 = vmax.f32 %v1482, 0.0
        %v1715 = vmax.f32 %v1487, 0.0
        %v1716 = vmax.f32 %v1490, 0.0
        %v1717 = vmax.f32 %v1495, 0.0
        %v1718 = vmax.f32 %v1498, 0.0
        %v1719 = vmax.f32 %v1503, 0.0
        %v1720 = vmax.f32 %v1506, 0.0
        %v1721 = vmax.f32 %v1511, 0.0
        %v1722 = vmax.f32 %v1514, 0.0
        %v1723 = vmax.f32 %v1519, 0.0
        %v1724 = vmax.f32 %v1522, 0.0
        %v1725 = vmax.f32 %v1527, 0.0
        %v1726 = vmax.f32 %v1530, 0.0
        %v1727 = vmax.f32 %v1535, 0.0
        %v1728 = vmax.f32 %v1538, 0.0
        %v1729 = vmax.f32 %v1543, 0.0
        %v1730 = vmax.f32 %v1546, 0.0
        %v1731 = vmax.f32 %v1551, 0.0
        %v1732 = vmax.f32 %v1554, 0.0
        %v1733 = vmax.f32 %v1559, 0.0
        %v1734 = vmax.f32 %v1562, 0.0
        %v1735 = vmax.f32 %v1567, 0.0
        %v1736 = vmax.f32 %v1570, 0.0
        %v1737 = vmax.f32 %v1575, 0.0
        %v1738 = vmax.f32 %v1578, 0.0
        %v1739 = vmax.f32 %v1583, 0.0
        %v1740 = vmax.f32 %v1586, 0.0
        %v1741 = vmax.f32 %v1591, 0.0
        %v1742 = vmax.f32 %v1594, 0.0
        %v1743 = vmax.f32 %v1599, 0.0
        %v1744 = vmax.f32 %v1602, 0.0
        %v1745 = vmax.f32 %v1607, 0.0
        %v1746 = vmax.f32 %v1610, 0.0
        %v1747 = vmax.f32 %v1615, 0.0
        %v1748 = vmax.f32 %v1618, 0.0
        %v1749 = vpack.c.bf16 %v1622, %v1621
        %v1750 = vpack.c.bf16 %v1624, %v1623
        %v1751 = vpack.c.bf16 %v1626, %v1625
        %v1752 = vpack.c.bf16 %v1628, %v1627
        %v1753 = vpack.c.bf16 %v1630, %v1629
        %v1754 = vpack.c.bf16 %v1632, %v1631
        %v1755 = vpack.c.bf16 %v1634, %v1633
        %v1756 = vpack.c.bf16 %v1636, %v1635
        %v1757 = vpack.c.bf16 %v1638, %v1637
        %v1758 = vpack.c.bf16 %v1640, %v1639
        %v1759 = vpack.c.bf16 %v1642, %v1641
        %v1760 = vpack.c.bf16 %v1644, %v1643
        %v1761 = vpack.c.bf16 %v1646, %v1645
        %v1762 = vpack.c.bf16 %v1648, %v1647
        %v1763 = vpack.c.bf16 %v1650, %v1649
        %v1764 = vpack.c.bf16 %v1652, %v1651
        %v1765 = vpack.c.bf16 %v1654, %v1653
        %v1766 = vpack.c.bf16 %v1656, %v1655
        %v1767 = vpack.c.bf16 %v1658, %v1657
        %v1768 = vpack.c.bf16 %v1660, %v1659
        %v1769 = vpack.c.bf16 %v1662, %v1661
        %v1770 = vpack.c.bf16 %v1664, %v1663
        %v1771 = vpack.c.bf16 %v1666, %v1665
        %v1772 = vpack.c.bf16 %v1668, %v1667
        %v1773 = vpack.c.bf16 %v1670, %v1669
        %v1774 = vpack.c.bf16 %v1672, %v1671
        %v1775 = vpack.c.bf16 %v1674, %v1673
        %v1776 = vpack.c.bf16 %v1676, %v1675
        %v1777 = vpack.c.bf16 %v1678, %v1677
        %v1778 = vpack.c.bf16 %v1680, %v1679
        %v1779 = vpack.c.bf16 %v1682, %v1681
        %v1780 = vpack.c.bf16 %v1684, %v1683
        %v1781 = vpack.c.bf16 %v1686, %v1685
        %v1782 = vpack.c.bf16 %v1688, %v1687
        %v1783 = vpack.c.bf16 %v1690, %v1689
        %v1784 = vpack.c.bf16 %v1692, %v1691
        %v1785 = vpack.c.bf16 %v1694, %v1693
        %v1786 = vpack.c.bf16 %v1696, %v1695
        %v1787 = vpack.c.bf16 %v1698, %v1697
        %v1788 = vpack.c.bf16 %v1700, %v1699
        %v1789 = vpack.c.bf16 %v1702, %v1701
        %v1790 = vpack.c.bf16 %v1704, %v1703
        %v1791 = vpack.c.bf16 %v1706, %v1705
        %v1792 = vpack.c.bf16 %v1708, %v1707
        %v1793 = vpack.c.bf16 %v1710, %v1709
        %v1794 = vpack.c.bf16 %v1712, %v1711
        %v1795 = vpack.c.bf16 %v1714, %v1713
        %v1796 = vpack.c.bf16 %v1716, %v1715
        %v1797 = vpack.c.bf16 %v1718, %v1717
        %v1798 = vpack.c.bf16 %v1720, %v1719
        %v1799 = vpack.c.bf16 %v1722, %v1721
        %v1800 = vpack.c.bf16 %v1724, %v1723
        %v1801 = vpack.c.bf16 %v1726, %v1725
        %v1802 = vpack.c.bf16 %v1728, %v1727
        %v1803 = vpack.c.bf16 %v1730, %v1729
        %v1804 = vpack.c.bf16 %v1732, %v1731
        %v1805 = vpack.c.bf16 %v1734, %v1733
        %v1806 = vpack.c.bf16 %v1736, %v1735
        %v1807 = vpack.c.bf16 %v1738, %v1737
        %v1808 = vpack.c.bf16 %v1740, %v1739
        %v1809 = vpack.c.bf16 %v1742, %v1741
        %v1810 = vpack.c.bf16 %v1744, %v1743
        %v1811 = vpack.c.bf16 %v1746, %v1745
        %v1812 = vpack.c.bf16 %v1748, %v1747
        %v1813 = vld [vmem:[%s3] sm:$0xf]
        %v1814 = vld [vmem:[%s3 + $0x4] sm:$0xf]
        %v1815 = vld [vmem:[%s3 + $0x8] sm:$0xf]
        %v1816 = vld [vmem:[%s3 + $0xc] sm:$0xf]
        %v1817 = vld [vmem:[%s4] sm:$0x1]
        %v1819 = vlaneseq
        %v1820 = vshrl.u32 %v1819, 7
        %v1821 = vsub.s32 0, %v1820
        %v1822 = vrot.slane %v1817, %v1821
        %v1828 = vunpack.c.l.b16 %v1813
        %v1829 = vunpack.c.l.b16 %v1814
        %v1830 = vunpack.c.l.b16 %v1815
        %v1831 = vunpack.c.l.b16 %v1816
        %v1832 = vpack.c.b16 %v1829, %v1828
        %v1833 = vpack.c.b16 %v1831, %v1830
        %v1837 = vsel %vm883, %v1749, 0
        %v1840 = vsel %vm883, %v1750, 0
        %v1843 = vsel %vm883, %v1751, 0
        %v1846 = vsel %vm883, %v1752, 0
        %v1849 = vsel %vm883, %v1753, 0
        %v1852 = vsel %vm883, %v1754, 0
        %v1855 = vsel %vm883, %v1755, 0
        %v1858 = vsel %vm883, %v1756, 0
        %v1861 = vsel %vm883, %v1757, 0
        %v1864 = vsel %vm883, %v1758, 0
        %v1867 = vsel %vm883, %v1759, 0
        %v1870 = vsel %vm883, %v1760, 0
        %v1873 = vsel %vm883, %v1761, 0
        %v1876 = vsel %vm883, %v1762, 0
        %v1879 = vsel %vm883, %v1763, 0
        %v1882 = vsel %vm883, %v1764, 0
        %v1885 = vsel %vm883, %v1765, 0
        %v1888 = vsel %vm883, %v1766, 0
        %v1891 = vsel %vm883, %v1767, 0
        %v1894 = vsel %vm883, %v1768, 0
        %v1897 = vsel %vm883, %v1769, 0
        %v1900 = vsel %vm883, %v1770, 0
        %v1903 = vsel %vm883, %v1771, 0
        %v1906 = vsel %vm883, %v1772, 0
        %v1909 = vsel %vm883, %v1773, 0
        %v1912 = vsel %vm883, %v1774, 0
        %v1915 = vsel %vm883, %v1775, 0
        %v1918 = vsel %vm883, %v1776, 0
        %v1921 = vsel %vm883, %v1777, 0
        %v1924 = vsel %vm883, %v1778, 0
        %v1927 = vsel %vm883, %v1779, 0
        %v1930 = vsel %vm883, %v1780, 0
        %v1933 = vsel %vm883, %v1781, 0
        %v1936 = vsel %vm883, %v1782, 0
        %v1939 = vsel %vm883, %v1783, 0
        %v1942 = vsel %vm883, %v1784, 0
        %v1945 = vsel %vm883, %v1785, 0
        %v1948 = vsel %vm883, %v1786, 0
        %v1951 = vsel %vm883, %v1787, 0
        %v1954 = vsel %vm883, %v1788, 0
        %v1957 = vsel %vm883, %v1789, 0
        %v1960 = vsel %vm883, %v1790, 0
        %v1963 = vsel %vm883, %v1791, 0
        %v1966 = vsel %vm883, %v1792, 0
        %v1969 = vsel %vm883, %v1793, 0
        %v1972 = vsel %vm883, %v1794, 0
        %v1975 = vsel %vm883, %v1795, 0
        %v1978 = vsel %vm883, %v1796, 0
        %v1981 = vsel %vm883, %v1797, 0
        %v1984 = vsel %vm883, %v1798, 0
        %v1987 = vsel %vm883, %v1799, 0
        %v1990 = vsel %vm883, %v1800, 0
        %v1993 = vsel %vm883, %v1801, 0
        %v1996 = vsel %vm883, %v1802, 0
        %v1999 = vsel %vm883, %v1803, 0
        %v2002 = vsel %vm883, %v1804, 0
        %v2005 = vsel %vm883, %v1805, 0
        %v2008 = vsel %vm883, %v1806, 0
        %v2011 = vsel %vm883, %v1807, 0
        %v2014 = vsel %vm883, %v1808, 0
        %v2017 = vsel %vm883, %v1809, 0
        %v2020 = vsel %vm883, %v1810, 0
        %v2023 = vsel %vm883, %v1811, 0
        %v2026 = vsel %vm883, %v1812, 0
        %2028 = vmatprep.subr.bf16.mxu0 0
        %2029 = vmatpush1.bf16.msra.mxu0 %v1832
        %2030 = vmatprep.subr.bf16.mxu0 0
        %2031 = vmatpush1.bf16.msra.mxu0 %v1833
        %2032 = vmatprep.subr.bf16.mxu0 0
        %2033 = vmatpush1.bf16.msra.mxu0 0
        %2034 = vmatprep.subr.bf16.mxu0 0
        %2035 = vmatpush1.bf16.msra.mxu0 0
        %2036 = vmatprep.subr.bf16.mxu0 0
        %2037 = vmatpush1.bf16.msra.mxu0 0
        %2038 = vmatprep.subr.bf16.mxu0 0
        %2039 = vmatpush1.bf16.msra.mxu0 0
        %2040 = vmatprep.subr.bf16.mxu0 0
        %2041 = vmatpush1.bf16.msra.mxu0 0
        %2042 = vmatprep.subr.bf16.mxu0 0
        %2043 = vmatpush1.bf16.msra.mxu0 0
        %2044 = vmatprep.subr.bf16.mxu0 0
        %2045 = vmatpush1.bf16.msra.mxu0 0
        %2046 = vmatprep.subr.bf16.mxu0 0
        %2047 = vmatpush1.bf16.msra.mxu0 0
        %2048 = vmatprep.subr.bf16.mxu0 0
        %2049 = vmatpush1.bf16.msra.mxu0 0
        %2050 = vmatprep.subr.bf16.mxu0 0
        %2051 = vmatpush1.bf16.msra.mxu0 0
        %2052 = vmatprep.subr.bf16.mxu0 0
        %2053 = vmatpush1.bf16.msra.mxu0 0
        %2054 = vmatprep.subr.bf16.mxu0 0
        %2055 = vmatpush1.bf16.msra.mxu0 0
        %2056 = vmatprep.subr.bf16.mxu0 0
        %2057 = vmatpush1.bf16.msra.mxu0 0
        %2058 = vmatprep.subr.bf16.mxu0 0
        %2059 = vmatpush1.bf16.msra.mxu0 0
        %2060 = vmatprep.mubr.bf16.mxu0 0
        %2061 = vmatmul.mubr.bf16.gmra.mrb[0].mxu0 %v1837
        %v2062 = vpop.f32.mrb[0].mxu0
        %v2063 = vadd.f32 %v1822, %v2062
        %v2064 = vpop.f32.mrb[0].mxu0
        %v2065 = vpop.f32.mrb[0].mxu0
        %v2066 = vadd.f32 %v1822, %v2065
        %v2067 = vpop.f32.mrb[0].mxu0
        %2068 = vmatprep.mubr.bf16.mxu0 0
        %2069 = vmatmul.mubr.bf16.gmra.mrb[0].mxu0 %v1840
        %v2070 = vpop.f32.mrb[0].mxu0
        %v2071 = vadd.f32 %v1822, %v2070
        %v2072 = vpop.f32.mrb[0].mxu0
        %v2073 = vpop.f32.mrb[0].mxu0
        %v2074 = vadd.f32 %v1822, %v2073
        %v2075 = vpop.f32.mrb[0].mxu0
        %2076 = vmatprep.mubr.bf16.mxu0 0
        %2077 = vmatmul.mubr.bf16.gmra.mrb[0].mxu0 %v1843
        %v2078 = vpop.f32.mrb[0].mxu0
        %v2079 = vadd.f32 %v1822, %v2078
        %v2080 = vpop.f32.mrb[0].mxu0
        %v2081 = vpop.f32.mrb[0].mxu0
        %v2082 = vadd.f32 %v1822, %v2081
        %v2083 = vpop.f32.mrb[0].mxu0
        %2084 = vmatprep.mubr.bf16.mxu0 0
        %2085 = vmatmul.mubr.bf16.gmra.mrb[0].mxu0 %v1846
        %v2086 = vpop.f32.mrb[0].mxu0
        %v2087 = vadd.f32 %v1822, %v2086
        %v2088 = vpop.f32.mrb[0].mxu0
        %v2089 = vpop.f32.mrb[0].mxu0
        %v2090 = vadd.f32 %v1822, %v2089
        %v2091 = vpop.f32.mrb[0].mxu0
        %2092 = vmatprep.mubr.bf16.mxu0 0
        %2093 = vmatmul.mubr.bf16.gmra.mrb[0].mxu0 %v1849
        %v2094 = vpop.f32.mrb[0].mxu0
        %v2095 = vadd.f32 %v1822, %v2094
        %v2096 = vpop.f32.mrb[0].mxu0
        %v2097 = vpop.f32.mrb[0].mxu0
        %v2098 = vadd.f32 %v1822, %v2097
        %v2099 = vpop.f32.mrb[0].mxu0
        %2100 = vmatprep.mubr.bf16.mxu0 0
        %2101 = vmatmul.mubr.bf16.gmra.mrb[0].mxu0 %v1852
        %v2102 = vpop.f32.mrb[0].mxu0
        %v2103 = vadd.f32 %v1822, %v2102
        %v2104 = vpop.f32.mrb[0].mxu0
        %v2105 = vpop.f32.mrb[0].mxu0
        %v2106 = vadd.f32 %v1822, %v2105
        %v2107 = vpop.f32.mrb[0].mxu0
        %2108 = vmatprep.mubr.bf16.mxu0 0
        %2109 = vmatmul.mubr.bf16.gmra.mrb[0].mxu0 %v1855
        %v2110 = vpop.f32.mrb[0].mxu0
        %v2111 = vadd.f32 %v1822, %v2110
        %v2112 = vpop.f32.mrb[0].mxu0
        %v2113 = vpop.f32.mrb[0].mxu0
        %v2114 = vadd.f32 %v1822, %v2113
        %v2115 = vpop.f32.mrb[0].mxu0
        %2116 = vmatprep.mubr.bf16.mxu0 0
        %2117 = vmatmul.mubr.bf16.gmra.mrb[0].mxu0 %v1858
        %v2118 = vpop.f32.mrb[0].mxu0
        %v2119 = vadd.f32 %v1822, %v2118
        %v2120 = vpop.f32.mrb[0].mxu0
        %v2121 = vpop.f32.mrb[0].mxu0
        %v2122 = vadd.f32 %v1822, %v2121
        %v2123 = vpop.f32.mrb[0].mxu0
        %2124 = vmatprep.mubr.bf16.mxu0 0
        %2125 = vmatmul.mubr.bf16.gmra.mrb[0].mxu0 %v1861
        %v2126 = vpop.f32.mrb[0].mxu0
        %v2127 = vadd.f32 %v1822, %v2126
        %v2128 = vpop.f32.mrb[0].mxu0
        %v2129 = vpop.f32.mrb[0].mxu0
        %v2130 = vadd.f32 %v1822, %v2129
        %v2131 = vpop.f32.mrb[0].mxu0
        %2132 = vmatprep.mubr.bf16.mxu0 0
        %2133 = vmatmul.mubr.bf16.gmra.mrb[0].mxu0 %v1864
        %v2134 = vpop.f32.mrb[0].mxu0
        %v2135 = vadd.f32 %v1822, %v2134
        %v2136 = vpop.f32.mrb[0].mxu0
        %v2137 = vpop.f32.mrb[0].mxu0
        %v2138 = vadd.f32 %v1822, %v2137
        %v2139 = vpop.f32.mrb[0].mxu0
        %2140 = vmatprep.mubr.bf16.mxu0 0
        %2141 = vmatmul.mubr.bf16.gmra.mrb[0].mxu0 %v1867
        %v2142 = vpop.f32.mrb[0].mxu0
        %v2143 = vadd.f32 %v1822, %v2142
        %v2144 = vpop.f32.mrb[0].mxu0
        %v2145 = vpop.f32.mrb[0].mxu0
        %v2146 = vadd.f32 %v1822, %v2145
        %v2147 = vpop.f32.mrb[0].mxu0
        %2148 = vmatprep.mubr.bf16.mxu0 0
        %2149 = vmatmul.mubr.bf16.gmra.mrb[0].mxu0 %v1870
        %v2150 = vpop.f32.mrb[0].mxu0
        %v2151 = vadd.f32 %v1822, %v2150
        %v2152 = vpop.f32.mrb[0].mxu0
        %v2153 = vpop.f32.mrb[0].mxu0
        %v2154 = vadd.f32 %v1822, %v2153
        %v2155 = vpop.f32.mrb[0].mxu0
        %2156 = vmatprep.mubr.bf16.mxu0 0
        %2157 = vmatmul.mubr.bf16.gmra.mrb[0].mxu0 %v1873
        %v2158 = vpop.f32.mrb[0].mxu0
        %v2159 = vadd.f32 %v1822, %v2158
        %v2160 = vpop.f32.mrb[0].mxu0
        %v2161 = vpop.f32.mrb[0].mxu0
        %v2162 = vadd.f32 %v1822, %v2161
        %v2163 = vpop.f32.mrb[0].mxu0
        %2164 = vmatprep.mubr.bf16.mxu0 0
        %2165 = vmatmul.mubr.bf16.gmra.mrb[0].mxu0 %v1876
        %v2166 = vpop.f32.mrb[0].mxu0
        %v2167 = vadd.f32 %v1822, %v2166
        %v2168 = vpop.f32.mrb[0].mxu0
        %v2169 = vpop.f32.mrb[0].mxu0
        %v2170 = vadd.f32 %v1822, %v2169
        %v2171 = vpop.f32.mrb[0].mxu0
        %2172 = vmatprep.mubr.bf16.mxu0 0
        %2173 = vmatmul.mubr.bf16.gmra.mrb[0].mxu0 %v1879
        %v2174 = vpop.f32.mrb[0].mxu0
        %v2175 = vadd.f32 %v1822, %v2174
        %v2176 = vpop.f32.mrb[0].mxu0
        %v2177 = vpop.f32.mrb[0].mxu0
        %v2178 = vadd.f32 %v1822, %v2177
        %v2179 = vpop.f32.mrb[0].mxu0
        %2180 = vmatprep.mubr.bf16.mxu0 0
        %2181 = vmatmul.mubr.bf16.gmra.mrb[0].mxu0 %v1882
        %v2182 = vpop.f32.mrb[0].mxu0
        %v2183 = vadd.f32 %v1822, %v2182
        %v2184 = vpop.f32.mrb[0].mxu0
        %v2185 = vpop.f32.mrb[0].mxu0
        %v2186 = vadd.f32 %v1822, %v2185
        %v2187 = vpop.f32.mrb[0].mxu0
        %2188 = vmatprep.mubr.bf16.mxu0 0
        %2189 = vmatmul.mubr.bf16.gmra.mrb[0].mxu0 %v1885
        %v2190 = vpop.f32.mrb[0].mxu0
        %v2191 = vadd.f32 %v1822, %v2190
        %v2192 = vpop.f32.mrb[0].mxu0
        %v2193 = vpop.f32.mrb[0].mxu0
        %v2194 = vadd.f32 %v1822, %v2193
        %v2195 = vpop.f32.mrb[0].mxu0
        %2196 = vmatprep.mubr.bf16.mxu0 0
        %2197 = vmatmul.mubr.bf16.gmra.mrb[0].mxu0 %v1888
        %v2198 = vpop.f32.mrb[0].mxu0
        %v2199 = vadd.f32 %v1822, %v2198
        %v2200 = vpop.f32.mrb[0].mxu0
        %v2201 = vpop.f32.mrb[0].mxu0
        %v2202 = vadd.f32 %v1822, %v2201
        %v2203 = vpop.f32.mrb[0].mxu0
        %2204 = vmatprep.mubr.bf16.mxu0 0
        %2205 = vmatmul.mubr.bf16.gmra.mrb[0].mxu0 %v1891
        %v2206 = vpop.f32.mrb[0].mxu0
        %v2207 = vadd.f32 %v1822, %v2206
        %v2208 = vpop.f32.mrb[0].mxu0
        %v2209 = vpop.f32.mrb[0].mxu0
        %v2210 = vadd.f32 %v1822, %v2209
        %v2211 = vpop.f32.mrb[0].mxu0
        %2212 = vmatprep.mubr.bf16.mxu0 0
        %2213 = vmatmul.mubr.bf16.gmra.mrb[0].mxu0 %v1894
        %v2214 = vpop.f32.mrb[0].mxu0
        %v2215 = vadd.f32 %v1822, %v2214
        %v2216 = vpop.f32.mrb[0].mxu0
        %v2217 = vpop.f32.mrb[0].mxu0
        %v2218 = vadd.f32 %v1822, %v2217
        %v2219 = vpop.f32.mrb[0].mxu0
        %2220 = vmatprep.mubr.bf16.mxu0 0
        %2221 = vmatmul.mubr.bf16.gmra.mrb[0].mxu0 %v1897
        %v2222 = vpop.f32.mrb[0].mxu0
        %v2223 = vadd.f32 %v1822, %v2222
        %v2224 = vpop.f32.mrb[0].mxu0
        %v2225 = vpop.f32.mrb[0].mxu0
        %v2226 = vadd.f32 %v1822, %v2225
        %v2227 = vpop.f32.mrb[0].mxu0
        %2228 = vmatprep.mubr.bf16.mxu0 0
        %2229 = vmatmul.mubr.bf16.gmra.mrb[0].mxu0 %v1900
        %v2230 = vpop.f32.mrb[0].mxu0
        %v2231 = vadd.f32 %v1822, %v2230
        %v2232 = vpop.f32.mrb[0].mxu0
        %v2233 = vpop.f32.mrb[0].mxu0
        %v2234 = vadd.f32 %v1822, %v2233
        %v2235 = vpop.f32.mrb[0].mxu0
        %2236 = vmatprep.mubr.bf16.mxu0 0
        %2237 = vmatmul.mubr.bf16.gmra.mrb[0].mxu0 %v1903
        %v2238 = vpop.f32.mrb[0].mxu0
        %v2239 = vadd.f32 %v1822, %v2238
        %v2240 = vpop.f32.mrb[0].mxu0
        %v2241 = vpop.f32.mrb[0].mxu0
        %v2242 = vadd.f32 %v1822, %v2241
        %v2243 = vpop.f32.mrb[0].mxu0
        %2244 = vmatprep.mubr.bf16.mxu0 0
        %2245 = vmatmul.mubr.bf16.gmra.mrb[0].mxu0 %v1906
        %v2246 = vpop.f32.mrb[0].mxu0
        %v2247 = vadd.f32 %v1822, %v2246
        %v2248 = vpop.f32.mrb[0].mxu0
        %v2249 = vpop.f32.mrb[0].mxu0
        %v2250 = vadd.f32 %v1822, %v2249
        %v2251 = vpop.f32.mrb[0].mxu0
        %2252 = vmatprep.mubr.bf16.mxu0 0
        %2253 = vmatmul.mubr.bf16.gmra.mrb[0].mxu0 %v1909
        %v2254 = vpop.f32.mrb[0].mxu0
        %v2255 = vadd.f32 %v1822, %v2254
        %v2256 = vpop.f32.mrb[0].mxu0
        %v2257 = vpop.f32.mrb[0].mxu0
        %v2258 = vadd.f32 %v1822, %v2257
        %v2259 = vpop.f32.mrb[0].mxu0
        %2260 = vmatprep.mubr.bf16.mxu0 0
        %2261 = vmatmul.mubr.bf16.gmra.mrb[0].mxu0 %v1912
        %v2262 = vpop.f32.mrb[0].mxu0
        %v2263 = vadd.f32 %v1822, %v2262
        %v2264 = vpop.f32.mrb[0].mxu0
        %v2265 = vpop.f32.mrb[0].mxu0
        %v2266 = vadd.f32 %v1822, %v2265
        %v2267 = vpop.f32.mrb[0].mxu0
        %2268 = vmatprep.mubr.bf16.mxu0 0
        %2269 = vmatmul.mubr.bf16.gmra.mrb[0].mxu0 %v1915
        %v2270 = vpop.f32.mrb[0].mxu0
        %v2271 = vadd.f32 %v1822, %v2270
        %v2272 = vpop.f32.mrb[0].mxu0
        %v2273 = vpop.f32.mrb[0].mxu0
        %v2274 = vadd.f32 %v1822, %v2273
        %v2275 = vpop.f32.mrb[0].mxu0
        %2276 = vmatprep.mubr.bf16.mxu0 0
        %2277 = vmatmul.mubr.bf16.gmra.mrb[0].mxu0 %v1918
        %v2278 = vpop.f32.mrb[0].mxu0
        %v2279 = vadd.f32 %v1822, %v2278
        %v2280 = vpop.f32.mrb[0].mxu0
        %v2281 = vpop.f32.mrb[0].mxu0
        %v2282 = vadd.f32 %v1822, %v2281
        %v2283 = vpop.f32.mrb[0].mxu0
        %2284 = vmatprep.mubr.bf16.mxu0 0
        %2285 = vmatmul.mubr.bf16.gmra.mrb[0].mxu0 %v1921
        %v2286 = vpop.f32.mrb[0].mxu0
        %v2287 = vadd.f32 %v1822, %v2286
        %v2288 = vpop.f32.mrb[0].mxu0
        %v2289 = vpop.f32.mrb[0].mxu0
        %v2290 = vadd.f32 %v1822, %v2289
        %v2291 = vpop.f32.mrb[0].mxu0
        %2292 = vmatprep.mubr.bf16.mxu0 0
        %2293 = vmatmul.mubr.bf16.gmra.mrb[0].mxu0 %v1924
        %v2294 = vpop.f32.mrb[0].mxu0
        %v2295 = vadd.f32 %v1822, %v2294
        %v2296 = vpop.f32.mrb[0].mxu0
        %v2297 = vpop.f32.mrb[0].mxu0
        %v2298 = vadd.f32 %v1822, %v2297
        %v2299 = vpop.f32.mrb[0].mxu0
        %2300 = vmatprep.mubr.bf16.mxu0 0
        %2301 = vmatmul.mubr.bf16.gmra.mrb[0].mxu0 %v1927
        %v2302 = vpop.f32.mrb[0].mxu0
        %v2303 = vadd.f32 %v1822, %v2302
        %v2304 = vpop.f32.mrb[0].mxu0
        %v2305 = vpop.f32.mrb[0].mxu0
        %v2306 = vadd.f32 %v1822, %v2305
        %v2307 = vpop.f32.mrb[0].mxu0
        %2308 = vmatprep.mubr.bf16.mxu0 0
        %2309 = vmatmul.mubr.bf16.gmra.mrb[0].mxu0 %v1930
        %v2310 = vpop.f32.mrb[0].mxu0
        %v2311 = vadd.f32 %v1822, %v2310
        %v2312 = vpop.f32.mrb[0].mxu0
        %v2313 = vpop.f32.mrb[0].mxu0
        %v2314 = vadd.f32 %v1822, %v2313
        %v2315 = vpop.f32.mrb[0].mxu0
        %2316 = vmatprep.mubr.bf16.mxu0 0
        %2317 = vmatmul.mubr.bf16.gmra.mrb[0].mxu0 %v1933
        %v2318 = vpop.f32.mrb[0].mxu0
        %v2319 = vadd.f32 %v1822, %v2318
        %v2320 = vpop.f32.mrb[0].mxu0
        %v2321 = vpop.f32.mrb[0].mxu0
        %v2322 = vadd.f32 %v1822, %v2321
        %v2323 = vpop.f32.mrb[0].mxu0
        %2324 = vmatprep.mubr.bf16.mxu0 0
        %2325 = vmatmul.mubr.bf16.gmra.mrb[0].mxu0 %v1936
        %v2326 = vpop.f32.mrb[0].mxu0
        %v2327 = vadd.f32 %v1822, %v2326
        %v2328 = vpop.f32.mrb[0].mxu0
        %v2329 = vpop.f32.mrb[0].mxu0
        %v2330 = vadd.f32 %v1822, %v2329
        %v2331 = vpop.f32.mrb[0].mxu0
        %2332 = vmatprep.mubr.bf16.mxu0 0
        %2333 = vmatmul.mubr.bf16.gmra.mrb[0].mxu0 %v1939
        %v2334 = vpop.f32.mrb[0].mxu0
        %v2335 = vadd.f32 %v1822, %v2334
        %v2336 = vpop.f32.mrb[0].mxu0
        %v2337 = vpop.f32.mrb[0].mxu0
        %v2338 = vadd.f32 %v1822, %v2337
        %v2339 = vpop.f32.mrb[0].mxu0
        %2340 = vmatprep.mubr.bf16.mxu0 0
        %2341 = vmatmul.mubr.bf16.gmra.mrb[0].mxu0 %v1942
        %v2342 = vpop.f32.mrb[0].mxu0
        %v2343 = vadd.f32 %v1822, %v2342
        %v2344 = vpop.f32.mrb[0].mxu0
        %v2345 = vpop.f32.mrb[0].mxu0
        %v2346 = vadd.f32 %v1822, %v2345
        %v2347 = vpop.f32.mrb[0].mxu0
        %2348 = vmatprep.mubr.bf16.mxu0 0
        %2349 = vmatmul.mubr.bf16.gmra.mrb[0].mxu0 %v1945
        %v2350 = vpop.f32.mrb[0].mxu0
        %v2351 = vadd.f32 %v1822, %v2350
        %v2352 = vpop.f32.mrb[0].mxu0
        %v2353 = vpop.f32.mrb[0].mxu0
        %v2354 = vadd.f32 %v1822, %v2353
        %v2355 = vpop.f32.mrb[0].mxu0
        %2356 = vmatprep.mubr.bf16.mxu0 0
        %2357 = vmatmul.mubr.bf16.gmra.mrb[0].mxu0 %v1948
        %v2358 = vpop.f32.mrb[0].mxu0
        %v2359 = vadd.f32 %v1822, %v2358
        %v2360 = vpop.f32.mrb[0].mxu0
        %v2361 = vpop.f32.mrb[0].mxu0
        %v2362 = vadd.f32 %v1822, %v2361
        %v2363 = vpop.f32.mrb[0].mxu0
        %2364 = vmatprep.mubr.bf16.mxu0 0
        %2365 = vmatmul.mubr.bf16.gmra.mrb[0].mxu0 %v1951
        %v2366 = vpop.f32.mrb[0].mxu0
        %v2367 = vadd.f32 %v1822, %v2366
        %v2368 = vpop.f32.mrb[0].mxu0
        %v2369 = vpop.f32.mrb[0].mxu0
        %v2370 = vadd.f32 %v1822, %v2369
        %v2371 = vpop.f32.mrb[0].mxu0
        %2372 = vmatprep.mubr.bf16.mxu0 0
        %2373 = vmatmul.mubr.bf16.gmra.mrb[0].mxu0 %v1954
        %v2374 = vpop.f32.mrb[0].mxu0
        %v2375 = vadd.f32 %v1822, %v2374
        %v2376 = vpop.f32.mrb[0].mxu0
        %v2377 = vpop.f32.mrb[0].mxu0
        %v2378 = vadd.f32 %v1822, %v2377
        %v2379 = vpop.f32.mrb[0].mxu0
        %2380 = vmatprep.mubr.bf16.mxu0 0
        %2381 = vmatmul.mubr.bf16.gmra.mrb[0].mxu0 %v1957
        %v2382 = vpop.f32.mrb[0].mxu0
        %v2383 = vadd.f32 %v1822, %v2382
        %v2384 = vpop.f32.mrb[0].mxu0
        %v2385 = vpop.f32.mrb[0].mxu0
        %v2386 = vadd.f32 %v1822, %v2385
        %v2387 = vpop.f32.mrb[0].mxu0
        %2388 = vmatprep.mubr.bf16.mxu0 0
        %2389 = vmatmul.mubr.bf16.gmra.mrb[0].mxu0 %v1960
        %v2390 = vpop.f32.mrb[0].mxu0
        %v2391 = vadd.f32 %v1822, %v2390
        %v2392 = vpop.f32.mrb[0].mxu0
        %v2393 = vpop.f32.mrb[0].mxu0
        %v2394 = vadd.f32 %v1822, %v2393
        %v2395 = vpop.f32.mrb[0].mxu0
        %2396 = vmatprep.mubr.bf16.mxu0 0
        %2397 = vmatmul.mubr.bf16.gmra.mrb[0].mxu0 %v1963
        %v2398 = vpop.f32.mrb[0].mxu0
        %v2399 = vadd.f32 %v1822, %v2398
        %v2400 = vpop.f32.mrb[0].mxu0
        %v2401 = vpop.f32.mrb[0].mxu0
        %v2402 = vadd.f32 %v1822, %v2401
        %v2403 = vpop.f32.mrb[0].mxu0
        %2404 = vmatprep.mubr.bf16.mxu0 0
        %2405 = vmatmul.mubr.bf16.gmra.mrb[0].mxu0 %v1966
        %v2406 = vpop.f32.mrb[0].mxu0
        %v2407 = vadd.f32 %v1822, %v2406
        %v2408 = vpop.f32.mrb[0].mxu0
        %v2409 = vpop.f32.mrb[0].mxu0
        %v2410 = vadd.f32 %v1822, %v2409
        %v2411 = vpop.f32.mrb[0].mxu0
        %2412 = vmatprep.mubr.bf16.mxu0 0
        %2413 = vmatmul.mubr.bf16.gmra.mrb[0].mxu0 %v1969
        %v2414 = vpop.f32.mrb[0].mxu0
        %v2415 = vadd.f32 %v1822, %v2414
        %v2416 = vpop.f32.mrb[0].mxu0
        %v2417 = vpop.f32.mrb[0].mxu0
        %v2418 = vadd.f32 %v1822, %v2417
        %v2419 = vpop.f32.mrb[0].mxu0
        %2420 = vmatprep.mubr.bf16.mxu0 0
        %2421 = vmatmul.mubr.bf16.gmra.mrb[0].mxu0 %v1972
        %v2422 = vpop.f32.mrb[0].mxu0
        %v2423 = vadd.f32 %v1822, %v2422
        %v2424 = vpop.f32.mrb[0].mxu0
        %v2425 = vpop.f32.mrb[0].mxu0
        %v2426 = vadd.f32 %v1822, %v2425
        %v2427 = vpop.f32.mrb[0].mxu0
        %2428 = vmatprep.mubr.bf16.mxu0 0
        %2429 = vmatmul.mubr.bf16.gmra.mrb[0].mxu0 %v1975
        %v2430 = vpop.f32.mrb[0].mxu0
        %v2431 = vadd.f32 %v1822, %v2430
        %v2432 = vpop.f32.mrb[0].mxu0
        %v2433 = vpop.f32.mrb[0].mxu0
        %v2434 = vadd.f32 %v1822, %v2433
        %v2435 = vpop.f32.mrb[0].mxu0
        %2436 = vmatprep.mubr.bf16.mxu0 0
        %2437 = vmatmul.mubr.bf16.gmra.mrb[0].mxu0 %v1978
        %v2438 = vpop.f32.mrb[0].mxu0
        %v2439 = vadd.f32 %v1822, %v2438
        %v2440 = vpop.f32.mrb[0].mxu0
        %v2441 = vpop.f32.mrb[0].mxu0
        %v2442 = vadd.f32 %v1822, %v2441
        %v2443 = vpop.f32.mrb[0].mxu0
        %2444 = vmatprep.mubr.bf16.mxu0 0
        %2445 = vmatmul.mubr.bf16.gmra.mrb[0].mxu0 %v1981
        %v2446 = vpop.f32.mrb[0].mxu0
        %v2447 = vadd.f32 %v1822, %v2446
        %v2448 = vpop.f32.mrb[0].mxu0
        %v2449 = vpop.f32.mrb[0].mxu0
        %v2450 = vadd.f32 %v1822, %v2449
        %v2451 = vpop.f32.mrb[0].mxu0
        %2452 = vmatprep.mubr.bf16.mxu0 0
        %2453 = vmatmul.mubr.bf16.gmra.mrb[0].mxu0 %v1984
        %v2454 = vpop.f32.mrb[0].mxu0
        %v2455 = vadd.f32 %v1822, %v2454
        %v2456 = vpop.f32.mrb[0].mxu0
        %v2457 = vpop.f32.mrb[0].mxu0
        %v2458 = vadd.f32 %v1822, %v2457
        %v2459 = vpop.f32.mrb[0].mxu0
        %2460 = vmatprep.mubr.bf16.mxu0 0
        %2461 = vmatmul.mubr.bf16.gmra.mrb[0].mxu0 %v1987
        %v2462 = vpop.f32.mrb[0].mxu0
        %v2463 = vadd.f32 %v1822, %v2462
        %v2464 = vpop.f32.mrb[0].mxu0
        %v2465 = vpop.f32.mrb[0].mxu0
        %v2466 = vadd.f32 %v1822, %v2465
        %v2467 = vpop.f32.mrb[0].mxu0
        %2468 = vmatprep.mubr.bf16.mxu0 0
        %2469 = vmatmul.mubr.bf16.gmra.mrb[0].mxu0 %v1990
        %v2470 = vpop.f32.mrb[0].mxu0
        %v2471 = vadd.f32 %v1822, %v2470
        %v2472 = vpop.f32.mrb[0].mxu0
        %v2473 = vpop.f32.mrb[0].mxu0
        %v2474 = vadd.f32 %v1822, %v2473
        %v2475 = vpop.f32.mrb[0].mxu0
        %2476 = vmatprep.mubr.bf16.mxu0 0
        %2477 = vmatmul.mubr.bf16.gmra.mrb[0].mxu0 %v1993
        %v2478 = vpop.f32.mrb[0].mxu0
        %v2479 = vadd.f32 %v1822, %v2478
        %v2480 = vpop.f32.mrb[0].mxu0
        %v2481 = vpop.f32.mrb[0].mxu0
        %v2482 = vadd.f32 %v1822, %v2481
        %v2483 = vpop.f32.mrb[0].mxu0
        %2484 = vmatprep.mubr.bf16.mxu0 0
        %2485 = vmatmul.mubr.bf16.gmra.mrb[0].mxu0 %v1996
        %v2486 = vpop.f32.mrb[0].mxu0
        %v2487 = vadd.f32 %v1822, %v2486
        %v2488 = vpop.f32.mrb[0].mxu0
        %v2489 = vpop.f32.mrb[0].mxu0
        %v2490 = vadd.f32 %v1822, %v2489
        %v2491 = vpop.f32.mrb[0].mxu0
        %2492 = vmatprep.mubr.bf16.mxu0 0
        %2493 = vmatmul.mubr.bf16.gmra.mrb[0].mxu0 %v1999
        %v2494 = vpop.f32.mrb[0].mxu0
        %v2495 = vadd.f32 %v1822, %v2494
        %v2496 = vpop.f32.mrb[0].mxu0
        %v2497 = vpop.f32.mrb[0].mxu0
        %v2498 = vadd.f32 %v1822, %v2497
        %v2499 = vpop.f32.mrb[0].mxu0
        %2500 = vmatprep.mubr.bf16.mxu0 0
        %2501 = vmatmul.mubr.bf16.gmra.mrb[0].mxu0 %v2002
        %v2502 = vpop.f32.mrb[0].mxu0
        %v2503 = vadd.f32 %v1822, %v2502
        %v2504 = vpop.f32.mrb[0].mxu0
        %v2505 = vpop.f32.mrb[0].mxu0
        %v2506 = vadd.f32 %v1822, %v2505
        %v2507 = vpop.f32.mrb[0].mxu0
        %2508 = vmatprep.mubr.bf16.mxu0 0
        %2509 = vmatmul.mubr.bf16.gmra.mrb[0].mxu0 %v2005
        %v2510 = vpop.f32.mrb[0].mxu0
        %v2511 = vadd.f32 %v1822, %v2510
        %v2512 = vpop.f32.mrb[0].mxu0
        %v2513 = vpop.f32.mrb[0].mxu0
        %v2514 = vadd.f32 %v1822, %v2513
        %v2515 = vpop.f32.mrb[0].mxu0
        %2516 = vmatprep.mubr.bf16.mxu0 0
        %2517 = vmatmul.mubr.bf16.gmra.mrb[0].mxu0 %v2008
        %v2518 = vpop.f32.mrb[0].mxu0
        %v2519 = vadd.f32 %v1822, %v2518
        %v2520 = vpop.f32.mrb[0].mxu0
        %v2521 = vpop.f32.mrb[0].mxu0
        %v2522 = vadd.f32 %v1822, %v2521
        %v2523 = vpop.f32.mrb[0].mxu0
        %2524 = vmatprep.mubr.bf16.mxu0 0
        %2525 = vmatmul.mubr.bf16.gmra.mrb[0].mxu0 %v2011
        %v2526 = vpop.f32.mrb[0].mxu0
        %v2527 = vadd.f32 %v1822, %v2526
        %v2528 = vpop.f32.mrb[0].mxu0
        %v2529 = vpop.f32.mrb[0].mxu0
        %v2530 = vadd.f32 %v1822, %v2529
        %v2531 = vpop.f32.mrb[0].mxu0
        %2532 = vmatprep.mubr.bf16.mxu0 0
        %2533 = vmatmul.mubr.bf16.gmra.mrb[0].mxu0 %v2014
        %v2534 = vpop.f32.mrb[0].mxu0
        %v2535 = vadd.f32 %v1822, %v2534
        %v2536 = vpop.f32.mrb[0].mxu0
        %v2537 = vpop.f32.mrb[0].mxu0
        %v2538 = vadd.f32 %v1822, %v2537
        %v2539 = vpop.f32.mrb[0].mxu0
        %2540 = vmatprep.mubr.bf16.mxu0 0
        %2541 = vmatmul.mubr.bf16.gmra.mrb[0].mxu0 %v2017
        %v2542 = vpop.f32.mrb[0].mxu0
        %v2543 = vadd.f32 %v1822, %v2542
        %v2544 = vpop.f32.mrb[0].mxu0
        %v2545 = vpop.f32.mrb[0].mxu0
        %v2546 = vadd.f32 %v1822, %v2545
        %v2547 = vpop.f32.mrb[0].mxu0
        %2548 = vmatprep.mubr.bf16.mxu0 0
        %2549 = vmatmul.mubr.bf16.gmra.mrb[0].mxu0 %v2020
        %v2550 = vpop.f32.mrb[0].mxu0
        %v2551 = vadd.f32 %v1822, %v2550
        %v2552 = vpop.f32.mrb[0].mxu0
        %v2553 = vpop.f32.mrb[0].mxu0
        %v2554 = vadd.f32 %v1822, %v2553
        %v2555 = vpop.f32.mrb[0].mxu0
        %2556 = vmatprep.mubr.bf16.mxu0 0
        %2557 = vmatmul.mubr.bf16.gmra.mrb[0].mxu0 %v2023
        %v2558 = vpop.f32.mrb[0].mxu0
        %v2559 = vadd.f32 %v1822, %v2558
        %v2560 = vpop.f32.mrb[0].mxu0
        %v2561 = vpop.f32.mrb[0].mxu0
        %v2562 = vadd.f32 %v1822, %v2561
        %v2563 = vpop.f32.mrb[0].mxu0
        %2564 = vmatprep.mubr.bf16.mxu0 0
        %2565 = vmatmul.mubr.bf16.gmra.mrb[0].mxu0 %v2026
        %v2566 = vpop.f32.mrb[0].mxu0
        %v2567 = vadd.f32 %v1822, %v2566
        %v2568 = vpop.f32.mrb[0].mxu0
        %v2569 = vpop.f32.mrb[0].mxu0
        %v2570 = vadd.f32 %v1822, %v2569
        %v2571 = vpop.f32.mrb[0].mxu0
        %2572 = vdwg.mxu0
        %v2573 = vmax.f32 %v2063, 0.0
        %v2574 = vmax.f32 %v2066, 0.0
        %v2575 = vmax.f32 %v2071, 0.0
        %v2576 = vmax.f32 %v2074, 0.0
        %v2577 = vmax.f32 %v2079, 0.0
        %v2578 = vmax.f32 %v2082, 0.0
        %v2579 = vmax.f32 %v2087, 0.0
        %v2580 = vmax.f32 %v2090, 0.0
        %v2581 = vmax.f32 %v2095, 0.0
        %v2582 = vmax.f32 %v2098, 0.0
        %v2583 = vmax.f32 %v2103, 0.0
        %v2584 = vmax.f32 %v2106, 0.0
        %v2585 = vmax.f32 %v2111, 0.0
        %v2586 = vmax.f32 %v2114, 0.0
        %v2587 = vmax.f32 %v2119, 0.0
        %v2588 = vmax.f32 %v2122, 0.0
        %v2589 = vmax.f32 %v2127, 0.0
        %v2590 = vmax.f32 %v2130, 0.0
        %v2591 = vmax.f32 %v2135, 0.0
        %v2592 = vmax.f32 %v2138, 0.0
        %v2593 = vmax.f32 %v2143, 0.0
        %v2594 = vmax.f32 %v2146, 0.0
        %v2595 = vmax.f32 %v2151, 0.0
        %v2596 = vmax.f32 %v2154, 0.0
        %v2597 = vmax.f32 %v2159, 0.0
        %v2598 = vmax.f32 %v2162, 0.0
        %v2599 = vmax.f32 %v2167, 0.0
        %v2600 = vmax.f32 %v2170, 0.0
        %v2601 = vmax.f32 %v2175, 0.0
        %v2602 = vmax.f32 %v2178, 0.0
        %v2603 = vmax.f32 %v2183, 0.0
        %v2604 = vmax.f32 %v2186, 0.0
        %v2605 = vmax.f32 %v2191, 0.0
        %v2606 = vmax.f32 %v2194, 0.0
        %v2607 = vmax.f32 %v2199, 0.0
        %v2608 = vmax.f32 %v2202, 0.0
        %v2609 = vmax.f32 %v2207, 0.0
        %v2610 = vmax.f32 %v2210, 0.0
        %v2611 = vmax.f32 %v2215, 0.0
        %v2612 = vmax.f32 %v2218, 0.0
        %v2613 = vmax.f32 %v2223, 0.0
        %v2614 = vmax.f32 %v2226, 0.0
        %v2615 = vmax.f32 %v2231, 0.0
        %v2616 = vmax.f32 %v2234, 0.0
        %v2617 = vmax.f32 %v2239, 0.0
        %v2618 = vmax.f32 %v2242, 0.0
        %v2619 = vmax.f32 %v2247, 0.0
        %v2620 = vmax.f32 %v2250, 0.0
        %v2621 = vmax.f32 %v2255, 0.0
        %v2622 = vmax.f32 %v2258, 0.0
        %v2623 = vmax.f32 %v2263, 0.0
        %v2624 = vmax.f32 %v2266, 0.0
        %v2625 = vmax.f32 %v2271, 0.0
        %v2626 = vmax.f32 %v2274, 0.0
        %v2627 = vmax.f32 %v2279, 0.0
        %v2628 = vmax.f32 %v2282, 0.0
        %v2629 = vmax.f32 %v2287, 0.0
        %v2630 = vmax.f32 %v2290, 0.0
        %v2631 = vmax.f32 %v2295, 0.0
        %v2632 = vmax.f32 %v2298, 0.0
        %v2633 = vmax.f32 %v2303, 0.0
        %v2634 = vmax.f32 %v2306, 0.0
        %v2635 = vmax.f32 %v2311, 0.0
        %v2636 = vmax.f32 %v2314, 0.0
        %v2637 = vmax.f32 %v2319, 0.0
        %v2638 = vmax.f32 %v2322, 0.0
        %v2639 = vmax.f32 %v2327, 0.0
        %v2640 = vmax.f32 %v2330, 0.0
        %v2641 = vmax.f32 %v2335, 0.0
        %v2642 = vmax.f32 %v2338, 0.0
        %v2643 = vmax.f32 %v2343, 0.0
        %v2644 = vmax.f32 %v2346, 0.0
        %v2645 = vmax.f32 %v2351, 0.0
        %v2646 = vmax.f32 %v2354, 0.0
        %v2647 = vmax.f32 %v2359, 0.0
        %v2648 = vmax.f32 %v2362, 0.0
        %v2649 = vmax.f32 %v2367, 0.0
        %v2650 = vmax.f32 %v2370, 0.0
        %v2651 = vmax.f32 %v2375, 0.0
        %v2652 = vmax.f32 %v2378, 0.0
        %v2653 = vmax.f32 %v2383, 0.0
        %v2654 = vmax.f32 %v2386, 0.0
        %v2655 = vmax.f32 %v2391, 0.0
        %v2656 = vmax.f32 %v2394, 0.0
        %v2657 = vmax.f32 %v2399, 0.0
        %v2658 = vmax.f32 %v2402, 0.0
        %v2659 = vmax.f32 %v2407, 0.0
        %v2660 = vmax.f32 %v2410, 0.0
        %v2661 = vmax.f32 %v2415, 0.0
        %v2662 = vmax.f32 %v2418, 0.0
        %v2663 = vmax.f32 %v2423, 0.0
        %v2664 = vmax.f32 %v2426, 0.0
        %v2665 = vmax.f32 %v2431, 0.0
        %v2666 = vmax.f32 %v2434, 0.0
        %v2667 = vmax.f32 %v2439, 0.0
        %v2668 = vmax.f32 %v2442, 0.0
        %v2669 = vmax.f32 %v2447, 0.0
        %v2670 = vmax.f32 %v2450, 0.0
        %v2671 = vmax.f32 %v2455, 0.0
        %v2672 = vmax.f32 %v2458, 0.0
        %v2673 = vmax.f32 %v2463, 0.0
        %v2674 = vmax.f32 %v2466, 0.0
        %v2675 = vmax.f32 %v2471, 0.0
        %v2676 = vmax.f32 %v2474, 0.0
        %v2677 = vmax.f32 %v2479, 0.0
        %v2678 = vmax.f32 %v2482, 0.0
        %v2679 = vmax.f32 %v2487, 0.0
        %v2680 = vmax.f32 %v2490, 0.0
        %v2681 = vmax.f32 %v2495, 0.0
        %v2682 = vmax.f32 %v2498, 0.0
        %v2683 = vmax.f32 %v2503, 0.0
        %v2684 = vmax.f32 %v2506, 0.0
        %v2685 = vmax.f32 %v2511, 0.0
        %v2686 = vmax.f32 %v2514, 0.0
        %v2687 = vmax.f32 %v2519, 0.0
        %v2688 = vmax.f32 %v2522, 0.0
        %v2689 = vmax.f32 %v2527, 0.0
        %v2690 = vmax.f32 %v2530, 0.0
        %v2691 = vmax.f32 %v2535, 0.0
        %v2692 = vmax.f32 %v2538, 0.0
        %v2693 = vmax.f32 %v2543, 0.0
        %v2694 = vmax.f32 %v2546, 0.0
        %v2695 = vmax.f32 %v2551, 0.0
        %v2696 = vmax.f32 %v2554, 0.0
        %v2697 = vmax.f32 %v2559, 0.0
        %v2698 = vmax.f32 %v2562, 0.0
        %v2699 = vmax.f32 %v2567, 0.0
        %v2700 = vmax.f32 %v2570, 0.0
        %v2701 = vpack.c.bf16 %v2574, %v2573
        %v2702 = vpack.c.bf16 %v2576, %v2575
        %v2703 = vpack.c.bf16 %v2578, %v2577
        %v2704 = vpack.c.bf16 %v2580, %v2579
        %v2705 = vpack.c.bf16 %v2582, %v2581
        %v2706 = vpack.c.bf16 %v2584, %v2583
        %v2707 = vpack.c.bf16 %v2586, %v2585
        %v2708 = vpack.c.bf16 %v2588, %v2587
        %v2709 = vpack.c.bf16 %v2590, %v2589
        %v2710 = vpack.c.bf16 %v2592, %v2591
        %v2711 = vpack.c.bf16 %v2594, %v2593
        %v2712 = vpack.c.bf16 %v2596, %v2595
        %v2713 = vpack.c.bf16 %v2598, %v2597
        %v2714 = vpack.c.bf16 %v2600, %v2599
        %v2715 = vpack.c.bf16 %v2602, %v2601
        %v2716 = vpack.c.bf16 %v2604, %v2603
        %v2717 = vpack.c.bf16 %v2606, %v2605
        %v2718 = vpack.c.bf16 %v2608, %v2607
        %v2719 = vpack.c.bf16 %v2610, %v2609
        %v2720 = vpack.c.bf16 %v2612, %v2611
        %v2721 = vpack.c.bf16 %v2614, %v2613
        %v2722 = vpack.c.bf16 %v2616, %v2615
        %v2723 = vpack.c.bf16 %v2618, %v2617
        %v2724 = vpack.c.bf16 %v2620, %v2619
        %v2725 = vpack.c.bf16 %v2622, %v2621
        %v2726 = vpack.c.bf16 %v2624, %v2623
        %v2727 = vpack.c.bf16 %v2626, %v2625
        %v2728 = vpack.c.bf16 %v2628, %v2627
        %v2729 = vpack.c.bf16 %v2630, %v2629
        %v2730 = vpack.c.bf16 %v2632, %v2631
        %v2731 = vpack.c.bf16 %v2634, %v2633
        %v2732 = vpack.c.bf16 %v2636, %v2635
        %v2733 = vpack.c.bf16 %v2638, %v2637
        %v2734 = vpack.c.bf16 %v2640, %v2639
        %v2735 = vpack.c.bf16 %v2642, %v2641
        %v2736 = vpack.c.bf16 %v2644, %v2643
        %v2737 = vpack.c.bf16 %v2646, %v2645
        %v2738 = vpack.c.bf16 %v2648, %v2647
        %v2739 = vpack.c.bf16 %v2650, %v2649
        %v2740 = vpack.c.bf16 %v2652, %v2651
        %v2741 = vpack.c.bf16 %v2654, %v2653
        %v2742 = vpack.c.bf16 %v2656, %v2655
        %v2743 = vpack.c.bf16 %v2658, %v2657
        %v2744 = vpack.c.bf16 %v2660, %v2659
        %v2745 = vpack.c.bf16 %v2662, %v2661
        %v2746 = vpack.c.bf16 %v2664, %v2663
        %v2747 = vpack.c.bf16 %v2666, %v2665
        %v2748 = vpack.c.bf16 %v2668, %v2667
        %v2749 = vpack.c.bf16 %v2670, %v2669
        %v2750 = vpack.c.bf16 %v2672, %v2671
        %v2751 = vpack.c.bf16 %v2674, %v2673
        %v2752 = vpack.c.bf16 %v2676, %v2675
        %v2753 = vpack.c.bf16 %v2678, %v2677
        %v2754 = vpack.c.bf16 %v2680, %v2679
        %v2755 = vpack.c.bf16 %v2682, %v2681
        %v2756 = vpack.c.bf16 %v2684, %v2683
        %v2757 = vpack.c.bf16 %v2686, %v2685
        %v2758 = vpack.c.bf16 %v2688, %v2687
        %v2759 = vpack.c.bf16 %v2690, %v2689
        %v2760 = vpack.c.bf16 %v2692, %v2691
        %v2761 = vpack.c.bf16 %v2694, %v2693
        %v2762 = vpack.c.bf16 %v2696, %v2695
        %v2763 = vpack.c.bf16 %v2698, %v2697
        %v2764 = vpack.c.bf16 %v2700, %v2699
        %v2765 = vld [vmem:[%s5] sm:$0xf]
        %v2766 = vld [vmem:[%s5 + $0x4] sm:$0xf]
        %v2767 = vld [vmem:[%s5 + $0x8] sm:$0xf]
        %v2768 = vld [vmem:[%s5 + $0xc] sm:$0xf]
        %v2769 = vld [vmem:[%s6] sm:$0x1]
        %v2771 = vlaneseq
        %v2772 = vshrl.u32 %v2771, 7
        %v2773 = vsub.s32 0, %v2772
        %v2774 = vrot.slane %v2769, %v2773
        %v2780 = vunpack.c.l.b16 %v2765
        %v2781 = vunpack.c.l.b16 %v2766
        %v2782 = vunpack.c.l.b16 %v2767
        %v2783 = vunpack.c.l.b16 %v2768
        %v2784 = vpack.c.b16 %v2781, %v2780
        %v2785 = vpack.c.b16 %v2783, %v2782
        %v2789 = vsel %vm883, %v2701, 0
        %v2792 = vsel %vm883, %v2702, 0
        %v2795 = vsel %vm883, %v2703, 0
        %v2798 = vsel %vm883, %v2704, 0
        %v2801 = vsel %vm883, %v2705, 0
        %v2804 = vsel %vm883, %v2706, 0
        %v2807 = vsel %vm883, %v2707, 0
        %v2810 = vsel %vm883, %v2708, 0
        %v2813 = vsel %vm883, %v2709, 0
        %v2816 = vsel %vm883, %v2710, 0
        %v2819 = vsel %vm883, %v2711, 0
        %v2822 = vsel %vm883, %v2712, 0
        %v2825 = vsel %vm883, %v2713, 0
        %v2828 = vsel %vm883, %v2714, 0
        %v2831 = vsel %vm883, %v2715, 0
        %v2834 = vsel %vm883, %v2716, 0
        %v2837 = vsel %vm883, %v2717, 0
        %v2840 = vsel %vm883, %v2718, 0
        %v2843 = vsel %vm883, %v2719, 0
        %v2846 = vsel %vm883, %v2720, 0
        %v2849 = vsel %vm883, %v2721, 0
        %v2852 = vsel %vm883, %v2722, 0
        %v2855 = vsel %vm883, %v2723, 0
        %v2858 = vsel %vm883, %v2724, 0
        %v2861 = vsel %vm883, %v2725, 0
        %v2864 = vsel %vm883, %v2726, 0
        %v2867 = vsel %vm883, %v2727, 0
        %v2870 = vsel %vm883, %v2728, 0
        %v2873 = vsel %vm883, %v2729, 0
        %v2876 = vsel %vm883, %v2730, 0
        %v2879 = vsel %vm883, %v2731, 0
        %v2882 = vsel %vm883, %v2732, 0
        %v2885 = vsel %vm883, %v2733, 0
        %v2888 = vsel %vm883, %v2734, 0
        %v2891 = vsel %vm883, %v2735, 0
        %v2894 = vsel %vm883, %v2736, 0
        %v2897 = vsel %vm883, %v2737, 0
        %v2900 = vsel %vm883, %v2738, 0
        %v2903 = vsel %vm883, %v2739, 0
        %v2906 = vsel %vm883, %v2740, 0
        %v2909 = vsel %vm883, %v2741, 0
        %v2912 = vsel %vm883, %v2742, 0
        %v2915 = vsel %vm883, %v2743, 0
        %v2918 = vsel %vm883, %v2744, 0
        %v2921 = vsel %vm883, %v2745, 0
        %v2924 = vsel %vm883, %v2746, 0
        %v2927 = vsel %vm883, %v2747, 0
        %v2930 = vsel %vm883, %v2748, 0
        %v2933 = vsel %vm883, %v2749, 0
        %v2936 = vsel %vm883, %v2750, 0
        %v2939 = vsel %vm883, %v2751, 0
        %v2942 = vsel %vm883, %v2752, 0
        %v2945 = vsel %vm883, %v2753, 0
        %v2948 = vsel %vm883, %v2754, 0
        %v2951 = vsel %vm883, %v2755, 0
        %v2954 = vsel %vm883, %v2756, 0
        %v2957 = vsel %vm883, %v2757, 0
        %v2960 = vsel %vm883, %v2758, 0
        %v2963 = vsel %vm883, %v2759, 0
        %v2966 = vsel %vm883, %v2760, 0
        %v2969 = vsel %vm883, %v2761, 0
        %v2972 = vsel %vm883, %v2762, 0
        %v2975 = vsel %vm883, %v2763, 0
        %v2978 = vsel %vm883, %v2764, 0
        %2980 = vmatprep.subr.bf16.mxu0 0
        %2981 = vmatpush1.bf16.msra.mxu0 %v2784
        %2982 = vmatprep.subr.bf16.mxu0 0
        %2983 = vmatpush1.bf16.msra.mxu0 %v2785
        %2984 = vmatprep.subr.bf16.mxu0 0
        %2985 = vmatpush1.bf16.msra.mxu0 0
        %2986 = vmatprep.subr.bf16.mxu0 0
        %2987 = vmatpush1.bf16.msra.mxu0 0
        %2988 = vmatprep.subr.bf16.mxu0 0
        %2989 = vmatpush1.bf16.msra.mxu0 0
        %2990 = vmatprep.subr.bf16.mxu0 0
        %2991 = vmatpush1.bf16.msra.mxu0 0
        %2992 = vmatprep.subr.bf16.mxu0 0
        %2993 = vmatpush1.bf16.msra.mxu0 0
        %2994 = vmatprep.subr.bf16.mxu0 0
        %2995 = vmatpush1.bf16.msra.mxu0 0
        %2996 = vmatprep.subr.bf16.mxu0 0
        %2997 = vmatpush1.bf16.msra.mxu0 0
        %2998 = vmatprep.subr.bf16.mxu0 0
        %2999 = vmatpush1.bf16.msra.mxu0 0
        %3000 = vmatprep.subr.bf16.mxu0 0
        %3001 = vmatpush1.bf16.msra.mxu0 0
        %3002 = vmatprep.subr.bf16.mxu0 0
        %3003 = vmatpush1.bf16.msra.mxu0 0
        %3004 = vmatprep.subr.bf16.mxu0 0
        %3005 = vmatpush1.bf16.msra.mxu0 0
        %3006 = vmatprep.subr.bf16.mxu0 0
        %3007 = vmatpush1.bf16.msra.mxu0 0
        %3008 = vmatprep.subr.bf16.mxu0 0
        %3009 = vmatpush1.bf16.msra.mxu0 0
        %3010 = vmatprep.subr.bf16.mxu0 0
        %3011 = vmatpush1.bf16.msra.mxu0 0
        %3012 = vmatprep.mubr.bf16.mxu0 0
        %3013 = vmatmul.mubr.bf16.gmra.mrb[0].mxu0 %v2789
        %v3014 = vpop.f32.mrb[0].mxu0
        %v3015 = vadd.f32 %v2774, %v3014
        %v3016 = vpop.f32.mrb[0].mxu0
        %v3017 = vpop.f32.mrb[0].mxu0
        %v3018 = vadd.f32 %v2774, %v3017
        %v3019 = vpop.f32.mrb[0].mxu0
        %3020 = vmatprep.mubr.bf16.mxu0 0
        %3021 = vmatmul.mubr.bf16.gmra.mrb[0].mxu0 %v2792
        %v3022 = vpop.f32.mrb[0].mxu0
        %v3023 = vadd.f32 %v2774, %v3022
        %v3024 = vpop.f32.mrb[0].mxu0
        %v3025 = vpop.f32.mrb[0].mxu0
        %v3026 = vadd.f32 %v2774, %v3025
        %v3027 = vpop.f32.mrb[0].mxu0
        %3028 = vmatprep.mubr.bf16.mxu0 0
        %3029 = vmatmul.mubr.bf16.gmra.mrb[0].mxu0 %v2795
        %v3030 = vpop.f32.mrb[0].mxu0
        %v3031 = vadd.f32 %v2774, %v3030
        %v3032 = vpop.f32.mrb[0].mxu0
        %v3033 = vpop.f32.mrb[0].mxu0
        %v3034 = vadd.f32 %v2774, %v3033
        %v3035 = vpop.f32.mrb[0].mxu0
        %3036 = vmatprep.mubr.bf16.mxu0 0
        %3037 = vmatmul.mubr.bf16.gmra.mrb[0].mxu0 %v2798
        %v3038 = vpop.f32.mrb[0].mxu0
        %v3039 = vadd.f32 %v2774, %v3038
        %v3040 = vpop.f32.mrb[0].mxu0
        %v3041 = vpop.f32.mrb[0].mxu0
        %v3042 = vadd.f32 %v2774, %v3041
        %v3043 = vpop.f32.mrb[0].mxu0
        %3044 = vmatprep.mubr.bf16.mxu0 0
        %3045 = vmatmul.mubr.bf16.gmra.mrb[0].mxu0 %v2801
        %v3046 = vpop.f32.mrb[0].mxu0
        %v3047 = vadd.f32 %v2774, %v3046
        %v3048 = vpop.f32.mrb[0].mxu0
        %v3049 = vpop.f32.mrb[0].mxu0
        %v3050 = vadd.f32 %v2774, %v3049
        %v3051 = vpop.f32.mrb[0].mxu0
        %3052 = vmatprep.mubr.bf16.mxu0 0
        %3053 = vmatmul.mubr.bf16.gmra.mrb[0].mxu0 %v2804
        %v3054 = vpop.f32.mrb[0].mxu0
        %v3055 = vadd.f32 %v2774, %v3054
        %v3056 = vpop.f32.mrb[0].mxu0
        %v3057 = vpop.f32.mrb[0].mxu0
        %v3058 = vadd.f32 %v2774, %v3057
        %v3059 = vpop.f32.mrb[0].mxu0
        %3060 = vmatprep.mubr.bf16.mxu0 0
        %3061 = vmatmul.mubr.bf16.gmra.mrb[0].mxu0 %v2807
        %v3062 = vpop.f32.mrb[0].mxu0
        %v3063 = vadd.f32 %v2774, %v3062
        %v3064 = vpop.f32.mrb[0].mxu0
        %v3065 = vpop.f32.mrb[0].mxu0
        %v3066 = vadd.f32 %v2774, %v3065
        %v3067 = vpop.f32.mrb[0].mxu0
        %3068 = vmatprep.mubr.bf16.mxu0 0
        %3069 = vmatmul.mubr.bf16.gmra.mrb[0].mxu0 %v2810
        %v3070 = vpop.f32.mrb[0].mxu0
        %v3071 = vadd.f32 %v2774, %v3070
        %v3072 = vpop.f32.mrb[0].mxu0
        %v3073 = vpop.f32.mrb[0].mxu0
        %v3074 = vadd.f32 %v2774, %v3073
        %v3075 = vpop.f32.mrb[0].mxu0
        %3076 = vmatprep.mubr.bf16.mxu0 0
        %3077 = vmatmul.mubr.bf16.gmra.mrb[0].mxu0 %v2813
        %v3078 = vpop.f32.mrb[0].mxu0
        %v3079 = vadd.f32 %v2774, %v3078
        %v3080 = vpop.f32.mrb[0].mxu0
        %v3081 = vpop.f32.mrb[0].mxu0
        %v3082 = vadd.f32 %v2774, %v3081
        %v3083 = vpop.f32.mrb[0].mxu0
        %3084 = vmatprep.mubr.bf16.mxu0 0
        %3085 = vmatmul.mubr.bf16.gmra.mrb[0].mxu0 %v2816
        %v3086 = vpop.f32.mrb[0].mxu0
        %v3087 = vadd.f32 %v2774, %v3086
        %v3088 = vpop.f32.mrb[0].mxu0
        %v3089 = vpop.f32.mrb[0].mxu0
        %v3090 = vadd.f32 %v2774, %v3089
        %v3091 = vpop.f32.mrb[0].mxu0
        %3092 = vmatprep.mubr.bf16.mxu0 0
        %3093 = vmatmul.mubr.bf16.gmra.mrb[0].mxu0 %v2819
        %v3094 = vpop.f32.mrb[0].mxu0
        %v3095 = vadd.f32 %v2774, %v3094
        %v3096 = vpop.f32.mrb[0].mxu0
        %v3097 = vpop.f32.mrb[0].mxu0
        %v3098 = vadd.f32 %v2774, %v3097
        %v3099 = vpop.f32.mrb[0].mxu0
        %3100 = vmatprep.mubr.bf16.mxu0 0
        %3101 = vmatmul.mubr.bf16.gmra.mrb[0].mxu0 %v2822
        %v3102 = vpop.f32.mrb[0].mxu0
        %v3103 = vadd.f32 %v2774, %v3102
        %v3104 = vpop.f32.mrb[0].mxu0
        %v3105 = vpop.f32.mrb[0].mxu0
        %v3106 = vadd.f32 %v2774, %v3105
        %v3107 = vpop.f32.mrb[0].mxu0
        %3108 = vmatprep.mubr.bf16.mxu0 0
        %3109 = vmatmul.mubr.bf16.gmra.mrb[0].mxu0 %v2825
        %v3110 = vpop.f32.mrb[0].mxu0
        %v3111 = vadd.f32 %v2774, %v3110
        %v3112 = vpop.f32.mrb[0].mxu0
        %v3113 = vpop.f32.mrb[0].mxu0
        %v3114 = vadd.f32 %v2774, %v3113
        %v3115 = vpop.f32.mrb[0].mxu0
        %3116 = vmatprep.mubr.bf16.mxu0 0
        %3117 = vmatmul.mubr.bf16.gmra.mrb[0].mxu0 %v2828
        %v3118 = vpop.f32.mrb[0].mxu0
        %v3119 = vadd.f32 %v2774, %v3118
        %v3120 = vpop.f32.mrb[0].mxu0
        %v3121 = vpop.f32.mrb[0].mxu0
        %v3122 = vadd.f32 %v2774, %v3121
        %v3123 = vpop.f32.mrb[0].mxu0
        %3124 = vmatprep.mubr.bf16.mxu0 0
        %3125 = vmatmul.mubr.bf16.gmra.mrb[0].mxu0 %v2831
        %v3126 = vpop.f32.mrb[0].mxu0
        %v3127 = vadd.f32 %v2774, %v3126
        %v3128 = vpop.f32.mrb[0].mxu0
        %v3129 = vpop.f32.mrb[0].mxu0
        %v3130 = vadd.f32 %v2774, %v3129
        %v3131 = vpop.f32.mrb[0].mxu0
        %3132 = vmatprep.mubr.bf16.mxu0 0
        %3133 = vmatmul.mubr.bf16.gmra.mrb[0].mxu0 %v2834
        %v3134 = vpop.f32.mrb[0].mxu0
        %v3135 = vadd.f32 %v2774, %v3134
        %v3136 = vpop.f32.mrb[0].mxu0
        %v3137 = vpop.f32.mrb[0].mxu0
        %v3138 = vadd.f32 %v2774, %v3137
        %v3139 = vpop.f32.mrb[0].mxu0
        %3140 = vmatprep.mubr.bf16.mxu0 0
        %3141 = vmatmul.mubr.bf16.gmra.mrb[0].mxu0 %v2837
        %v3142 = vpop.f32.mrb[0].mxu0
        %v3143 = vadd.f32 %v2774, %v3142
        %v3144 = vpop.f32.mrb[0].mxu0
        %v3145 = vpop.f32.mrb[0].mxu0
        %v3146 = vadd.f32 %v2774, %v3145
        %v3147 = vpop.f32.mrb[0].mxu0
        %3148 = vmatprep.mubr.bf16.mxu0 0
        %3149 = vmatmul.mubr.bf16.gmra.mrb[0].mxu0 %v2840
        %v3150 = vpop.f32.mrb[0].mxu0
        %v3151 = vadd.f32 %v2774, %v3150
        %v3152 = vpop.f32.mrb[0].mxu0
        %v3153 = vpop.f32.mrb[0].mxu0
        %v3154 = vadd.f32 %v2774, %v3153
        %v3155 = vpop.f32.mrb[0].mxu0
        %3156 = vmatprep.mubr.bf16.mxu0 0
        %3157 = vmatmul.mubr.bf16.gmra.mrb[0].mxu0 %v2843
        %v3158 = vpop.f32.mrb[0].mxu0
        %v3159 = vadd.f32 %v2774, %v3158
        %v3160 = vpop.f32.mrb[0].mxu0
        %v3161 = vpop.f32.mrb[0].mxu0
        %v3162 = vadd.f32 %v2774, %v3161
        %v3163 = vpop.f32.mrb[0].mxu0
        %3164 = vmatprep.mubr.bf16.mxu0 0
        %3165 = vmatmul.mubr.bf16.gmra.mrb[0].mxu0 %v2846
        %v3166 = vpop.f32.mrb[0].mxu0
        %v3167 = vadd.f32 %v2774, %v3166
        %v3168 = vpop.f32.mrb[0].mxu0
        %v3169 = vpop.f32.mrb[0].mxu0
        %v3170 = vadd.f32 %v2774, %v3169
        %v3171 = vpop.f32.mrb[0].mxu0
        %3172 = vmatprep.mubr.bf16.mxu0 0
        %3173 = vmatmul.mubr.bf16.gmra.mrb[0].mxu0 %v2849
        %v3174 = vpop.f32.mrb[0].mxu0
        %v3175 = vadd.f32 %v2774, %v3174
        %v3176 = vpop.f32.mrb[0].mxu0
        %v3177 = vpop.f32.mrb[0].mxu0
        %v3178 = vadd.f32 %v2774, %v3177
        %v3179 = vpop.f32.mrb[0].mxu0
        %3180 = vmatprep.mubr.bf16.mxu0 0
        %3181 = vmatmul.mubr.bf16.gmra.mrb[0].mxu0 %v2852
        %v3182 = vpop.f32.mrb[0].mxu0
        %v3183 = vadd.f32 %v2774, %v3182
        %v3184 = vpop.f32.mrb[0].mxu0
        %v3185 = vpop.f32.mrb[0].mxu0
        %v3186 = vadd.f32 %v2774, %v3185
        %v3187 = vpop.f32.mrb[0].mxu0
        %3188 = vmatprep.mubr.bf16.mxu0 0
        %3189 = vmatmul.mubr.bf16.gmra.mrb[0].mxu0 %v2855
        %v3190 = vpop.f32.mrb[0].mxu0
        %v3191 = vadd.f32 %v2774, %v3190
        %v3192 = vpop.f32.mrb[0].mxu0
        %v3193 = vpop.f32.mrb[0].mxu0
        %v3194 = vadd.f32 %v2774, %v3193
        %v3195 = vpop.f32.mrb[0].mxu0
        %3196 = vmatprep.mubr.bf16.mxu0 0
        %3197 = vmatmul.mubr.bf16.gmra.mrb[0].mxu0 %v2858
        %v3198 = vpop.f32.mrb[0].mxu0
        %v3199 = vadd.f32 %v2774, %v3198
        %v3200 = vpop.f32.mrb[0].mxu0
        %v3201 = vpop.f32.mrb[0].mxu0
        %v3202 = vadd.f32 %v2774, %v3201
        %v3203 = vpop.f32.mrb[0].mxu0
        %3204 = vmatprep.mubr.bf16.mxu0 0
        %3205 = vmatmul.mubr.bf16.gmra.mrb[0].mxu0 %v2861
        %v3206 = vpop.f32.mrb[0].mxu0
        %v3207 = vadd.f32 %v2774, %v3206
        %v3208 = vpop.f32.mrb[0].mxu0
        %v3209 = vpop.f32.mrb[0].mxu0
        %v3210 = vadd.f32 %v2774, %v3209
        %v3211 = vpop.f32.mrb[0].mxu0
        %3212 = vmatprep.mubr.bf16.mxu0 0
        %3213 = vmatmul.mubr.bf16.gmra.mrb[0].mxu0 %v2864
        %v3214 = vpop.f32.mrb[0].mxu0
        %v3215 = vadd.f32 %v2774, %v3214
        %v3216 = vpop.f32.mrb[0].mxu0
        %v3217 = vpop.f32.mrb[0].mxu0
        %v3218 = vadd.f32 %v2774, %v3217
        %v3219 = vpop.f32.mrb[0].mxu0
        %3220 = vmatprep.mubr.bf16.mxu0 0
        %3221 = vmatmul.mubr.bf16.gmra.mrb[0].mxu0 %v2867
        %v3222 = vpop.f32.mrb[0].mxu0
        %v3223 = vadd.f32 %v2774, %v3222
        %v3224 = vpop.f32.mrb[0].mxu0
        %v3225 = vpop.f32.mrb[0].mxu0
        %v3226 = vadd.f32 %v2774, %v3225
        %v3227 = vpop.f32.mrb[0].mxu0
        %3228 = vmatprep.mubr.bf16.mxu0 0
        %3229 = vmatmul.mubr.bf16.gmra.mrb[0].mxu0 %v2870
        %v3230 = vpop.f32.mrb[0].mxu0
        %v3231 = vadd.f32 %v2774, %v3230
        %v3232 = vpop.f32.mrb[0].mxu0
        %v3233 = vpop.f32.mrb[0].mxu0
        %v3234 = vadd.f32 %v2774, %v3233
        %v3235 = vpop.f32.mrb[0].mxu0
        %3236 = vmatprep.mubr.bf16.mxu0 0
        %3237 = vmatmul.mubr.bf16.gmra.mrb[0].mxu0 %v2873
        %v3238 = vpop.f32.mrb[0].mxu0
        %v3239 = vadd.f32 %v2774, %v3238
        %v3240 = vpop.f32.mrb[0].mxu0
        %v3241 = vpop.f32.mrb[0].mxu0
        %v3242 = vadd.f32 %v2774, %v3241
        %v3243 = vpop.f32.mrb[0].mxu0
        %3244 = vmatprep.mubr.bf16.mxu0 0
        %3245 = vmatmul.mubr.bf16.gmra.mrb[0].mxu0 %v2876
        %v3246 = vpop.f32.mrb[0].mxu0
        %v3247 = vadd.f32 %v2774, %v3246
        %v3248 = vpop.f32.mrb[0].mxu0
        %v3249 = vpop.f32.mrb[0].mxu0
        %v3250 = vadd.f32 %v2774, %v3249
        %v3251 = vpop.f32.mrb[0].mxu0
        %3252 = vmatprep.mubr.bf16.mxu0 0
        %3253 = vmatmul.mubr.bf16.gmra.mrb[0].mxu0 %v2879
        %v3254 = vpop.f32.mrb[0].mxu0
        %v3255 = vadd.f32 %v2774, %v3254
        %v3256 = vpop.f32.mrb[0].mxu0
        %v3257 = vpop.f32.mrb[0].mxu0
        %v3258 = vadd.f32 %v2774, %v3257
        %v3259 = vpop.f32.mrb[0].mxu0
        %3260 = vmatprep.mubr.bf16.mxu0 0
        %3261 = vmatmul.mubr.bf16.gmra.mrb[0].mxu0 %v2882
        %v3262 = vpop.f32.mrb[0].mxu0
        %v3263 = vadd.f32 %v2774, %v3262
        %v3264 = vpop.f32.mrb[0].mxu0
        %v3265 = vpop.f32.mrb[0].mxu0
        %v3266 = vadd.f32 %v2774, %v3265
        %v3267 = vpop.f32.mrb[0].mxu0
        %3268 = vmatprep.mubr.bf16.mxu0 0
        %3269 = vmatmul.mubr.bf16.gmra.mrb[0].mxu0 %v2885
        %v3270 = vpop.f32.mrb[0].mxu0
        %v3271 = vadd.f32 %v2774, %v3270
        %v3272 = vpop.f32.mrb[0].mxu0
        %v3273 = vpop.f32.mrb[0].mxu0
        %v3274 = vadd.f32 %v2774, %v3273
        %v3275 = vpop.f32.mrb[0].mxu0
        %3276 = vmatprep.mubr.bf16.mxu0 0
        %3277 = vmatmul.mubr.bf16.gmra.mrb[0].mxu0 %v2888
        %v3278 = vpop.f32.mrb[0].mxu0
        %v3279 = vadd.f32 %v2774, %v3278
        %v3280 = vpop.f32.mrb[0].mxu0
        %v3281 = vpop.f32.mrb[0].mxu0
        %v3282 = vadd.f32 %v2774, %v3281
        %v3283 = vpop.f32.mrb[0].mxu0
        %3284 = vmatprep.mubr.bf16.mxu0 0
        %3285 = vmatmul.mubr.bf16.gmra.mrb[0].mxu0 %v2891
        %v3286 = vpop.f32.mrb[0].mxu0
        %v3287 = vadd.f32 %v2774, %v3286
        %v3288 = vpop.f32.mrb[0].mxu0
        %v3289 = vpop.f32.mrb[0].mxu0
        %v3290 = vadd.f32 %v2774, %v3289
        %v3291 = vpop.f32.mrb[0].mxu0
        %3292 = vmatprep.mubr.bf16.mxu0 0
        %3293 = vmatmul.mubr.bf16.gmra.mrb[0].mxu0 %v2894
        %v3294 = vpop.f32.mrb[0].mxu0
        %v3295 = vadd.f32 %v2774, %v3294
        %v3296 = vpop.f32.mrb[0].mxu0
        %v3297 = vpop.f32.mrb[0].mxu0
        %v3298 = vadd.f32 %v2774, %v3297
        %v3299 = vpop.f32.mrb[0].mxu0
        %3300 = vmatprep.mubr.bf16.mxu0 0
        %3301 = vmatmul.mubr.bf16.gmra.mrb[0].mxu0 %v2897
        %v3302 = vpop.f32.mrb[0].mxu0
        %v3303 = vadd.f32 %v2774, %v3302
        %v3304 = vpop.f32.mrb[0].mxu0
        %v3305 = vpop.f32.mrb[0].mxu0
        %v3306 = vadd.f32 %v2774, %v3305
        %v3307 = vpop.f32.mrb[0].mxu0
        %3308 = vmatprep.mubr.bf16.mxu0 0
        %3309 = vmatmul.mubr.bf16.gmra.mrb[0].mxu0 %v2900
        %v3310 = vpop.f32.mrb[0].mxu0
        %v3311 = vadd.f32 %v2774, %v3310
        %v3312 = vpop.f32.mrb[0].mxu0
        %v3313 = vpop.f32.mrb[0].mxu0
        %v3314 = vadd.f32 %v2774, %v3313
        %v3315 = vpop.f32.mrb[0].mxu0
        %3316 = vmatprep.mubr.bf16.mxu0 0
        %3317 = vmatmul.mubr.bf16.gmra.mrb[0].mxu0 %v2903
        %v3318 = vpop.f32.mrb[0].mxu0
        %v3319 = vadd.f32 %v2774, %v3318
        %v3320 = vpop.f32.mrb[0].mxu0
        %v3321 = vpop.f32.mrb[0].mxu0
        %v3322 = vadd.f32 %v2774, %v3321
        %v3323 = vpop.f32.mrb[0].mxu0
        %3324 = vmatprep.mubr.bf16.mxu0 0
        %3325 = vmatmul.mubr.bf16.gmra.mrb[0].mxu0 %v2906
        %v3326 = vpop.f32.mrb[0].mxu0
        %v3327 = vadd.f32 %v2774, %v3326
        %v3328 = vpop.f32.mrb[0].mxu0
        %v3329 = vpop.f32.mrb[0].mxu0
        %v3330 = vadd.f32 %v2774, %v3329
        %v3331 = vpop.f32.mrb[0].mxu0
        %3332 = vmatprep.mubr.bf16.mxu0 0
        %3333 = vmatmul.mubr.bf16.gmra.mrb[0].mxu0 %v2909
        %v3334 = vpop.f32.mrb[0].mxu0
        %v3335 = vadd.f32 %v2774, %v3334
        %v3336 = vpop.f32.mrb[0].mxu0
        %v3337 = vpop.f32.mrb[0].mxu0
        %v3338 = vadd.f32 %v2774, %v3337
        %v3339 = vpop.f32.mrb[0].mxu0
        %3340 = vmatprep.mubr.bf16.mxu0 0
        %3341 = vmatmul.mubr.bf16.gmra.mrb[0].mxu0 %v2912
        %v3342 = vpop.f32.mrb[0].mxu0
        %v3343 = vadd.f32 %v2774, %v3342
        %v3344 = vpop.f32.mrb[0].mxu0
        %v3345 = vpop.f32.mrb[0].mxu0
        %v3346 = vadd.f32 %v2774, %v3345
        %v3347 = vpop.f32.mrb[0].mxu0
        %3348 = vmatprep.mubr.bf16.mxu0 0
        %3349 = vmatmul.mubr.bf16.gmra.mrb[0].mxu0 %v2915
        %v3350 = vpop.f32.mrb[0].mxu0
        %v3351 = vadd.f32 %v2774, %v3350
        %v3352 = vpop.f32.mrb[0].mxu0
        %v3353 = vpop.f32.mrb[0].mxu0
        %v3354 = vadd.f32 %v2774, %v3353
        %v3355 = vpop.f32.mrb[0].mxu0
        %3356 = vmatprep.mubr.bf16.mxu0 0
        %3357 = vmatmul.mubr.bf16.gmra.mrb[0].mxu0 %v2918
        %v3358 = vpop.f32.mrb[0].mxu0
        %v3359 = vadd.f32 %v2774, %v3358
        %v3360 = vpop.f32.mrb[0].mxu0
        %v3361 = vpop.f32.mrb[0].mxu0
        %v3362 = vadd.f32 %v2774, %v3361
        %v3363 = vpop.f32.mrb[0].mxu0
        %3364 = vmatprep.mubr.bf16.mxu0 0
        %3365 = vmatmul.mubr.bf16.gmra.mrb[0].mxu0 %v2921
        %v3366 = vpop.f32.mrb[0].mxu0
        %v3367 = vadd.f32 %v2774, %v3366
        %v3368 = vpop.f32.mrb[0].mxu0
        %v3369 = vpop.f32.mrb[0].mxu0
        %v3370 = vadd.f32 %v2774, %v3369
        %v3371 = vpop.f32.mrb[0].mxu0
        %3372 = vmatprep.mubr.bf16.mxu0 0
        %3373 = vmatmul.mubr.bf16.gmra.mrb[0].mxu0 %v2924
        %v3374 = vpop.f32.mrb[0].mxu0
        %v3375 = vadd.f32 %v2774, %v3374
        %v3376 = vpop.f32.mrb[0].mxu0
        %v3377 = vpop.f32.mrb[0].mxu0
        %v3378 = vadd.f32 %v2774, %v3377
        %v3379 = vpop.f32.mrb[0].mxu0
        %3380 = vmatprep.mubr.bf16.mxu0 0
        %3381 = vmatmul.mubr.bf16.gmra.mrb[0].mxu0 %v2927
        %v3382 = vpop.f32.mrb[0].mxu0
        %v3383 = vadd.f32 %v2774, %v3382
        %v3384 = vpop.f32.mrb[0].mxu0
        %v3385 = vpop.f32.mrb[0].mxu0
        %v3386 = vadd.f32 %v2774, %v3385
        %v3387 = vpop.f32.mrb[0].mxu0
        %3388 = vmatprep.mubr.bf16.mxu0 0
        %3389 = vmatmul.mubr.bf16.gmra.mrb[0].mxu0 %v2930
        %v3390 = vpop.f32.mrb[0].mxu0
        %v3391 = vadd.f32 %v2774, %v3390
        %v3392 = vpop.f32.mrb[0].mxu0
        %v3393 = vpop.f32.mrb[0].mxu0
        %v3394 = vadd.f32 %v2774, %v3393
        %v3395 = vpop.f32.mrb[0].mxu0
        %3396 = vmatprep.mubr.bf16.mxu0 0
        %3397 = vmatmul.mubr.bf16.gmra.mrb[0].mxu0 %v2933
        %v3398 = vpop.f32.mrb[0].mxu0
        %v3399 = vadd.f32 %v2774, %v3398
        %v3400 = vpop.f32.mrb[0].mxu0
        %v3401 = vpop.f32.mrb[0].mxu0
        %v3402 = vadd.f32 %v2774, %v3401
        %v3403 = vpop.f32.mrb[0].mxu0
        %3404 = vmatprep.mubr.bf16.mxu0 0
        %3405 = vmatmul.mubr.bf16.gmra.mrb[0].mxu0 %v2936
        %v3406 = vpop.f32.mrb[0].mxu0
        %v3407 = vadd.f32 %v2774, %v3406
        %v3408 = vpop.f32.mrb[0].mxu0
        %v3409 = vpop.f32.mrb[0].mxu0
        %v3410 = vadd.f32 %v2774, %v3409
        %v3411 = vpop.f32.mrb[0].mxu0
        %3412 = vmatprep.mubr.bf16.mxu0 0
        %3413 = vmatmul.mubr.bf16.gmra.mrb[0].mxu0 %v2939
        %v3414 = vpop.f32.mrb[0].mxu0
        %v3415 = vadd.f32 %v2774, %v3414
        %v3416 = vpop.f32.mrb[0].mxu0
        %v3417 = vpop.f32.mrb[0].mxu0
        %v3418 = vadd.f32 %v2774, %v3417
        %v3419 = vpop.f32.mrb[0].mxu0
        %3420 = vmatprep.mubr.bf16.mxu0 0
        %3421 = vmatmul.mubr.bf16.gmra.mrb[0].mxu0 %v2942
        %v3422 = vpop.f32.mrb[0].mxu0
        %v3423 = vadd.f32 %v2774, %v3422
        %v3424 = vpop.f32.mrb[0].mxu0
        %v3425 = vpop.f32.mrb[0].mxu0
        %v3426 = vadd.f32 %v2774, %v3425
        %v3427 = vpop.f32.mrb[0].mxu0
        %3428 = vmatprep.mubr.bf16.mxu0 0
        %3429 = vmatmul.mubr.bf16.gmra.mrb[0].mxu0 %v2945
        %v3430 = vpop.f32.mrb[0].mxu0
        %v3431 = vadd.f32 %v2774, %v3430
        %v3432 = vpop.f32.mrb[0].mxu0
        %v3433 = vpop.f32.mrb[0].mxu0
        %v3434 = vadd.f32 %v2774, %v3433
        %v3435 = vpop.f32.mrb[0].mxu0
        %3436 = vmatprep.mubr.bf16.mxu0 0
        %3437 = vmatmul.mubr.bf16.gmra.mrb[0].mxu0 %v2948
        %v3438 = vpop.f32.mrb[0].mxu0
        %v3439 = vadd.f32 %v2774, %v3438
        %v3440 = vpop.f32.mrb[0].mxu0
        %v3441 = vpop.f32.mrb[0].mxu0
        %v3442 = vadd.f32 %v2774, %v3441
        %v3443 = vpop.f32.mrb[0].mxu0
        %3444 = vmatprep.mubr.bf16.mxu0 0
        %3445 = vmatmul.mubr.bf16.gmra.mrb[0].mxu0 %v2951
        %v3446 = vpop.f32.mrb[0].mxu0
        %v3447 = vadd.f32 %v2774, %v3446
        %v3448 = vpop.f32.mrb[0].mxu0
        %v3449 = vpop.f32.mrb[0].mxu0
        %v3450 = vadd.f32 %v2774, %v3449
        %v3451 = vpop.f32.mrb[0].mxu0
        %3452 = vmatprep.mubr.bf16.mxu0 0
        %3453 = vmatmul.mubr.bf16.gmra.mrb[0].mxu0 %v2954
        %v3454 = vpop.f32.mrb[0].mxu0
        %v3455 = vadd.f32 %v2774, %v3454
        %v3456 = vpop.f32.mrb[0].mxu0
        %v3457 = vpop.f32.mrb[0].mxu0
        %v3458 = vadd.f32 %v2774, %v3457
        %v3459 = vpop.f32.mrb[0].mxu0
        %3460 = vmatprep.mubr.bf16.mxu0 0
        %3461 = vmatmul.mubr.bf16.gmra.mrb[0].mxu0 %v2957
        %v3462 = vpop.f32.mrb[0].mxu0
        %v3463 = vadd.f32 %v2774, %v3462
        %v3464 = vpop.f32.mrb[0].mxu0
        %v3465 = vpop.f32.mrb[0].mxu0
        %v3466 = vadd.f32 %v2774, %v3465
        %v3467 = vpop.f32.mrb[0].mxu0
        %3468 = vmatprep.mubr.bf16.mxu0 0
        %3469 = vmatmul.mubr.bf16.gmra.mrb[0].mxu0 %v2960
        %v3470 = vpop.f32.mrb[0].mxu0
        %v3471 = vadd.f32 %v2774, %v3470
        %v3472 = vpop.f32.mrb[0].mxu0
        %v3473 = vpop.f32.mrb[0].mxu0
        %v3474 = vadd.f32 %v2774, %v3473
        %v3475 = vpop.f32.mrb[0].mxu0
        %3476 = vmatprep.mubr.bf16.mxu0 0
        %3477 = vmatmul.mubr.bf16.gmra.mrb[0].mxu0 %v2963
        %v3478 = vpop.f32.mrb[0].mxu0
        %v3479 = vadd.f32 %v2774, %v3478
        %v3480 = vpop.f32.mrb[0].mxu0
        %v3481 = vpop.f32.mrb[0].mxu0
        %v3482 = vadd.f32 %v2774, %v3481
        %v3483 = vpop.f32.mrb[0].mxu0
        %3484 = vmatprep.mubr.bf16.mxu0 0
        %3485 = vmatmul.mubr.bf16.gmra.mrb[0].mxu0 %v2966
        %v3486 = vpop.f32.mrb[0].mxu0
        %v3487 = vadd.f32 %v2774, %v3486
        %v3488 = vpop.f32.mrb[0].mxu0
        %v3489 = vpop.f32.mrb[0].mxu0
        %v3490 = vadd.f32 %v2774, %v3489
        %v3491 = vpop.f32.mrb[0].mxu0
        %3492 = vmatprep.mubr.bf16.mxu0 0
        %3493 = vmatmul.mubr.bf16.gmra.mrb[0].mxu0 %v2969
        %v3494 = vpop.f32.mrb[0].mxu0
        %v3495 = vadd.f32 %v2774, %v3494
        %v3496 = vpop.f32.mrb[0].mxu0
        %v3497 = vpop.f32.mrb[0].mxu0
        %v3498 = vadd.f32 %v2774, %v3497
        %v3499 = vpop.f32.mrb[0].mxu0
        %3500 = vmatprep.mubr.bf16.mxu0 0
        %3501 = vmatmul.mubr.bf16.gmra.mrb[0].mxu0 %v2972
        %v3502 = vpop.f32.mrb[0].mxu0
        %v3503 = vadd.f32 %v2774, %v3502
        %v3504 = vpop.f32.mrb[0].mxu0
        %v3505 = vpop.f32.mrb[0].mxu0
        %v3506 = vadd.f32 %v2774, %v3505
        %v3507 = vpop.f32.mrb[0].mxu0
        %3508 = vmatprep.mubr.bf16.mxu0 0
        %3509 = vmatmul.mubr.bf16.gmra.mrb[0].mxu0 %v2975
        %v3510 = vpop.f32.mrb[0].mxu0
        %v3511 = vadd.f32 %v2774, %v3510
        %v3512 = vpop.f32.mrb[0].mxu0
        %v3513 = vpop.f32.mrb[0].mxu0
        %v3514 = vadd.f32 %v2774, %v3513
        %v3515 = vpop.f32.mrb[0].mxu0
        %3516 = vmatprep.mubr.bf16.mxu0 0
        %3517 = vmatmul.mubr.bf16.gmra.mrb[0].mxu0 %v2978
        %v3518 = vpop.f32.mrb[0].mxu0
        %v3519 = vadd.f32 %v2774, %v3518
        %v3520 = vpop.f32.mrb[0].mxu0
        %v3521 = vpop.f32.mrb[0].mxu0
        %v3522 = vadd.f32 %v2774, %v3521
        %v3523 = vpop.f32.mrb[0].mxu0
        %3524 = vdwg.mxu0
        %v3525 = vmax.f32 %v3015, 0.0
        %v3526 = vmax.f32 %v3018, 0.0
        %v3527 = vmax.f32 %v3023, 0.0
        %v3528 = vmax.f32 %v3026, 0.0
        %v3529 = vmax.f32 %v3031, 0.0
        %v3530 = vmax.f32 %v3034, 0.0
        %v3531 = vmax.f32 %v3039, 0.0
        %v3532 = vmax.f32 %v3042, 0.0
        %v3533 = vmax.f32 %v3047, 0.0
        %v3534 = vmax.f32 %v3050, 0.0
        %v3535 = vmax.f32 %v3055, 0.0
        %v3536 = vmax.f32 %v3058, 0.0
        %v3537 = vmax.f32 %v3063, 0.0
        %v3538 = vmax.f32 %v3066, 0.0
        %v3539 = vmax.f32 %v3071, 0.0
        %v3540 = vmax.f32 %v3074, 0.0
        %v3541 = vmax.f32 %v3079, 0.0
        %v3542 = vmax.f32 %v3082, 0.0
        %v3543 = vmax.f32 %v3087, 0.0
        %v3544 = vmax.f32 %v3090, 0.0
        %v3545 = vmax.f32 %v3095, 0.0
        %v3546 = vmax.f32 %v3098, 0.0
        %v3547 = vmax.f32 %v3103, 0.0
        %v3548 = vmax.f32 %v3106, 0.0
        %v3549 = vmax.f32 %v3111, 0.0
        %v3550 = vmax.f32 %v3114, 0.0
        %v3551 = vmax.f32 %v3119, 0.0
        %v3552 = vmax.f32 %v3122, 0.0
        %v3553 = vmax.f32 %v3127, 0.0
        %v3554 = vmax.f32 %v3130, 0.0
        %v3555 = vmax.f32 %v3135, 0.0
        %v3556 = vmax.f32 %v3138, 0.0
        %v3557 = vmax.f32 %v3143, 0.0
        %v3558 = vmax.f32 %v3146, 0.0
        %v3559 = vmax.f32 %v3151, 0.0
        %v3560 = vmax.f32 %v3154, 0.0
        %v3561 = vmax.f32 %v3159, 0.0
        %v3562 = vmax.f32 %v3162, 0.0
        %v3563 = vmax.f32 %v3167, 0.0
        %v3564 = vmax.f32 %v3170, 0.0
        %v3565 = vmax.f32 %v3175, 0.0
        %v3566 = vmax.f32 %v3178, 0.0
        %v3567 = vmax.f32 %v3183, 0.0
        %v3568 = vmax.f32 %v3186, 0.0
        %v3569 = vmax.f32 %v3191, 0.0
        %v3570 = vmax.f32 %v3194, 0.0
        %v3571 = vmax.f32 %v3199, 0.0
        %v3572 = vmax.f32 %v3202, 0.0
        %v3573 = vmax.f32 %v3207, 0.0
        %v3574 = vmax.f32 %v3210, 0.0
        %v3575 = vmax.f32 %v3215, 0.0
        %v3576 = vmax.f32 %v3218, 0.0
        %v3577 = vmax.f32 %v3223, 0.0
        %v3578 = vmax.f32 %v3226, 0.0
        %v3579 = vmax.f32 %v3231, 0.0
        %v3580 = vmax.f32 %v3234, 0.0
        %v3581 = vmax.f32 %v3239, 0.0
        %v3582 = vmax.f32 %v3242, 0.0
        %v3583 = vmax.f32 %v3247, 0.0
        %v3584 = vmax.f32 %v3250, 0.0
        %v3585 = vmax.f32 %v3255, 0.0
        %v3586 = vmax.f32 %v3258, 0.0
        %v3587 = vmax.f32 %v3263, 0.0
        %v3588 = vmax.f32 %v3266, 0.0
        %v3589 = vmax.f32 %v3271, 0.0
        %v3590 = vmax.f32 %v3274, 0.0
        %v3591 = vmax.f32 %v3279, 0.0
        %v3592 = vmax.f32 %v3282, 0.0
        %v3593 = vmax.f32 %v3287, 0.0
        %v3594 = vmax.f32 %v3290, 0.0
        %v3595 = vmax.f32 %v3295, 0.0
        %v3596 = vmax.f32 %v3298, 0.0
        %v3597 = vmax.f32 %v3303, 0.0
        %v3598 = vmax.f32 %v3306, 0.0
        %v3599 = vmax.f32 %v3311, 0.0
        %v3600 = vmax.f32 %v3314, 0.0
        %v3601 = vmax.f32 %v3319, 0.0
        %v3602 = vmax.f32 %v3322, 0.0
        %v3603 = vmax.f32 %v3327, 0.0
        %v3604 = vmax.f32 %v3330, 0.0
        %v3605 = vmax.f32 %v3335, 0.0
        %v3606 = vmax.f32 %v3338, 0.0
        %v3607 = vmax.f32 %v3343, 0.0
        %v3608 = vmax.f32 %v3346, 0.0
        %v3609 = vmax.f32 %v3351, 0.0
        %v3610 = vmax.f32 %v3354, 0.0
        %v3611 = vmax.f32 %v3359, 0.0
        %v3612 = vmax.f32 %v3362, 0.0
        %v3613 = vmax.f32 %v3367, 0.0
        %v3614 = vmax.f32 %v3370, 0.0
        %v3615 = vmax.f32 %v3375, 0.0
        %v3616 = vmax.f32 %v3378, 0.0
        %v3617 = vmax.f32 %v3383, 0.0
        %v3618 = vmax.f32 %v3386, 0.0
        %v3619 = vmax.f32 %v3391, 0.0
        %v3620 = vmax.f32 %v3394, 0.0
        %v3621 = vmax.f32 %v3399, 0.0
        %v3622 = vmax.f32 %v3402, 0.0
        %v3623 = vmax.f32 %v3407, 0.0
        %v3624 = vmax.f32 %v3410, 0.0
        %v3625 = vmax.f32 %v3415, 0.0
        %v3626 = vmax.f32 %v3418, 0.0
        %v3627 = vmax.f32 %v3423, 0.0
        %v3628 = vmax.f32 %v3426, 0.0
        %v3629 = vmax.f32 %v3431, 0.0
        %v3630 = vmax.f32 %v3434, 0.0
        %v3631 = vmax.f32 %v3439, 0.0
        %v3632 = vmax.f32 %v3442, 0.0
        %v3633 = vmax.f32 %v3447, 0.0
        %v3634 = vmax.f32 %v3450, 0.0
        %v3635 = vmax.f32 %v3455, 0.0
        %v3636 = vmax.f32 %v3458, 0.0
        %v3637 = vmax.f32 %v3463, 0.0
        %v3638 = vmax.f32 %v3466, 0.0
        %v3639 = vmax.f32 %v3471, 0.0
        %v3640 = vmax.f32 %v3474, 0.0
        %v3641 = vmax.f32 %v3479, 0.0
        %v3642 = vmax.f32 %v3482, 0.0
        %v3643 = vmax.f32 %v3487, 0.0
        %v3644 = vmax.f32 %v3490, 0.0
        %v3645 = vmax.f32 %v3495, 0.0
        %v3646 = vmax.f32 %v3498, 0.0
        %v3647 = vmax.f32 %v3503, 0.0
        %v3648 = vmax.f32 %v3506, 0.0
        %v3649 = vmax.f32 %v3511, 0.0
        %v3650 = vmax.f32 %v3514, 0.0
        %v3651 = vmax.f32 %v3519, 0.0
        %v3652 = vmax.f32 %v3522, 0.0
        %3654 = vset.pattern.permute.xlu0 19
        %3655 = vperm.xlu0 %3654, %v412
        %v3656 = vpop.permute.xlu0 %3655
        %3659 = vset.pattern.permute.xlu0 19
        %3660 = vperm.xlu0 %3659, %v413
        %v3661 = vpop.permute.xlu0 %3660
        %3664 = vset.pattern.permute.xlu0 19
        %3665 = vperm.xlu0 %3664, %v414
        %v3666 = vpop.permute.xlu0 %3665
        %3669 = vset.pattern.permute.xlu0 19
        %3670 = vperm.xlu0 %3669, %v415
        %v3671 = vpop.permute.xlu0 %3670
        %3674 = vset.pattern.permute.xlu0 19
        %3675 = vperm.xlu0 %3674, %v416
        %v3676 = vpop.permute.xlu0 %3675
        %3679 = vset.pattern.permute.xlu0 19
        %3680 = vperm.xlu0 %3679, %v417
        %v3681 = vpop.permute.xlu0 %3680
        %3684 = vset.pattern.permute.xlu0 19
        %3685 = vperm.xlu0 %3684, %v418
        %v3686 = vpop.permute.xlu0 %3685
        %3689 = vset.pattern.permute.xlu0 19
        %3690 = vperm.xlu0 %3689, %v419
        %v3691 = vpop.permute.xlu0 %3690
        %3694 = vset.pattern.permute.xlu0 19
        %3695 = vperm.xlu0 %3694, %v420
        %v3696 = vpop.permute.xlu0 %3695
        %3699 = vset.pattern.permute.xlu0 19
        %3700 = vperm.xlu0 %3699, %v421
        %v3701 = vpop.permute.xlu0 %3700
        %3704 = vset.pattern.permute.xlu0 19
        %3705 = vperm.xlu0 %3704, %v422
        %v3706 = vpop.permute.xlu0 %3705
        %3709 = vset.pattern.permute.xlu0 19
        %3710 = vperm.xlu0 %3709, %v423
        %v3711 = vpop.permute.xlu0 %3710
        %3714 = vset.pattern.permute.xlu0 19
        %3715 = vperm.xlu0 %3714, %v424
        %v3716 = vpop.permute.xlu0 %3715
        %3719 = vset.pattern.permute.xlu0 19
        %3720 = vperm.xlu0 %3719, %v425
        %v3721 = vpop.permute.xlu0 %3720
        %3724 = vset.pattern.permute.xlu0 19
        %3725 = vperm.xlu0 %3724, %v426
        %v3726 = vpop.permute.xlu0 %3725
        %3729 = vset.pattern.permute.xlu0 19
        %3730 = vperm.xlu0 %3729, %v427
        %v3731 = vpop.permute.xlu0 %3730
        %3734 = vset.pattern.permute.xlu0 19
        %3735 = vperm.xlu0 %3734, %v428
        %v3736 = vpop.permute.xlu0 %3735
        %3739 = vset.pattern.permute.xlu0 19
        %3740 = vperm.xlu0 %3739, %v429
        %v3741 = vpop.permute.xlu0 %3740
        %3744 = vset.pattern.permute.xlu0 19
        %3745 = vperm.xlu0 %3744, %v430
        %v3746 = vpop.permute.xlu0 %3745
        %3749 = vset.pattern.permute.xlu0 19
        %3750 = vperm.xlu0 %3749, %v431
        %v3751 = vpop.permute.xlu0 %3750
        %3754 = vset.pattern.permute.xlu0 19
        %3755 = vperm.xlu0 %3754, %v432
        %v3756 = vpop.permute.xlu0 %3755
        %3759 = vset.pattern.permute.xlu0 19
        %3760 = vperm.xlu0 %3759, %v433
        %v3761 = vpop.permute.xlu0 %3760
        %3764 = vset.pattern.permute.xlu0 19
        %3765 = vperm.xlu0 %3764, %v434
        %v3766 = vpop.permute.xlu0 %3765
        %3769 = vset.pattern.permute.xlu0 19
        %3770 = vperm.xlu0 %3769, %v435
        %v3771 = vpop.permute.xlu0 %3770
        %3774 = vset.pattern.permute.xlu0 19
        %3775 = vperm.xlu0 %3774, %v436
        %v3776 = vpop.permute.xlu0 %3775
        %3779 = vset.pattern.permute.xlu0 19
        %3780 = vperm.xlu0 %3779, %v437
        %v3781 = vpop.permute.xlu0 %3780
        %3784 = vset.pattern.permute.xlu0 19
        %3785 = vperm.xlu0 %3784, %v438
        %v3786 = vpop.permute.xlu0 %3785
        %3789 = vset.pattern.permute.xlu0 19
        %3790 = vperm.xlu0 %3789, %v439
        %v3791 = vpop.permute.xlu0 %3790
        %3794 = vset.pattern.permute.xlu0 19
        %3795 = vperm.xlu0 %3794, %v440
        %v3796 = vpop.permute.xlu0 %3795
        %3799 = vset.pattern.permute.xlu0 19
        %3800 = vperm.xlu0 %3799, %v441
        %v3801 = vpop.permute.xlu0 %3800
        %3804 = vset.pattern.permute.xlu0 19
        %3805 = vperm.xlu0 %3804, %v442
        %v3806 = vpop.permute.xlu0 %3805
        %3809 = vset.pattern.permute.xlu0 19
        %3810 = vperm.xlu0 %3809, %v443
        %v3811 = vpop.permute.xlu0 %3810
        %3814 = vset.pattern.permute.xlu0 19
        %3815 = vperm.xlu0 %3814, %v444
        %v3816 = vpop.permute.xlu0 %3815
        %3819 = vset.pattern.permute.xlu0 19
        %3820 = vperm.xlu0 %3819, %v445
        %v3821 = vpop.permute.xlu0 %3820
        %3824 = vset.pattern.permute.xlu0 19
        %3825 = vperm.xlu0 %3824, %v446
        %v3826 = vpop.permute.xlu0 %3825
        %3829 = vset.pattern.permute.xlu0 19
        %3830 = vperm.xlu0 %3829, %v447
        %v3831 = vpop.permute.xlu0 %3830
        %3834 = vset.pattern.permute.xlu0 19
        %3835 = vperm.xlu0 %3834, %v448
        %v3836 = vpop.permute.xlu0 %3835
        %3839 = vset.pattern.permute.xlu0 19
        %3840 = vperm.xlu0 %3839, %v449
        %v3841 = vpop.permute.xlu0 %3840
        %3844 = vset.pattern.permute.xlu0 19
        %3845 = vperm.xlu0 %3844, %v450
        %v3846 = vpop.permute.xlu0 %3845
        %3849 = vset.pattern.permute.xlu0 19
        %3850 = vperm.xlu0 %3849, %v451
        %v3851 = vpop.permute.xlu0 %3850
        %3854 = vset.pattern.permute.xlu0 19
        %3855 = vperm.xlu0 %3854, %v452
        %v3856 = vpop.permute.xlu0 %3855
        %3859 = vset.pattern.permute.xlu0 19
        %3860 = vperm.xlu0 %3859, %v453
        %v3861 = vpop.permute.xlu0 %3860
        %3864 = vset.pattern.permute.xlu0 19
        %3865 = vperm.xlu0 %3864, %v454
        %v3866 = vpop.permute.xlu0 %3865
        %3869 = vset.pattern.permute.xlu0 19
        %3870 = vperm.xlu0 %3869, %v455
        %v3871 = vpop.permute.xlu0 %3870
        %3874 = vset.pattern.permute.xlu0 19
        %3875 = vperm.xlu0 %3874, %v456
        %v3876 = vpop.permute.xlu0 %3875
        %3879 = vset.pattern.permute.xlu0 19
        %3880 = vperm.xlu0 %3879, %v457
        %v3881 = vpop.permute.xlu0 %3880
        %3884 = vset.pattern.permute.xlu0 19
        %3885 = vperm.xlu0 %3884, %v458
        %v3886 = vpop.permute.xlu0 %3885
        %3889 = vset.pattern.permute.xlu0 19
        %3890 = vperm.xlu0 %3889, %v459
        %v3891 = vpop.permute.xlu0 %3890
        %3894 = vset.pattern.permute.xlu0 19
        %3895 = vperm.xlu0 %3894, %v460
        %v3896 = vpop.permute.xlu0 %3895
        %3899 = vset.pattern.permute.xlu0 19
        %3900 = vperm.xlu0 %3899, %v461
        %v3901 = vpop.permute.xlu0 %3900
        %3904 = vset.pattern.permute.xlu0 19
        %3905 = vperm.xlu0 %3904, %v462
        %v3906 = vpop.permute.xlu0 %3905
        %3909 = vset.pattern.permute.xlu0 19
        %3910 = vperm.xlu0 %3909, %v463
        %v3911 = vpop.permute.xlu0 %3910
        %3914 = vset.pattern.permute.xlu0 19
        %3915 = vperm.xlu0 %3914, %v464
        %v3916 = vpop.permute.xlu0 %3915
        %3919 = vset.pattern.permute.xlu0 19
        %3920 = vperm.xlu0 %3919, %v465
        %v3921 = vpop.permute.xlu0 %3920
        %3924 = vset.pattern.permute.xlu0 19
        %3925 = vperm.xlu0 %3924, %v466
        %v3926 = vpop.permute.xlu0 %3925
        %3929 = vset.pattern.permute.xlu0 19
        %3930 = vperm.xlu0 %3929, %v467
        %v3931 = vpop.permute.xlu0 %3930
        %3934 = vset.pattern.permute.xlu0 19
        %3935 = vperm.xlu0 %3934, %v468
        %v3936 = vpop.permute.xlu0 %3935
        %3939 = vset.pattern.permute.xlu0 19
        %3940 = vperm.xlu0 %3939, %v469
        %v3941 = vpop.permute.xlu0 %3940
        %3944 = vset.pattern.permute.xlu0 19
        %3945 = vperm.xlu0 %3944, %v470
        %v3946 = vpop.permute.xlu0 %3945
        %3949 = vset.pattern.permute.xlu0 19
        %3950 = vperm.xlu0 %3949, %v471
        %v3951 = vpop.permute.xlu0 %3950
        %3954 = vset.pattern.permute.xlu0 19
        %3955 = vperm.xlu0 %3954, %v472
        %v3956 = vpop.permute.xlu0 %3955
        %3959 = vset.pattern.permute.xlu0 19
        %3960 = vperm.xlu0 %3959, %v473
        %v3961 = vpop.permute.xlu0 %3960
        %3964 = vset.pattern.permute.xlu0 19
        %3965 = vperm.xlu0 %3964, %v474
        %v3966 = vpop.permute.xlu0 %3965
        %3969 = vset.pattern.permute.xlu0 19
        %3970 = vperm.xlu0 %3969, %v475
        %v3971 = vpop.permute.xlu0 %3970
        %3974 = vset.pattern.permute.xlu0 19
        %3975 = vperm.xlu0 %3974, %v476
        %v3976 = vpop.permute.xlu0 %3975
        %3979 = vset.pattern.permute.xlu0 19
        %3980 = vperm.xlu0 %3979, %v477
        %v3981 = vpop.permute.xlu0 %3980
        %3984 = vset.pattern.permute.xlu0 19
        %3985 = vperm.xlu0 %3984, %v478
        %v3986 = vpop.permute.xlu0 %3985
        %3989 = vset.pattern.permute.xlu0 19
        %3990 = vperm.xlu0 %3989, %v479
        %v3991 = vpop.permute.xlu0 %3990
        %3994 = vset.pattern.permute.xlu0 19
        %3995 = vperm.xlu0 %3994, %v480
        %v3996 = vpop.permute.xlu0 %3995
        %3999 = vset.pattern.permute.xlu0 19
        %4000 = vperm.xlu0 %3999, %v481
        %v4001 = vpop.permute.xlu0 %4000
        %4004 = vset.pattern.permute.xlu0 19
        %4005 = vperm.xlu0 %4004, %v482
        %v4006 = vpop.permute.xlu0 %4005
        %4009 = vset.pattern.permute.xlu0 19
        %4010 = vperm.xlu0 %4009, %v483
        %v4011 = vpop.permute.xlu0 %4010
        %4014 = vset.pattern.permute.xlu0 19
        %4015 = vperm.xlu0 %4014, %v484
        %v4016 = vpop.permute.xlu0 %4015
        %4019 = vset.pattern.permute.xlu0 19
        %4020 = vperm.xlu0 %4019, %v485
        %v4021 = vpop.permute.xlu0 %4020
        %4024 = vset.pattern.permute.xlu0 19
        %4025 = vperm.xlu0 %4024, %v486
        %v4026 = vpop.permute.xlu0 %4025
        %4029 = vset.pattern.permute.xlu0 19
        %4030 = vperm.xlu0 %4029, %v487
        %v4031 = vpop.permute.xlu0 %4030
        %4034 = vset.pattern.permute.xlu0 19
        %4035 = vperm.xlu0 %4034, %v488
        %v4036 = vpop.permute.xlu0 %4035
        %4039 = vset.pattern.permute.xlu0 19
        %4040 = vperm.xlu0 %4039, %v489
        %v4041 = vpop.permute.xlu0 %4040
        %4044 = vset.pattern.permute.xlu0 19
        %4045 = vperm.xlu0 %4044, %v490
        %v4046 = vpop.permute.xlu0 %4045
        %4049 = vset.pattern.permute.xlu0 19
        %4050 = vperm.xlu0 %4049, %v491
        %v4051 = vpop.permute.xlu0 %4050
        %4054 = vset.pattern.permute.xlu0 19
        %4055 = vperm.xlu0 %4054, %v492
        %v4056 = vpop.permute.xlu0 %4055
        %4059 = vset.pattern.permute.xlu0 19
        %4060 = vperm.xlu0 %4059, %v493
        %v4061 = vpop.permute.xlu0 %4060
        %4064 = vset.pattern.permute.xlu0 19
        %4065 = vperm.xlu0 %4064, %v494
        %v4066 = vpop.permute.xlu0 %4065
        %4069 = vset.pattern.permute.xlu0 19
        %4070 = vperm.xlu0 %4069, %v495
        %v4071 = vpop.permute.xlu0 %4070
        %4074 = vset.pattern.permute.xlu0 19
        %4075 = vperm.xlu0 %4074, %v496
        %v4076 = vpop.permute.xlu0 %4075
        %4079 = vset.pattern.permute.xlu0 19
        %4080 = vperm.xlu0 %4079, %v497
        %v4081 = vpop.permute.xlu0 %4080
        %4084 = vset.pattern.permute.xlu0 19
        %4085 = vperm.xlu0 %4084, %v498
        %v4086 = vpop.permute.xlu0 %4085
        %4089 = vset.pattern.permute.xlu0 19
        %4090 = vperm.xlu0 %4089, %v499
        %v4091 = vpop.permute.xlu0 %4090
        %4094 = vset.pattern.permute.xlu0 19
        %4095 = vperm.xlu0 %4094, %v500
        %v4096 = vpop.permute.xlu0 %4095
        %4099 = vset.pattern.permute.xlu0 19
        %4100 = vperm.xlu0 %4099, %v501
        %v4101 = vpop.permute.xlu0 %4100
        %4104 = vset.pattern.permute.xlu0 19
        %4105 = vperm.xlu0 %4104, %v502
        %v4106 = vpop.permute.xlu0 %4105
        %4109 = vset.pattern.permute.xlu0 19
        %4110 = vperm.xlu0 %4109, %v503
        %v4111 = vpop.permute.xlu0 %4110
        %4114 = vset.pattern.permute.xlu0 19
        %4115 = vperm.xlu0 %4114, %v504
        %v4116 = vpop.permute.xlu0 %4115
        %4119 = vset.pattern.permute.xlu0 19
        %4120 = vperm.xlu0 %4119, %v505
        %v4121 = vpop.permute.xlu0 %4120
        %4124 = vset.pattern.permute.xlu0 19
        %4125 = vperm.xlu0 %4124, %v506
        %v4126 = vpop.permute.xlu0 %4125
        %4129 = vset.pattern.permute.xlu0 19
        %4130 = vperm.xlu0 %4129, %v507
        %v4131 = vpop.permute.xlu0 %4130
        %4134 = vset.pattern.permute.xlu0 19
        %4135 = vperm.xlu0 %4134, %v508
        %v4136 = vpop.permute.xlu0 %4135
        %4139 = vset.pattern.permute.xlu0 19
        %4140 = vperm.xlu0 %4139, %v509
        %v4141 = vpop.permute.xlu0 %4140
        %4144 = vset.pattern.permute.xlu0 19
        %4145 = vperm.xlu0 %4144, %v510
        %v4146 = vpop.permute.xlu0 %4145
        %4149 = vset.pattern.permute.xlu0 19
        %4150 = vperm.xlu0 %4149, %v511
        %v4151 = vpop.permute.xlu0 %4150
        %4154 = vset.pattern.permute.xlu0 19
        %4155 = vperm.xlu0 %4154, %v512
        %v4156 = vpop.permute.xlu0 %4155
        %4159 = vset.pattern.permute.xlu0 19
        %4160 = vperm.xlu0 %4159, %v513
        %v4161 = vpop.permute.xlu0 %4160
        %4164 = vset.pattern.permute.xlu0 19
        %4165 = vperm.xlu0 %4164, %v514
        %v4166 = vpop.permute.xlu0 %4165
        %4169 = vset.pattern.permute.xlu0 19
        %4170 = vperm.xlu0 %4169, %v515
        %v4171 = vpop.permute.xlu0 %4170
        %4174 = vset.pattern.permute.xlu0 19
        %4175 = vperm.xlu0 %4174, %v516
        %v4176 = vpop.permute.xlu0 %4175
        %4179 = vset.pattern.permute.xlu0 19
        %4180 = vperm.xlu0 %4179, %v517
        %v4181 = vpop.permute.xlu0 %4180
        %4184 = vset.pattern.permute.xlu0 19
        %4185 = vperm.xlu0 %4184, %v518
        %v4186 = vpop.permute.xlu0 %4185
        %4189 = vset.pattern.permute.xlu0 19
        %4190 = vperm.xlu0 %4189, %v519
        %v4191 = vpop.permute.xlu0 %4190
        %4194 = vset.pattern.permute.xlu0 19
        %4195 = vperm.xlu0 %4194, %v520
        %v4196 = vpop.permute.xlu0 %4195
        %4199 = vset.pattern.permute.xlu0 19
        %4200 = vperm.xlu0 %4199, %v521
        %v4201 = vpop.permute.xlu0 %4200
        %4204 = vset.pattern.permute.xlu0 19
        %4205 = vperm.xlu0 %4204, %v522
        %v4206 = vpop.permute.xlu0 %4205
        %4209 = vset.pattern.permute.xlu0 19
        %4210 = vperm.xlu0 %4209, %v523
        %v4211 = vpop.permute.xlu0 %4210
        %4214 = vset.pattern.permute.xlu0 19
        %4215 = vperm.xlu0 %4214, %v524
        %v4216 = vpop.permute.xlu0 %4215
        %4219 = vset.pattern.permute.xlu0 19
        %4220 = vperm.xlu0 %4219, %v525
        %v4221 = vpop.permute.xlu0 %4220
        %4224 = vset.pattern.permute.xlu0 19
        %4225 = vperm.xlu0 %4224, %v526
        %v4226 = vpop.permute.xlu0 %4225
        %4229 = vset.pattern.permute.xlu0 19
        %4230 = vperm.xlu0 %4229, %v527
        %v4231 = vpop.permute.xlu0 %4230
        %4234 = vset.pattern.permute.xlu0 19
        %4235 = vperm.xlu0 %4234, %v528
        %v4236 = vpop.permute.xlu0 %4235
        %4239 = vset.pattern.permute.xlu0 19
        %4240 = vperm.xlu0 %4239, %v529
        %v4241 = vpop.permute.xlu0 %4240
        %4244 = vset.pattern.permute.xlu0 19
        %4245 = vperm.xlu0 %4244, %v530
        %v4246 = vpop.permute.xlu0 %4245
        %4249 = vset.pattern.permute.xlu0 19
        %4250 = vperm.xlu0 %4249, %v531
        %v4251 = vpop.permute.xlu0 %4250
        %4254 = vset.pattern.permute.xlu0 19
        %4255 = vperm.xlu0 %4254, %v532
        %v4256 = vpop.permute.xlu0 %4255
        %4259 = vset.pattern.permute.xlu0 19
        %4260 = vperm.xlu0 %4259, %v533
        %v4261 = vpop.permute.xlu0 %4260
        %4264 = vset.pattern.permute.xlu0 19
        %4265 = vperm.xlu0 %4264, %v534
        %v4266 = vpop.permute.xlu0 %4265
        %4269 = vset.pattern.permute.xlu0 19
        %4270 = vperm.xlu0 %4269, %v535
        %v4271 = vpop.permute.xlu0 %4270
        %4274 = vset.pattern.permute.xlu0 19
        %4275 = vperm.xlu0 %4274, %v536
        %v4276 = vpop.permute.xlu0 %4275
        %4279 = vset.pattern.permute.xlu0 19
        %4280 = vperm.xlu0 %4279, %v537
        %v4281 = vpop.permute.xlu0 %4280
        %4284 = vset.pattern.permute.xlu0 19
        %4285 = vperm.xlu0 %4284, %v538
        %v4286 = vpop.permute.xlu0 %4285
        %4289 = vset.pattern.permute.xlu0 19
        %4290 = vperm.xlu0 %4289, %v539
        %v4291 = vpop.permute.xlu0 %4290
        %v4293 = vadd.f32 %v3525, %v3656
        %v4294 = vadd.f32 %v3526, %v3661
        %v4295 = vadd.f32 %v3527, %v3666
        %v4296 = vadd.f32 %v3528, %v3671
        %v4297 = vadd.f32 %v3529, %v3676
        %v4298 = vadd.f32 %v3530, %v3681
        %v4299 = vadd.f32 %v3531, %v3686
        %v4300 = vadd.f32 %v3532, %v3691
        %v4301 = vadd.f32 %v3533, %v3696
        %v4302 = vadd.f32 %v3534, %v3701
        %v4303 = vadd.f32 %v3535, %v3706
        %v4304 = vadd.f32 %v3536, %v3711
        %v4305 = vadd.f32 %v3537, %v3716
        %v4306 = vadd.f32 %v3538, %v3721
        %v4307 = vadd.f32 %v3539, %v3726
        %v4308 = vadd.f32 %v3540, %v3731
        %v4309 = vadd.f32 %v3541, %v3736
        %v4310 = vadd.f32 %v3542, %v3741
        %v4311 = vadd.f32 %v3543, %v3746
        %v4312 = vadd.f32 %v3544, %v3751
        %v4313 = vadd.f32 %v3545, %v3756
        %v4314 = vadd.f32 %v3546, %v3761
        %v4315 = vadd.f32 %v3547, %v3766
        %v4316 = vadd.f32 %v3548, %v3771
        %v4317 = vadd.f32 %v3549, %v3776
        %v4318 = vadd.f32 %v3550, %v3781
        %v4319 = vadd.f32 %v3551, %v3786
        %v4320 = vadd.f32 %v3552, %v3791
        %v4321 = vadd.f32 %v3553, %v3796
        %v4322 = vadd.f32 %v3554, %v3801
        %v4323 = vadd.f32 %v3555, %v3806
        %v4324 = vadd.f32 %v3556, %v3811
        %v4325 = vadd.f32 %v3557, %v3816
        %v4326 = vadd.f32 %v3558, %v3821
        %v4327 = vadd.f32 %v3559, %v3826
        %v4328 = vadd.f32 %v3560, %v3831
        %v4329 = vadd.f32 %v3561, %v3836
        %v4330 = vadd.f32 %v3562, %v3841
        %v4331 = vadd.f32 %v3563, %v3846
        %v4332 = vadd.f32 %v3564, %v3851
        %v4333 = vadd.f32 %v3565, %v3856
        %v4334 = vadd.f32 %v3566, %v3861
        %v4335 = vadd.f32 %v3567, %v3866
        %v4336 = vadd.f32 %v3568, %v3871
        %v4337 = vadd.f32 %v3569, %v3876
        %v4338 = vadd.f32 %v3570, %v3881
        %v4339 = vadd.f32 %v3571, %v3886
        %v4340 = vadd.f32 %v3572, %v3891
        %v4341 = vadd.f32 %v3573, %v3896
        %v4342 = vadd.f32 %v3574, %v3901
        %v4343 = vadd.f32 %v3575, %v3906
        %v4344 = vadd.f32 %v3576, %v3911
        %v4345 = vadd.f32 %v3577, %v3916
        %v4346 = vadd.f32 %v3578, %v3921
        %v4347 = vadd.f32 %v3579, %v3926
        %v4348 = vadd.f32 %v3580, %v3931
        %v4349 = vadd.f32 %v3581, %v3936
        %v4350 = vadd.f32 %v3582, %v3941
        %v4351 = vadd.f32 %v3583, %v3946
        %v4352 = vadd.f32 %v3584, %v3951
        %v4353 = vadd.f32 %v3585, %v3956
        %v4354 = vadd.f32 %v3586, %v3961
        %v4355 = vadd.f32 %v3587, %v3966
        %v4356 = vadd.f32 %v3588, %v3971
        %v4357 = vadd.f32 %v3589, %v3976
        %v4358 = vadd.f32 %v3590, %v3981
        %v4359 = vadd.f32 %v3591, %v3986
        %v4360 = vadd.f32 %v3592, %v3991
        %v4361 = vadd.f32 %v3593, %v3996
        %v4362 = vadd.f32 %v3594, %v4001
        %v4363 = vadd.f32 %v3595, %v4006
        %v4364 = vadd.f32 %v3596, %v4011
        %v4365 = vadd.f32 %v3597, %v4016
        %v4366 = vadd.f32 %v3598, %v4021
        %v4367 = vadd.f32 %v3599, %v4026
        %v4368 = vadd.f32 %v3600, %v4031
        %v4369 = vadd.f32 %v3601, %v4036
        %v4370 = vadd.f32 %v3602, %v4041
        %v4371 = vadd.f32 %v3603, %v4046
        %v4372 = vadd.f32 %v3604, %v4051
        %v4373 = vadd.f32 %v3605, %v4056
        %v4374 = vadd.f32 %v3606, %v4061
        %v4375 = vadd.f32 %v3607, %v4066
        %v4376 = vadd.f32 %v3608, %v4071
        %v4377 = vadd.f32 %v3609, %v4076
        %v4378 = vadd.f32 %v3610, %v4081
        %v4379 = vadd.f32 %v3611, %v4086
        %v4380 = vadd.f32 %v3612, %v4091
        %v4381 = vadd.f32 %v3613, %v4096
        %v4382 = vadd.f32 %v3614, %v4101
        %v4383 = vadd.f32 %v3615, %v4106
        %v4384 = vadd.f32 %v3616, %v4111
        %v4385 = vadd.f32 %v3617, %v4116
        %v4386 = vadd.f32 %v3618, %v4121
        %v4387 = vadd.f32 %v3619, %v4126
        %v4388 = vadd.f32 %v3620, %v4131
        %v4389 = vadd.f32 %v3621, %v4136
        %v4390 = vadd.f32 %v3622, %v4141
        %v4391 = vadd.f32 %v3623, %v4146
        %v4392 = vadd.f32 %v3624, %v4151
        %v4393 = vadd.f32 %v3625, %v4156
        %v4394 = vadd.f32 %v3626, %v4161
        %v4395 = vadd.f32 %v3627, %v4166
        %v4396 = vadd.f32 %v3628, %v4171
        %v4397 = vadd.f32 %v3629, %v4176
        %v4398 = vadd.f32 %v3630, %v4181
        %v4399 = vadd.f32 %v3631, %v4186
        %v4400 = vadd.f32 %v3632, %v4191
        %v4401 = vadd.f32 %v3633, %v4196
        %v4402 = vadd.f32 %v3634, %v4201
        %v4403 = vadd.f32 %v3635, %v4206
        %v4404 = vadd.f32 %v3636, %v4211
        %v4405 = vadd.f32 %v3637, %v4216
        %v4406 = vadd.f32 %v3638, %v4221
        %v4407 = vadd.f32 %v3639, %v4226
        %v4408 = vadd.f32 %v3640, %v4231
        %v4409 = vadd.f32 %v3641, %v4236
        %v4410 = vadd.f32 %v3642, %v4241
        %v4411 = vadd.f32 %v3643, %v4246
        %v4412 = vadd.f32 %v3644, %v4251
        %v4413 = vadd.f32 %v3645, %v4256
        %v4414 = vadd.f32 %v3646, %v4261
        %v4415 = vadd.f32 %v3647, %v4266
        %v4416 = vadd.f32 %v3648, %v4271
        %v4417 = vadd.f32 %v3649, %v4276
        %v4418 = vadd.f32 %v3650, %v4281
        %v4419 = vadd.f32 %v3651, %v4286
        %v4420 = vadd.f32 %v3652, %v4291
        %v4421 = vmax.f32 %v4293, %v4294
        %v4422 = vmax.f32 %v4421, %v4295
        %v4423 = vmax.f32 %v4422, %v4296
        %v4424 = vmax.f32 %v4423, %v4297
        %v4425 = vmax.f32 %v4424, %v4298
        %v4426 = vmax.f32 %v4425, %v4299
        %v4427 = vmax.f32 %v4426, %v4300
        %v4428 = vrot.slane %v4427, 4
        %v4429 = vmax.f32 %v4427, %v4428
        %v4430 = vrot.slane %v4429, 2
        %v4431 = vmax.f32 %v4429, %v4430
        %v4432 = vrot.slane %v4431, 1
        %v4433 = vmax.f32 %v4431, %v4432
        %v4434 = vmax.f32 %v4301, %v4302
        %v4435 = vmax.f32 %v4434, %v4303
        %v4436 = vmax.f32 %v4435, %v4304
        %v4437 = vmax.f32 %v4436, %v4305
        %v4438 = vmax.f32 %v4437, %v4306
        %v4439 = vmax.f32 %v4438, %v4307
        %v4440 = vmax.f32 %v4439, %v4308
        %v4441 = vrot.slane %v4440, 4
        %v4442 = vmax.f32 %v4440, %v4441
        %v4443 = vrot.slane %v4442, 2
        %v4444 = vmax.f32 %v4442, %v4443
        %v4445 = vrot.slane %v4444, 1
        %v4446 = vmax.f32 %v4444, %v4445
        %v4447 = vmax.f32 %v4309, %v4310
        %v4448 = vmax.f32 %v4447, %v4311
        %v4449 = vmax.f32 %v4448, %v4312
        %v4450 = vmax.f32 %v4449, %v4313
        %v4451 = vmax.f32 %v4450, %v4314
        %v4452 = vmax.f32 %v4451, %v4315
        %v4453 = vmax.f32 %v4452, %v4316
        %v4454 = vrot.slane %v4453, 4
        %v4455 = vmax.f32 %v4453, %v4454
        %v4456 = vrot.slane %v4455, 2
        %v4457 = vmax.f32 %v4455, %v4456
        %v4458 = vrot.slane %v4457, 1
        %v4459 = vmax.f32 %v4457, %v4458
        %v4460 = vmax.f32 %v4317, %v4318
        %v4461 = vmax.f32 %v4460, %v4319
        %v4462 = vmax.f32 %v4461, %v4320
        %v4463 = vmax.f32 %v4462, %v4321
        %v4464 = vmax.f32 %v4463, %v4322
        %v4465 = vmax.f32 %v4464, %v4323
        %v4466 = vmax.f32 %v4465, %v4324
        %v4467 = vrot.slane %v4466, 4
        %v4468 = vmax.f32 %v4466, %v4467
        %v4469 = vrot.slane %v4468, 2
        %v4470 = vmax.f32 %v4468, %v4469
        %v4471 = vrot.slane %v4470, 1
        %v4472 = vmax.f32 %v4470, %v4471
        %v4473 = vmax.f32 %v4325, %v4326
        %v4474 = vmax.f32 %v4473, %v4327
        %v4475 = vmax.f32 %v4474, %v4328
        %v4476 = vmax.f32 %v4475, %v4329
        %v4477 = vmax.f32 %v4476, %v4330
        %v4478 = vmax.f32 %v4477, %v4331
        %v4479 = vmax.f32 %v4478, %v4332
        %v4480 = vrot.slane %v4479, 4
        %v4481 = vmax.f32 %v4479, %v4480
        %v4482 = vrot.slane %v4481, 2
        %v4483 = vmax.f32 %v4481, %v4482
        %v4484 = vrot.slane %v4483, 1
        %v4485 = vmax.f32 %v4483, %v4484
        %v4486 = vmax.f32 %v4333, %v4334
        %v4487 = vmax.f32 %v4486, %v4335
        %v4488 = vmax.f32 %v4487, %v4336
        %v4489 = vmax.f32 %v4488, %v4337
        %v4490 = vmax.f32 %v4489, %v4338
        %v4491 = vmax.f32 %v4490, %v4339
        %v4492 = vmax.f32 %v4491, %v4340
        %v4493 = vrot.slane %v4492, 4
        %v4494 = vmax.f32 %v4492, %v4493
        %v4495 = vrot.slane %v4494, 2
        %v4496 = vmax.f32 %v4494, %v4495
        %v4497 = vrot.slane %v4496, 1
        %v4498 = vmax.f32 %v4496, %v4497
        %v4499 = vmax.f32 %v4341, %v4342
        %v4500 = vmax.f32 %v4499, %v4343
        %v4501 = vmax.f32 %v4500, %v4344
        %v4502 = vmax.f32 %v4501, %v4345
        %v4503 = vmax.f32 %v4502, %v4346
        %v4504 = vmax.f32 %v4503, %v4347
        %v4505 = vmax.f32 %v4504, %v4348
        %v4506 = vrot.slane %v4505, 4
        %v4507 = vmax.f32 %v4505, %v4506
        %v4508 = vrot.slane %v4507, 2
        %v4509 = vmax.f32 %v4507, %v4508
        %v4510 = vrot.slane %v4509, 1
        %v4511 = vmax.f32 %v4509, %v4510
        %v4512 = vmax.f32 %v4349, %v4350
        %v4513 = vmax.f32 %v4512, %v4351
        %v4514 = vmax.f32 %v4513, %v4352
        %v4515 = vmax.f32 %v4514, %v4353
        %v4516 = vmax.f32 %v4515, %v4354
        %v4517 = vmax.f32 %v4516, %v4355
        %v4518 = vmax.f32 %v4517, %v4356
        %v4519 = vrot.slane %v4518, 4
        %v4520 = vmax.f32 %v4518, %v4519
        %v4521 = vrot.slane %v4520, 2
        %v4522 = vmax.f32 %v4520, %v4521
        %v4523 = vrot.slane %v4522, 1
        %v4524 = vmax.f32 %v4522, %v4523
        %v4525 = vmax.f32 %v4357, %v4358
        %v4526 = vmax.f32 %v4525, %v4359
        %v4527 = vmax.f32 %v4526, %v4360
        %v4528 = vmax.f32 %v4527, %v4361
        %v4529 = vmax.f32 %v4528, %v4362
        %v4530 = vmax.f32 %v4529, %v4363
        %v4531 = vmax.f32 %v4530, %v4364
        %v4532 = vrot.slane %v4531, 4
        %v4533 = vmax.f32 %v4531, %v4532
        %v4534 = vrot.slane %v4533, 2
        %v4535 = vmax.f32 %v4533, %v4534
        %v4536 = vrot.slane %v4535, 1
        %v4537 = vmax.f32 %v4535, %v4536
        %v4538 = vmax.f32 %v4365, %v4366
        %v4539 = vmax.f32 %v4538, %v4367
        %v4540 = vmax.f32 %v4539, %v4368
        %v4541 = vmax.f32 %v4540, %v4369
        %v4542 = vmax.f32 %v4541, %v4370
        %v4543 = vmax.f32 %v4542, %v4371
        %v4544 = vmax.f32 %v4543, %v4372
        %v4545 = vrot.slane %v4544, 4
        %v4546 = vmax.f32 %v4544, %v4545
        %v4547 = vrot.slane %v4546, 2
        %v4548 = vmax.f32 %v4546, %v4547
        %v4549 = vrot.slane %v4548, 1
        %v4550 = vmax.f32 %v4548, %v4549
        %v4551 = vmax.f32 %v4373, %v4374
        %v4552 = vmax.f32 %v4551, %v4375
        %v4553 = vmax.f32 %v4552, %v4376
        %v4554 = vmax.f32 %v4553, %v4377
        %v4555 = vmax.f32 %v4554, %v4378
        %v4556 = vmax.f32 %v4555, %v4379
        %v4557 = vmax.f32 %v4556, %v4380
        %v4558 = vrot.slane %v4557, 4
        %v4559 = vmax.f32 %v4557, %v4558
        %v4560 = vrot.slane %v4559, 2
        %v4561 = vmax.f32 %v4559, %v4560
        %v4562 = vrot.slane %v4561, 1
        %v4563 = vmax.f32 %v4561, %v4562
        %v4564 = vmax.f32 %v4381, %v4382
        %v4565 = vmax.f32 %v4564, %v4383
        %v4566 = vmax.f32 %v4565, %v4384
        %v4567 = vmax.f32 %v4566, %v4385
        %v4568 = vmax.f32 %v4567, %v4386
        %v4569 = vmax.f32 %v4568, %v4387
        %v4570 = vmax.f32 %v4569, %v4388
        %v4571 = vrot.slane %v4570, 4
        %v4572 = vmax.f32 %v4570, %v4571
        %v4573 = vrot.slane %v4572, 2
        %v4574 = vmax.f32 %v4572, %v4573
        %v4575 = vrot.slane %v4574, 1
        %v4576 = vmax.f32 %v4574, %v4575
        %v4577 = vmax.f32 %v4389, %v4390
        %v4578 = vmax.f32 %v4577, %v4391
        %v4579 = vmax.f32 %v4578, %v4392
        %v4580 = vmax.f32 %v4579, %v4393
        %v4581 = vmax.f32 %v4580, %v4394
        %v4582 = vmax.f32 %v4581, %v4395
        %v4583 = vmax.f32 %v4582, %v4396
        %v4584 = vrot.slane %v4583, 4
        %v4585 = vmax.f32 %v4583, %v4584
        %v4586 = vrot.slane %v4585, 2
        %v4587 = vmax.f32 %v4585, %v4586
        %v4588 = vrot.slane %v4587, 1
        %v4589 = vmax.f32 %v4587, %v4588
        %v4590 = vmax.f32 %v4397, %v4398
        %v4591 = vmax.f32 %v4590, %v4399
        %v4592 = vmax.f32 %v4591, %v4400
        %v4593 = vmax.f32 %v4592, %v4401
        %v4594 = vmax.f32 %v4593, %v4402
        %v4595 = vmax.f32 %v4594, %v4403
        %v4596 = vmax.f32 %v4595, %v4404
        %v4597 = vrot.slane %v4596, 4
        %v4598 = vmax.f32 %v4596, %v4597
        %v4599 = vrot.slane %v4598, 2
        %v4600 = vmax.f32 %v4598, %v4599
        %v4601 = vrot.slane %v4600, 1
        %v4602 = vmax.f32 %v4600, %v4601
        %v4603 = vmax.f32 %v4405, %v4406
        %v4604 = vmax.f32 %v4603, %v4407
        %v4605 = vmax.f32 %v4604, %v4408
        %v4606 = vmax.f32 %v4605, %v4409
        %v4607 = vmax.f32 %v4606, %v4410
        %v4608 = vmax.f32 %v4607, %v4411
        %v4609 = vmax.f32 %v4608, %v4412
        %v4610 = vrot.slane %v4609, 4
        %v4611 = vmax.f32 %v4609, %v4610
        %v4612 = vrot.slane %v4611, 2
        %v4613 = vmax.f32 %v4611, %v4612
        %v4614 = vrot.slane %v4613, 1
        %v4615 = vmax.f32 %v4613, %v4614
        %v4616 = vmax.f32 %v4413, %v4414
        %v4617 = vmax.f32 %v4616, %v4415
        %v4618 = vmax.f32 %v4617, %v4416
        %v4619 = vmax.f32 %v4618, %v4417
        %v4620 = vmax.f32 %v4619, %v4418
        %v4621 = vmax.f32 %v4620, %v4419
        %v4622 = vmax.f32 %v4621, %v4420
        %v4623 = vrot.slane %v4622, 4
        %v4624 = vmax.f32 %v4622, %v4623
        %v4625 = vrot.slane %v4624, 2
        %v4626 = vmax.f32 %v4624, %v4625
        %v4627 = vrot.slane %v4626, 1
        %v4628 = vmax.f32 %v4626, %v4627
        %vm4645 = vcmask 1041409
        %v4646 = vsel %vm4645, %v4446, %v4433
        %vm4647 = vcmask 1042434
        %v4648 = vsel %vm4647, %v4459, %v4646
        %vm4649 = vcmask 1043459
        %v4650 = vsel %vm4649, %v4472, %v4648
        %vm4651 = vcmask 1044484
        %v4652 = vsel %vm4651, %v4485, %v4650
        %vm4653 = vcmask 1045509
        %v4654 = vsel %vm4653, %v4498, %v4652
        %vm4655 = vcmask 1046534
        %v4656 = vsel %vm4655, %v4511, %v4654
        %vm4657 = vcmask 1047559
        %v4658 = vsel %vm4657, %v4524, %v4656
        %v4659 = vsel %vm4645, %v4550, %v4537
        %v4660 = vsel %vm4647, %v4563, %v4659
        %v4661 = vsel %vm4649, %v4576, %v4660
        %v4662 = vsel %vm4651, %v4589, %v4661
        %v4663 = vsel %vm4653, %v4602, %v4662
        %v4664 = vsel %vm4655, %v4615, %v4663
        %v4665 = vsel %vm4657, %v4628, %v4664
        %4668 = vst [vmem:[%s274] sm:$0xff] %v4658
        %4669 = vst [vmem:[%s274 + $0x8] sm:$0xff] %v4665
        %s4670 = sand.u32 %s181, 1
        %s4671 = scalar_lea.sflag [#allocation3], %s4670
        %s4672 = sand.u32 %s181, 1
        %s4673 = smul.addr %s4672, 16
        %s4674 = scalar_lea.vmem [#allocation2], %s4673
        // Predicated region
        $region49: #{tpu_custom_call.1} parent=47 // pred_check
          %p4675 = pneg %p191
        $region50: #{tpu_custom_call.1} parent=47 // pred_check_branch
          %4677 = sbr.rel (%p4675) target = $region52
        $region51: #{tpu_custom_call.1} parent=47 // pred_region
          %s4678 = smul.u32 2, %s21
          %s4680 = ssub.s32 256, 256
          %4681 = vsyncadd %s4671, %s4680
          %s4682 = smul.addr %s4678, 128
          %s4683 = scalar_lea.hbm %s7, %s4682
          %s4684 = sshll.u32 %s4674, 4
          %s4685 = int_to_ptr.vmem [resolvable:$true] %s4684
          %4690 = dma.vmem_to_hbm [thread:$0]  %s4685, 256, %s4683, %s4671, 128, 128, 8
        $region52: #{tpu_custom_call.1} parent=47 // pred_fallthru
          _
      $region48: #{tpu_custom_call.1} parent=5 // pred_fallthru
        _
      %p4691 = scmp.le.s32.totalorder 2, %s16
      // Predicated region
      $region53: #{tpu_custom_call.1} parent=5 // pred_check
        %p4692 = pneg %p4691
      $region54: #{tpu_custom_call.1} parent=5 // pred_check_branch
        %4694 = sbr.rel (%p4692) target = $region56
      $region55: #{tpu_custom_call.1} parent=5 // pred_region
        %s4695 = ssub.s32 %s16, 2
        // Predicated region
        $region57: #{tpu_custom_call.1} parent=55 // pred_check
          %p4696 = pneg %p197
        $region58: #{tpu_custom_call.1} parent=55 // pred_check_branch
          %4698 = sbr.rel (%p4696) target = $region60
        $region59: #{tpu_custom_call.1} parent=55 // pred_region
          %s4699 = sand.u32 %s182, 1
          %s4700 = scalar_lea.sflag [#allocation3], %s4699
          %s4701 = sand.u32 %s182, 1
          %s4702 = smul.addr %s4701, 16
          %s4703 = scalar_lea.vmem [#allocation2], %s4702
          %4704 = dma.done %s4700, 256
        $region60: #{tpu_custom_call.1} parent=55 // pred_fallthru
          _
      $region56: #{tpu_custom_call.1} parent=5 // pred_fallthru
        _
    $region6: #{tpu_custom_call.1} parent=1 // loop_footer
      %s20 = sadd.s32 1, %s16
    $region7: #{tpu_custom_call.1} parent=1 // loop_footer_branch
      %15 = sbr.rel target = $region3
    $region8: #{tpu_custom_call.1} parent=1 // loop_exit
      _
    %4705 = vsyncpa [#allocation3], 1
    %s4706 = scalar_lea.sflag [#allocation3], 1
    %4707 = vsyncpa %s4706, 1

</llo_original>
